<compile_context>
chip_gen: v5e
topology: v5e:2x2
jax: 0.10.0
libtpu: 0.0.40
codegen_flags: <defaults>
</compile_context>

<pallas_src>
import functools

import jax
import jax.numpy as jnp
from jax.experimental import pallas as pl
from jax.experimental.pallas import tpu as pltpu


# ----------------------------------------------------------------------------
# Fused kernel: all 4 GRU layers + MLP head in one straight-line body.
# ----------------------------------------------------------------------------
def fused_gru_kernel(x_ref, wih_ref, whh_ref, bias_ref, hw_ref, hb_ref,
                     o_ref, seq_ref):
    """Whole GRUModel forward.

    x_ref   : (T*Bp, H)   time-major input, batch- and feature-zero-padded
    wih_ref : (L, H, 3H)  input->hidden weights (gate order [r,z,n]); layer-0
                          rows beyond the true input_dim are zero
    whh_ref : (L, H, 3H)  hidden->hidden weights
    bias_ref: (L, 2, 3H)  row 0 = [b_ir+b_hr, b_iz+b_hz, b_in], row 1 = [0,0,b_hn]
    hw_ref  : (3, H, H)   [rel_layer.W^T, preFc.W^T, fc.W^T zero-padded to H]
    hb_ref  : (3, 1, H)   matching biases (fc bias zero-padded)
    o_ref   : (Bp, H)     columns [0:output_dim] hold the result
    seq_ref : VMEM scratch (T*Bp, H) holding each layer's output sequence
    """
    f32 = jnp.float32
    L = wih_ref.shape[0]
    H = whh_ref.shape[1]
    Bp = o_ref.shape[0]
    T = x_ref.shape[0] // Bp

    h = None
    for layer in range(L):
        wih = wih_ref[layer]                                    # (H, 3H)
        whh = whh_ref[layer]                                    # (H, 3H)
        b_all = bias_ref[layer]                                 # (2, 3H)
        b_fold = b_all[0:1, :]                                  # (1, 3H)
        bhn = jnp.broadcast_to(b_all[1:2, 2 * H:3 * H], (Bp, H))  # hoisted

        # Input->hidden projection for ALL timesteps: one wide matmul per
        # layer (off the serial critical path), folded biases added once.
        seq_in = x_ref[...] if layer == 0 else seq_ref[...]     # (T*Bp, H)
        gx = jnp.dot(seq_in, wih, preferred_element_type=f32) + b_fold  # (T*Bp, 3H)

        h = jnp.zeros((Bp, H), f32)
        # Fully unrolled time loop (T=8, tiny shapes).
        # TODO(synk): if H/T grow and the bundle dump shows vreg spills,
        #             switch this to lax.fori_loop(..., unroll=True) reading
        #             gx through a scratch ref with pl.ds.
        for t in range(T):
            lo = t * Bp                       # Bp = 8 -> sublane-aligned slices
            gxt = gx[lo:lo + Bp, :]                                   # (Bp, 3H)
            # ONE fused hidden matmul per step (3x fewer dependent MXU ops
            # on the serial recurrence path).
            gh = jnp.dot(h, whh, preferred_element_type=f32)          # (Bp, 3H)
            rz = jax.nn.sigmoid(gxt[:, 0:2 * H] + gh[:, 0:2 * H])
            r = rz[:, 0:H]
            z = rz[:, H:2 * H]
            n = jnp.tanh(gxt[:, 2 * H:] + r * (gh[:, 2 * H:] + bhn))
            h = (1.0 - z) * n + z * h
            if layer + 1 < L:
                seq_ref[lo:lo + Bp, :] = h    # aligned store into VMEM scratch

    # Head on the final hidden state of the last layer (== out[:, -1, :]).
    h1 = jnp.dot(h, hw_ref[0], preferred_element_type=f32) + hb_ref[0]
    h1 = jnp.maximum(h1, 0.0)                                    # ReLU
    h2 = jnp.dot(h1, hw_ref[1], preferred_element_type=f32) + hb_ref[1]
    h2 = jnp.where(h2 >= 0.0, h2, 0.01 * h2)                     # LeakyReLU(0.01)
    o_ref[...] = jnp.dot(h2, hw_ref[2], preferred_element_type=f32) + hb_ref[2]


# ----------------------------------------------------------------------------
# Parameter packing: raw (PyTorch-layout) params -> 5 packed kernel slabs.
#   raw GRU layer: (W_ih^T (d_in,3H), W_hh^T (H,3H), b_ih (3H,), b_hh (3H,)),
#   gate order [r, z, n].
# ----------------------------------------------------------------------------
def pack_params(raw_gru_params, head_params):
    H = raw_gru_params[0][1].shape[0]
    wih_l, whh_l, bias_l = [], [], []
    for (wx, wh, b_ih, b_hh) in raw_gru_params:
        d_in = wx.shape[0]
        assert d_in <= H, "packing assumes input_dim <= hidden_dim"
        wih_l.append(jnp.pad(wx, ((0, H - d_in), (0, 0))))        # (H, 3H)
        whh_l.append(wh)                                          # (H, 3H)
        b_fold = jnp.concatenate([b_ih[:H] + b_hh[:H],            # r: b_ir+b_hr
                                  b_ih[H:2 * H] + b_hh[H:2 * H],  # z: b_iz+b_hz
                                  b_ih[2 * H:]])                  # n: b_in only
        b_hn = jnp.concatenate([jnp.zeros((2 * H,), jnp.float32),
                                b_hh[2 * H:]])                    # b_hn (in r*(...))
        bias_l.append(jnp.stack([b_fold, b_hn], axis=0))          # (2, 3H)
    wih_slab = jnp.stack(wih_l).astype(jnp.float32)               # (L, H, 3H)
    whh_slab = jnp.stack(whh_l).astype(jnp.float32)               # (L, H, 3H)
    bias_slab = jnp.stack(bias_l).astype(jnp.float32)             # (L, 2, 3H)

    w1, b1, w2, b2, w3, b3 = head_params
    out_dim = int(w3.shape[1])
    head_w = jnp.stack([w1, w2, jnp.pad(w3, ((0, 0), (0, H - out_dim)))])
    head_b = jnp.stack([b1, b2, jnp.pad(b3, ((0, 0), (0, H - out_dim)))])
    return (wih_slab, whh_slab, bias_slab,
            head_w.astype(jnp.float32), head_b.astype(jnp.float32)), out_dim


# ----------------------------------------------------------------------------
# Full model wrapper: a single gridless pallas_call, everything VMEM-resident.
# ----------------------------------------------------------------------------
@functools.partial(jax.jit, static_argnames=("out_dim",))
def gru_model_forward(x_btd, wih_slab, whh_slab, bias_slab, head_w, head_b,
                      *, out_dim):
    B, T, D = x_btd.shape
    H = whh_slab.shape[1]
    Bp = ((B + 7) // 8) * 8                 # pad batch to full f32 sublane groups

    x = x_btd.astype(jnp.float32)
    # Pad batch and features (zero rows/cols match zero-padded layer-0 weight
    # rows), then go time-major with ONE transpose+reshape (XLA, outside the
    # kernel) instead of an in-kernel slice+concat chain.
    x = jnp.pad(x, ((0, Bp - B), (0, 0), (0, H - D)))
    x_tm = jnp.transpose(x, (1, 0, 2)).reshape(T * Bp, H)

    vmem = pltpu.MemorySpace.VMEM
    out = pl.pallas_call(
        fused_gru_kernel,
        out_shape=jax.ShapeDtypeStruct((Bp, H), jnp.float32),
        in_specs=[pl.BlockSpec(memory_space=vmem)] * 6,
        out_specs=pl.BlockSpec(memory_space=vmem),
        scratch_shapes=[pltpu.VMEM((T * Bp, H), jnp.float32)],
        # TODO(synk): for large deployment batches, add a leading grid axis
        # over batch tiles with dimension_semantics=("parallel",) so v7x's
        # second TensorCore is used; at Bp=8 a single gridless call is optimal.
    )(x_tm, wih_slab, whh_slab, bias_slab, head_w, head_b)
    return out[:B, :out_dim]


# ----------------------------------------------------------------------------
# Pure-JAX reference (uses raw, un-packed params -> also validates packing).
# ----------------------------------------------------------------------------
def gru_model_ref(x_btd, raw_gru_params, head_params):
    B, T, _ = x_btd.shape
    inp = x_btd.astype(jnp.float32)
    for (wx, wh, b_ih, b_hh) in raw_gru_params:
        H = wh.shape[0]
        h = jnp.zeros((B, H), jnp.float32)
        outs = []
        for t in range(T):
            gx = inp[:, t] @ wx + b_ih
            gh = h @ wh + b_hh
            r = jax.nn.sigmoid(gx[:, :H] + gh[:, :H])
            z = jax.nn.sigmoid(gx[:, H:2 * H] + gh[:, H:2 * H])
            n = jnp.tanh(gx[:, 2 * H:] + r * gh[:, 2 * H:])
            h = (1.0 - z) * n + z * h
            outs.append(h)
        inp = jnp.stack(outs, axis=1)
    last = inp[:, -1, :]
    w1, b1, w2, b2, w3, b3 = head_params
    h1 = jnp.maximum(last @ w1 + b1, 0.0)
    h2p = h1 @ w2 + b2
    h2 = jnp.where(h2p >= 0.0, h2p, 0.01 * h2p)
    return h2 @ w3 + b3


if __name__ == "__main__":
    # Small shapes consistent with the module's forward.
    B, T = 2, 8           # batch, sequence length
    D_IN = 16             # input_dim
    H = 32                # hidden_dim
    LAYERS = 4            # layer_dim
    OUT = 1               # output_dim

    key = jax.random.PRNGKey(0)
    k_x, key = jax.random.split(key)
    x = jax.random.normal(k_x, (B, T, D_IN), jnp.float32)

    scale = 1.0 / jnp.sqrt(jnp.float32(H))

    def uniform(k, shape):
        return jax.random.uniform(k, shape, jnp.float32, -scale, scale)

    # Raw GRU parameters (PyTorch-like layout, transposed weights, gates [r,z,n]).
    raw_gru_params = []
    for layer in range(LAYERS):
        d_in = D_IN if layer == 0 else H
        key, k1, k2, k3, k4 = jax.random.split(key, 5)
        raw_gru_params.append((
            uniform(k1, (d_in, 3 * H)),   # W_ih^T
            uniform(k2, (H, 3 * H)),      # W_hh^T
            uniform(k3, (3 * H,)),        # b_ih
            uniform(k4, (3 * H,)),        # b_hh
        ))

    # Head parameters: rel_layer, preFc, fc (weights (in,out), biases (1,out)).
    key, k1, k2, k3, k4, k5, k6 = jax.random.split(key, 7)
    head_params = (
        uniform(k1, (H, H)), uniform(k2, (1, H)),
        uniform(k3, (H, H)), uniform(k4, (1, H)),
        uniform(k5, (H, OUT)), uniform(k6, (1, OUT)),
    )

    (wih_slab, whh_slab, bias_slab, head_w, head_b), out_dim = pack_params(
        raw_gru_params, head_params)

    out = gru_model_forward(x, wih_slab, whh_slab, bias_slab, head_w, head_b,
                            out_dim=out_dim)
    out = jax.block_until_ready(out)

    ref = gru_model_ref(x, raw_gru_params, head_params)
    assert out.shape == (B, OUT)
    assert jnp.allclose(out, ref, atol=1e-4, rtol=1e-4), (out, ref)

    print("KERNEL_OK")
</pallas_src>

<mosaic_0001>
module attributes {stable_mosaic.version = 11 : i64} {
  func.func @fused_gru_kernel(%arg0: memref<64x32xf32, #tpu.memory_space<vmem>>, %arg1: memref<4x32x96xf32, #tpu.memory_space<vmem>>, %arg2: memref<4x32x96xf32, #tpu.memory_space<vmem>>, %arg3: memref<4x2x96xf32, #tpu.memory_space<vmem>>, %arg4: memref<3x32x32xf32, #tpu.memory_space<vmem>>, %arg5: memref<3x1x32xf32, #tpu.memory_space<vmem>>, %arg6: memref<8x32xf32, #tpu.memory_space<vmem>>, %arg7: memref<64x32xf32, #tpu.memory_space<vmem>>) attributes {dimension_semantics = [], scalar_prefetch = 0 : i64, scratch_operands = 1 : i64, tpu.core_type = #tpu.core_type<tc>} {
    %c0 = arith.constant 0 : index
    %c0_0 = arith.constant 0 : index
    %c0_1 = arith.constant 0 : index
    %0 = vector.load %arg1[%c0, %c0_0, %c0_1] : memref<4x32x96xf32, #tpu.memory_space<vmem>>, vector<1x32x96xf32>
    %1 = vector.shape_cast %0 : vector<1x32x96xf32> to vector<32x96xf32>
    %c0_2 = arith.constant 0 : index
    %c0_3 = arith.constant 0 : index
    %c0_4 = arith.constant 0 : index
    %2 = vector.load %arg2[%c0_2, %c0_3, %c0_4] : memref<4x32x96xf32, #tpu.memory_space<vmem>>, vector<1x32x96xf32>
    %3 = vector.shape_cast %2 : vector<1x32x96xf32> to vector<32x96xf32>
    %c0_5 = arith.constant 0 : index
    %c0_6 = arith.constant 0 : index
    %c0_7 = arith.constant 0 : index
    %4 = vector.load %arg3[%c0_5, %c0_6, %c0_7] : memref<4x2x96xf32, #tpu.memory_space<vmem>>, vector<1x2x96xf32>
    %5 = vector.shape_cast %4 : vector<1x2x96xf32> to vector<2x96xf32>
    %6 = vector.extract_strided_slice %5 {offsets = [0, 0], sizes = [1, 96], strides = [1, 1]} : vector<2x96xf32> to vector<1x96xf32>
    %7 = vector.extract_strided_slice %5 {offsets = [1, 64], sizes = [1, 32], strides = [1, 1]} : vector<2x96xf32> to vector<1x32xf32>
    %8 = vector.shape_cast %7 : vector<1x32xf32> to vector<1x32xf32>
    %9 = vector.broadcast %8 : vector<1x32xf32> to vector<8x32xf32>
    %c0_8 = arith.constant 0 : index
    %c0_9 = arith.constant 0 : index
    %10 = vector.load %arg0[%c0_8, %c0_9] : memref<64x32xf32, #tpu.memory_space<vmem>>, vector<64x32xf32>
    %cst = arith.constant dense<0.000000e+00> : vector<64x96xf32>
    %11 = tpu.matmul %10, %1, %cst {dimension_numbers = #tpu.dot_dimension_numbers<[1], [0], [0], [1], [0, 0, 1, 1], [], []>} : vector<64x32xf32>, vector<32x96xf32>, vector<64x96xf32> -> vector<64x96xf32>
    %12 = vector.broadcast %6 : vector<1x96xf32> to vector<64x96xf32>
    %13 = arith.addf %11, %12 : vector<64x96xf32>
    %cst_10 = arith.constant 0.000000e+00 : f32
    %14 = vector.broadcast %cst_10 : f32 to vector<8x32xf32>
    %15 = vector.extract_strided_slice %13 {offsets = [0, 0], sizes = [8, 96], strides = [1, 1]} : vector<64x96xf32> to vector<8x96xf32>
    %cst_11 = arith.constant dense<0.000000e+00> : vector<8x96xf32>
    %16 = tpu.matmul %14, %3, %cst_11 {dimension_numbers = #tpu.dot_dimension_numbers<[1], [0], [0], [1], [0, 0, 1, 1], [], []>} : vector<8x32xf32>, vector<32x96xf32>, vector<8x96xf32> -> vector<8x96xf32>
    %17 = vector.extract_strided_slice %15 {offsets = [0, 0], sizes = [8, 64], strides = [1, 1]} : vector<8x96xf32> to vector<8x64xf32>
    %18 = vector.extract_strided_slice %16 {offsets = [0, 0], sizes = [8, 64], strides = [1, 1]} : vector<8x96xf32> to vector<8x64xf32>
    %19 = arith.addf %17, %18 : vector<8x64xf32>
    %20 = arith.negf %19 : vector<8x64xf32>
    %21 = math.exp %20 : vector<8x64xf32>
    %cst_12 = arith.constant 1.000000e+00 : f32
    %22 = vector.broadcast %cst_12 : f32 to vector<8x64xf32>
    %23 = arith.addf %22, %21 : vector<8x64xf32>
    %24 = arith.divf %22, %23 : vector<8x64xf32>
    %25 = vector.extract_strided_slice %24 {offsets = [0, 0], sizes = [8, 32], strides = [1, 1]} : vector<8x64xf32> to vector<8x32xf32>
    %26 = vector.extract_strided_slice %24 {offsets = [0, 32], sizes = [8, 32], strides = [1, 1]} : vector<8x64xf32> to vector<8x32xf32>
    %27 = vector.extract_strided_slice %15 {offsets = [0, 64], sizes = [8, 32], strides = [1, 1]} : vector<8x96xf32> to vector<8x32xf32>
    %28 = vector.extract_strided_slice %16 {offsets = [0, 64], sizes = [8, 32], strides = [1, 1]} : vector<8x96xf32> to vector<8x32xf32>
    %29 = arith.addf %28, %9 : vector<8x32xf32>
    %30 = arith.mulf %25, %29 : vector<8x32xf32>
    %31 = arith.addf %27, %30 : vector<8x32xf32>
    %32 = math.tanh %31 : vector<8x32xf32>
    %cst_13 = arith.constant 1.000000e+00 : f32
    %33 = vector.broadcast %cst_13 : f32 to vector<8x32xf32>
    %34 = arith.subf %33, %26 : vector<8x32xf32>
    %35 = arith.mulf %34, %32 : vector<8x32xf32>
    %36 = arith.mulf %26, %14 : vector<8x32xf32>
    %37 = arith.addf %35, %36 : vector<8x32xf32>
    %c0_14 = arith.constant 0 : index
    %c0_15 = arith.constant 0 : index
    %38 = vector.load %arg7[%c0_14, %c0_15] : memref<64x32xf32, #tpu.memory_space<vmem>>, vector<8x32xf32>
    tpu.vector_store %arg7[%c0_14, %c0_15], %37 {strides = array<i32>} : memref<64x32xf32, #tpu.memory_space<vmem>>, vector<8x32xf32>,
    %39 = vector.extract_strided_slice %13 {offsets = [8, 0], sizes = [8, 96], strides = [1, 1]} : vector<64x96xf32> to vector<8x96xf32>
    %cst_16 = arith.constant dense<0.000000e+00> : vector<8x96xf32>
    %40 = tpu.matmul %37, %3, %cst_16 {dimension_numbers = #tpu.dot_dimension_numbers<[1], [0], [0], [1], [0, 0, 1, 1], [], []>} : vector<8x32xf32>, vector<32x96xf32>, vector<8x96xf32> -> vector<8x96xf32>
    %41 = vector.extract_strided_slice %39 {offsets = [0, 0], sizes = [8, 64], strides = [1, 1]} : vector<8x96xf32> to vector<8x64xf32>
    %42 = vector.extract_strided_slice %40 {offsets = [0, 0], sizes = [8, 64], strides = [1, 1]} : vector<8x96xf32> to vector<8x64xf32>
    %43 = arith.addf %41, %42 : vector<8x64xf32>
    %44 = arith.negf %43 : vector<8x64xf32>
    %45 = math.exp %44 : vector<8x64xf32>
    %cst_17 = arith.constant 1.000000e+00 : f32
    %46 = vector.broadcast %cst_17 : f32 to vector<8x64xf32>
    %47 = arith.addf %46, %45 : vector<8x64xf32>
    %48 = arith.divf %46, %47 : vector<8x64xf32>
    %49 = vector.extract_strided_slice %48 {offsets = [0, 0], sizes = [8, 32], strides = [1, 1]} : vector<8x64xf32> to vector<8x32xf32>
    %50 = vector.extract_strided_slice %48 {offsets = [0, 32], sizes = [8, 32], strides = [1, 1]} : vector<8x64xf32> to vector<8x32xf32>
    %51 = vector.extract_strided_slice %39 {offsets = [0, 64], sizes = [8, 32], strides = [1, 1]} : vector<8x96xf32> to vector<8x32xf32>
    %52 = vector.extract_strided_slice %40 {offsets = [0, 64], sizes = [8, 32], strides = [1, 1]} : vector<8x96xf32> to vector<8x32xf32>
    %53 = arith.addf %52, %9 : vector<8x32xf32>
    %54 = arith.mulf %49, %53 : vector<8x32xf32>
    %55 = arith.addf %51, %54 : vector<8x32xf32>
    %56 = math.tanh %55 : vector<8x32xf32>
    %cst_18 = arith.constant 1.000000e+00 : f32
    %57 = vector.broadcast %cst_18 : f32 to vector<8x32xf32>
    %58 = arith.subf %57, %50 : vector<8x32xf32>
    %59 = arith.mulf %58, %56 : vector<8x32xf32>
    %60 = arith.mulf %50, %37 : vector<8x32xf32>
    %61 = arith.addf %59, %60 : vector<8x32xf32>
    %c8 = arith.constant 8 : index
    %c0_19 = arith.constant 0 : index
    %62 = vector.load %arg7[%c8, %c0_19] : memref<64x32xf32, #tpu.memory_space<vmem>>, vector<8x32xf32>
    tpu.vector_store %arg7[%c8, %c0_19], %61 {strides = array<i32>} : memref<64x32xf32, #tpu.memory_space<vmem>>, vector<8x32xf32>,
    %63 = vector.extract_strided_slice %13 {offsets = [16, 0], sizes = [8, 96], strides = [1, 1]} : vector<64x96xf32> to vector<8x96xf32>
    %cst_20 = arith.constant dense<0.000000e+00> : vector<8x96xf32>
    %64 = tpu.matmul %61, %3, %cst_20 {dimension_numbers = #tpu.dot_dimension_numbers<[1], [0], [0], [1], [0, 0, 1, 1], [], []>} : vector<8x32xf32>, vector<32x96xf32>, vector<8x96xf32> -> vector<8x96xf32>
    %65 = vector.extract_strided_slice %63 {offsets = [0, 0], sizes = [8, 64], strides = [1, 1]} : vector<8x96xf32> to vector<8x64xf32>
    %66 = vector.extract_strided_slice %64 {offsets = [0, 0], sizes = [8, 64], strides = [1, 1]} : vector<8x96xf32> to vector<8x64xf32>
    %67 = arith.addf %65, %66 : vector<8x64xf32>
    %68 = arith.negf %67 : vector<8x64xf32>
    %69 = math.exp %68 : vector<8x64xf32>
    %cst_21 = arith.constant 1.000000e+00 : f32
    %70 = vector.broadcast %cst_21 : f32 to vector<8x64xf32>
    %71 = arith.addf %70, %69 : vector<8x64xf32>
    %72 = arith.divf %70, %71 : vector<8x64xf32>
    %73 = vector.extract_strided_slice %72 {offsets = [0, 0], sizes = [8, 32], strides = [1, 1]} : vector<8x64xf32> to vector<8x32xf32>
    %74 = vector.extract_strided_slice %72 {offsets = [0, 32], sizes = [8, 32], strides = [1, 1]} : vector<8x64xf32> to vector<8x32xf32>
    %75 = vector.extract_strided_slice %63 {offsets = [0, 64], sizes = [8, 32], strides = [1, 1]} : vector<8x96xf32> to vector<8x32xf32>
    %76 = vector.extract_strided_slice %64 {offsets = [0, 64], sizes = [8, 32], strides = [1, 1]} : vector<8x96xf32> to vector<8x32xf32>
    %77 = arith.addf %76, %9 : vector<8x32xf32>
    %78 = arith.mulf %73, %77 : vector<8x32xf32>
    %79 = arith.addf %75, %78 : vector<8x32xf32>
    %80 = math.tanh %79 : vector<8x32xf32>
    %cst_22 = arith.constant 1.000000e+00 : f32
    %81 = vector.broadcast %cst_22 : f32 to vector<8x32xf32>
    %82 = arith.subf %81, %74 : vector<8x32xf32>
    %83 = arith.mulf %82, %80 : vector<8x32xf32>
    %84 = arith.mulf %74, %61 : vector<8x32xf32>
    %85 = arith.addf %83, %84 : vector<8x32xf32>
    %c16 = arith.constant 16 : index
    %c0_23 = arith.constant 0 : index
    %86 = vector.load %arg7[%c16, %c0_23] : memref<64x32xf32, #tpu.memory_space<vmem>>, vector<8x32xf32>
    tpu.vector_store %arg7[%c16, %c0_23], %85 {strides = array<i32>} : memref<64x32xf32, #tpu.memory_space<vmem>>, vector<8x32xf32>,
    %87 = vector.extract_strided_slice %13 {offsets = [24, 0], sizes = [8, 96], strides = [1, 1]} : vector<64x96xf32> to vector<8x96xf32>
    %cst_24 = arith.constant dense<0.000000e+00> : vector<8x96xf32>
    %88 = tpu.matmul %85, %3, %cst_24 {dimension_numbers = #tpu.dot_dimension_numbers<[1], [0], [0], [1], [0, 0, 1, 1], [], []>} : vector<8x32xf32>, vector<32x96xf32>, vector<8x96xf32> -> vector<8x96xf32>
    %89 = vector.extract_strided_slice %87 {offsets = [0, 0], sizes = [8, 64], strides = [1, 1]} : vector<8x96xf32> to vector<8x64xf32>
    %90 = vector.extract_strided_slice %88 {offsets = [0, 0], sizes = [8, 64], strides = [1, 1]} : vector<8x96xf32> to vector<8x64xf32>
    %91 = arith.addf %89, %90 : vector<8x64xf32>
    %92 = arith.negf %91 : vector<8x64xf32>
    %93 = math.exp %92 : vector<8x64xf32>
    %cst_25 = arith.constant 1.000000e+00 : f32
    %94 = vector.broadcast %cst_25 : f32 to vector<8x64xf32>
    %95 = arith.addf %94, %93 : vector<8x64xf32>
    %96 = arith.divf %94, %95 : vector<8x64xf32>
    %97 = vector.extract_strided_slice %96 {offsets = [0, 0], sizes = [8, 32], strides = [1, 1]} : vector<8x64xf32> to vector<8x32xf32>
    %98 = vector.extract_strided_slice %96 {offsets = [0, 32], sizes = [8, 32], strides = [1, 1]} : vector<8x64xf32> to vector<8x32xf32>
    %99 = vector.extract_strided_slice %87 {offsets = [0, 64], sizes = [8, 32], strides = [1, 1]} : vector<8x96xf32> to vector<8x32xf32>
    %100 = vector.extract_strided_slice %88 {offsets = [0, 64], sizes = [8, 32], strides = [1, 1]} : vector<8x96xf32> to vector<8x32xf32>
    %101 = arith.addf %100, %9 : vector<8x32xf32>
    %102 = arith.mulf %97, %101 : vector<8x32xf32>
    %103 = arith.addf %99, %102 : vector<8x32xf32>
    %104 = math.tanh %103 : vector<8x32xf32>
    %cst_26 = arith.constant 1.000000e+00 : f32
    %105 = vector.broadcast %cst_26 : f32 to vector<8x32xf32>
    %106 = arith.subf %105, %98 : vector<8x32xf32>
    %107 = arith.mulf %106, %104 : vector<8x32xf32>
    %108 = arith.mulf %98, %85 : vector<8x32xf32>
    %109 = arith.addf %107, %108 : vector<8x32xf32>
    %c24 = arith.constant 24 : index
    %c0_27 = arith.constant 0 : index
    %110 = vector.load %arg7[%c24, %c0_27] : memref<64x32xf32, #tpu.memory_space<vmem>>, vector<8x32xf32>
    tpu.vector_store %arg7[%c24, %c0_27], %109 {strides = array<i32>} : memref<64x32xf32, #tpu.memory_space<vmem>>, vector<8x32xf32>,
    %111 = vector.extract_strided_slice %13 {offsets = [32, 0], sizes = [8, 96], strides = [1, 1]} : vector<64x96xf32> to vector<8x96xf32>
    %cst_28 = arith.constant dense<0.000000e+00> : vector<8x96xf32>
    %112 = tpu.matmul %109, %3, %cst_28 {dimension_numbers = #tpu.dot_dimension_numbers<[1], [0], [0], [1], [0, 0, 1, 1], [], []>} : vector<8x32xf32>, vector<32x96xf32>, vector<8x96xf32> -> vector<8x96xf32>
    %113 = vector.extract_strided_slice %111 {offsets = [0, 0], sizes = [8, 64], strides = [1, 1]} : vector<8x96xf32> to vector<8x64xf32>
    %114 = vector.extract_strided_slice %112 {offsets = [0, 0], sizes = [8, 64], strides = [1, 1]} : vector<8x96xf32> to vector<8x64xf32>
    %115 = arith.addf %113, %114 : vector<8x64xf32>
    %116 = arith.negf %115 : vector<8x64xf32>
    %117 = math.exp %116 : vector<8x64xf32>
    %cst_29 = arith.constant 1.000000e+00 : f32
    %118 = vector.broadcast %cst_29 : f32 to vector<8x64xf32>
    %119 = arith.addf %118, %117 : vector<8x64xf32>
    %120 = arith.divf %118, %119 : vector<8x64xf32>
    %121 = vector.extract_strided_slice %120 {offsets = [0, 0], sizes = [8, 32], strides = [1, 1]} : vector<8x64xf32> to vector<8x32xf32>
    %122 = vector.extract_strided_slice %120 {offsets = [0, 32], sizes = [8, 32], strides = [1, 1]} : vector<8x64xf32> to vector<8x32xf32>
    %123 = vector.extract_strided_slice %111 {offsets = [0, 64], sizes = [8, 32], strides = [1, 1]} : vector<8x96xf32> to vector<8x32xf32>
    %124 = vector.extract_strided_slice %112 {offsets = [0, 64], sizes = [8, 32], strides = [1, 1]} : vector<8x96xf32> to vector<8x32xf32>
    %125 = arith.addf %124, %9 : vector<8x32xf32>
    %126 = arith.mulf %121, %125 : vector<8x32xf32>
    %127 = arith.addf %123, %126 : vector<8x32xf32>
    %128 = math.tanh %127 : vector<8x32xf32>
    %cst_30 = arith.constant 1.000000e+00 : f32
    %129 = vector.broadcast %cst_30 : f32 to vector<8x32xf32>
    %130 = arith.subf %129, %122 : vector<8x32xf32>
    %131 = arith.mulf %130, %128 : vector<8x32xf32>
    %132 = arith.mulf %122, %109 : vector<8x32xf32>
    %133 = arith.addf %131, %132 : vector<8x32xf32>
    %c32 = arith.constant 32 : index
    %c0_31 = arith.constant 0 : index
    %134 = vector.load %arg7[%c32, %c0_31] : memref<64x32xf32, #tpu.memory_space<vmem>>, vector<8x32xf32>
    tpu.vector_store %arg7[%c32, %c0_31], %133 {strides = array<i32>} : memref<64x32xf32, #tpu.memory_space<vmem>>, vector<8x32xf32>,
    %135 = vector.extract_strided_slice %13 {offsets = [40, 0], sizes = [8, 96], strides = [1, 1]} : vector<64x96xf32> to vector<8x96xf32>
    %cst_32 = arith.constant dense<0.000000e+00> : vector<8x96xf32>
    %136 = tpu.matmul %133, %3, %cst_32 {dimension_numbers = #tpu.dot_dimension_numbers<[1], [0], [0], [1], [0, 0, 1, 1], [], []>} : vector<8x32xf32>, vector<32x96xf32>, vector<8x96xf32> -> vector<8x96xf32>
    %137 = vector.extract_strided_slice %135 {offsets = [0, 0], sizes = [8, 64], strides = [1, 1]} : vector<8x96xf32> to vector<8x64xf32>
    %138 = vector.extract_strided_slice %136 {offsets = [0, 0], sizes = [8, 64], strides = [1, 1]} : vector<8x96xf32> to vector<8x64xf32>
    %139 = arith.addf %137, %138 : vector<8x64xf32>
    %140 = arith.negf %139 : vector<8x64xf32>
    %141 = math.exp %140 : vector<8x64xf32>
    %cst_33 = arith.constant 1.000000e+00 : f32
    %142 = vector.broadcast %cst_33 : f32 to vector<8x64xf32>
    %143 = arith.addf %142, %141 : vector<8x64xf32>
    %144 = arith.divf %142, %143 : vector<8x64xf32>
    %145 = vector.extract_strided_slice %144 {offsets = [0, 0], sizes = [8, 32], strides = [1, 1]} : vector<8x64xf32> to vector<8x32xf32>
    %146 = vector.extract_strided_slice %144 {offsets = [0, 32], sizes = [8, 32], strides = [1, 1]} : vector<8x64xf32> to vector<8x32xf32>
    %147 = vector.extract_strided_slice %135 {offsets = [0, 64], sizes = [8, 32], strides = [1, 1]} : vector<8x96xf32> to vector<8x32xf32>
    %148 = vector.extract_strided_slice %136 {offsets = [0, 64], sizes = [8, 32], strides = [1, 1]} : vector<8x96xf32> to vector<8x32xf32>
    %149 = arith.addf %148, %9 : vector<8x32xf32>
    %150 = arith.mulf %145, %149 : vector<8x32xf32>
    %151 = arith.addf %147, %150 : vector<8x32xf32>
    %152 = math.tanh %151 : vector<8x32xf32>
    %cst_34 = arith.constant 1.000000e+00 : f32
    %153 = vector.broadcast %cst_34 : f32 to vector<8x32xf32>
    %154 = arith.subf %153, %146 : vector<8x32xf32>
    %155 = arith.mulf %154, %152 : vector<8x32xf32>
    %156 = arith.mulf %146, %133 : vector<8x32xf32>
    %157 = arith.addf %155, %156 : vector<8x32xf32>
    %c40 = arith.constant 40 : index
    %c0_35 = arith.constant 0 : index
    %158 = vector.load %arg7[%c40, %c0_35] : memref<64x32xf32, #tpu.memory_space<vmem>>, vector<8x32xf32>
    tpu.vector_store %arg7[%c40, %c0_35], %157 {strides = array<i32>} : memref<64x32xf32, #tpu.memory_space<vmem>>, vector<8x32xf32>,
    %159 = vector.extract_strided_slice %13 {offsets = [48, 0], sizes = [8, 96], strides = [1, 1]} : vector<64x96xf32> to vector<8x96xf32>
    %cst_36 = arith.constant dense<0.000000e+00> : vector<8x96xf32>
    %160 = tpu.matmul %157, %3, %cst_36 {dimension_numbers = #tpu.dot_dimension_numbers<[1], [0], [0], [1], [0, 0, 1, 1], [], []>} : vector<8x32xf32>, vector<32x96xf32>, vector<8x96xf32> -> vector<8x96xf32>
    %161 = vector.extract_strided_slice %159 {offsets = [0, 0], sizes = [8, 64], strides = [1, 1]} : vector<8x96xf32> to vector<8x64xf32>
    %162 = vector.extract_strided_slice %160 {offsets = [0, 0], sizes = [8, 64], strides = [1, 1]} : vector<8x96xf32> to vector<8x64xf32>
    %163 = arith.addf %161, %162 : vector<8x64xf32>
    %164 = arith.negf %163 : vector<8x64xf32>
    %165 = math.exp %164 : vector<8x64xf32>
    %cst_37 = arith.constant 1.000000e+00 : f32
    %166 = vector.broadcast %cst_37 : f32 to vector<8x64xf32>
    %167 = arith.addf %166, %165 : vector<8x64xf32>
    %168 = arith.divf %166, %167 : vector<8x64xf32>
    %169 = vector.extract_strided_slice %168 {offsets = [0, 0], sizes = [8, 32], strides = [1, 1]} : vector<8x64xf32> to vector<8x32xf32>
    %170 = vector.extract_strided_slice %168 {offsets = [0, 32], sizes = [8, 32], strides = [1, 1]} : vector<8x64xf32> to vector<8x32xf32>
    %171 = vector.extract_strided_slice %159 {offsets = [0, 64], sizes = [8, 32], strides = [1, 1]} : vector<8x96xf32> to vector<8x32xf32>
    %172 = vector.extract_strided_slice %160 {offsets = [0, 64], sizes = [8, 32], strides = [1, 1]} : vector<8x96xf32> to vector<8x32xf32>
    %173 = arith.addf %172, %9 : vector<8x32xf32>
    %174 = arith.mulf %169, %173 : vector<8x32xf32>
    %175 = arith.addf %171, %174 : vector<8x32xf32>
    %176 = math.tanh %175 : vector<8x32xf32>
    %cst_38 = arith.constant 1.000000e+00 : f32
    %177 = vector.broadcast %cst_38 : f32 to vector<8x32xf32>
    %178 = arith.subf %177, %170 : vector<8x32xf32>
    %179 = arith.mulf %178, %176 : vector<8x32xf32>
    %180 = arith.mulf %170, %157 : vector<8x32xf32>
    %181 = arith.addf %179, %180 : vector<8x32xf32>
    %c48 = arith.constant 48 : index
    %c0_39 = arith.constant 0 : index
    %182 = vector.load %arg7[%c48, %c0_39] : memref<64x32xf32, #tpu.memory_space<vmem>>, vector<8x32xf32>
    tpu.vector_store %arg7[%c48, %c0_39], %181 {strides = array<i32>} : memref<64x32xf32, #tpu.memory_space<vmem>>, vector<8x32xf32>,
    %183 = vector.extract_strided_slice %13 {offsets = [56, 0], sizes = [8, 96], strides = [1, 1]} : vector<64x96xf32> to vector<8x96xf32>
    %cst_40 = arith.constant dense<0.000000e+00> : vector<8x96xf32>
    %184 = tpu.matmul %181, %3, %cst_40 {dimension_numbers = #tpu.dot_dimension_numbers<[1], [0], [0], [1], [0, 0, 1, 1], [], []>} : vector<8x32xf32>, vector<32x96xf32>, vector<8x96xf32> -> vector<8x96xf32>
    %185 = vector.extract_strided_slice %183 {offsets = [0, 0], sizes = [8, 64], strides = [1, 1]} : vector<8x96xf32> to vector<8x64xf32>
    %186 = vector.extract_strided_slice %184 {offsets = [0, 0], sizes = [8, 64], strides = [1, 1]} : vector<8x96xf32> to vector<8x64xf32>
    %187 = arith.addf %185, %186 : vector<8x64xf32>
    %188 = arith.negf %187 : vector<8x64xf32>
    %189 = math.exp %188 : vector<8x64xf32>
    %cst_41 = arith.constant 1.000000e+00 : f32
    %190 = vector.broadcast %cst_41 : f32 to vector<8x64xf32>
    %191 = arith.addf %190, %189 : vector<8x64xf32>
    %192 = arith.divf %190, %191 : vector<8x64xf32>
    %193 = vector.extract_strided_slice %192 {offsets = [0, 0], sizes = [8, 32], strides = [1, 1]} : vector<8x64xf32> to vector<8x32xf32>
    %194 = vector.extract_strided_slice %192 {offsets = [0, 32], sizes = [8, 32], strides = [1, 1]} : vector<8x64xf32> to vector<8x32xf32>
    %195 = vector.extract_strided_slice %183 {offsets = [0, 64], sizes = [8, 32], strides = [1, 1]} : vector<8x96xf32> to vector<8x32xf32>
    %196 = vector.extract_strided_slice %184 {offsets = [0, 64], sizes = [8, 32], strides = [1, 1]} : vector<8x96xf32> to vector<8x32xf32>
    %197 = arith.addf %196, %9 : vector<8x32xf32>
    %198 = arith.mulf %193, %197 : vector<8x32xf32>
    %199 = arith.addf %195, %198 : vector<8x32xf32>
    %200 = math.tanh %199 : vector<8x32xf32>
    %cst_42 = arith.constant 1.000000e+00 : f32
    %201 = vector.broadcast %cst_42 : f32 to vector<8x32xf32>
    %202 = arith.subf %201, %194 : vector<8x32xf32>
    %203 = arith.mulf %202, %200 : vector<8x32xf32>
    %204 = arith.mulf %194, %181 : vector<8x32xf32>
    %205 = arith.addf %203, %204 : vector<8x32xf32>
    %c56 = arith.constant 56 : index
    %c0_43 = arith.constant 0 : index
    %206 = vector.load %arg7[%c56, %c0_43] : memref<64x32xf32, #tpu.memory_space<vmem>>, vector<8x32xf32>
    tpu.vector_store %arg7[%c56, %c0_43], %205 {strides = array<i32>} : memref<64x32xf32, #tpu.memory_space<vmem>>, vector<8x32xf32>,
    %c1 = arith.constant 1 : index
    %c0_44 = arith.constant 0 : index
    %c0_45 = arith.constant 0 : index
    %207 = vector.load %arg1[%c1, %c0_44, %c0_45] : memref<4x32x96xf32, #tpu.memory_space<vmem>>, vector<1x32x96xf32>
    %208 = vector.shape_cast %207 : vector<1x32x96xf32> to vector<32x96xf32>
    %c1_46 = arith.constant 1 : index
    %c0_47 = arith.constant 0 : index
    %c0_48 = arith.constant 0 : index
    %209 = vector.load %arg2[%c1_46, %c0_47, %c0_48] : memref<4x32x96xf32, #tpu.memory_space<vmem>>, vector<1x32x96xf32>
    %210 = vector.shape_cast %209 : vector<1x32x96xf32> to vector<32x96xf32>
    %c1_49 = arith.constant 1 : index
    %c0_50 = arith.constant 0 : index
    %c0_51 = arith.constant 0 : index
    %211 = vector.load %arg3[%c1_49, %c0_50, %c0_51] : memref<4x2x96xf32, #tpu.memory_space<vmem>>, vector<1x2x96xf32>
    %212 = vector.shape_cast %211 : vector<1x2x96xf32> to vector<2x96xf32>
    %213 = vector.extract_strided_slice %212 {offsets = [0, 0], sizes = [1, 96], strides = [1, 1]} : vector<2x96xf32> to vector<1x96xf32>
    %214 = vector.extract_strided_slice %212 {offsets = [1, 64], sizes = [1, 32], strides = [1, 1]} : vector<2x96xf32> to vector<1x32xf32>
    %215 = vector.shape_cast %214 : vector<1x32xf32> to vector<1x32xf32>
    %216 = vector.broadcast %215 : vector<1x32xf32> to vector<8x32xf32>
    %c0_52 = arith.constant 0 : index
    %c0_53 = arith.constant 0 : index
    %217 = vector.load %arg7[%c0_52, %c0_53] : memref<64x32xf32, #tpu.memory_space<vmem>>, vector<64x32xf32>
    %cst_54 = arith.constant dense<0.000000e+00> : vector<64x96xf32>
    %218 = tpu.matmul %217, %208, %cst_54 {dimension_numbers = #tpu.dot_dimension_numbers<[1], [0], [0], [1], [0, 0, 1, 1], [], []>} : vector<64x32xf32>, vector<32x96xf32>, vector<64x96xf32> -> vector<64x96xf32>
    %219 = vector.broadcast %213 : vector<1x96xf32> to vector<64x96xf32>
    %220 = arith.addf %218, %219 : vector<64x96xf32>
    %cst_55 = arith.constant 0.000000e+00 : f32
    %221 = vector.broadcast %cst_55 : f32 to vector<8x32xf32>
    %222 = vector.extract_strided_slice %220 {offsets = [0, 0], sizes = [8, 96], strides = [1, 1]} : vector<64x96xf32> to vector<8x96xf32>
    %cst_56 = arith.constant dense<0.000000e+00> : vector<8x96xf32>
    %223 = tpu.matmul %221, %210, %cst_56 {dimension_numbers = #tpu.dot_dimension_numbers<[1], [0], [0], [1], [0, 0, 1, 1], [], []>} : vector<8x32xf32>, vector<32x96xf32>, vector<8x96xf32> -> vector<8x96xf32>
    %224 = vector.extract_strided_slice %222 {offsets = [0, 0], sizes = [8, 64], strides = [1, 1]} : vector<8x96xf32> to vector<8x64xf32>
    %225 = vector.extract_strided_slice %223 {offsets = [0, 0], sizes = [8, 64], strides = [1, 1]} : vector<8x96xf32> to vector<8x64xf32>
    %226 = arith.addf %224, %225 : vector<8x64xf32>
    %227 = arith.negf %226 : vector<8x64xf32>
    %228 = math.exp %227 : vector<8x64xf32>
    %cst_57 = arith.constant 1.000000e+00 : f32
    %229 = vector.broadcast %cst_57 : f32 to vector<8x64xf32>
    %230 = arith.addf %229, %228 : vector<8x64xf32>
    %231 = arith.divf %229, %230 : vector<8x64xf32>
    %232 = vector.extract_strided_slice %231 {offsets = [0, 0], sizes = [8, 32], strides = [1, 1]} : vector<8x64xf32> to vector<8x32xf32>
    %233 = vector.extract_strided_slice %231 {offsets = [0, 32], sizes = [8, 32], strides = [1, 1]} : vector<8x64xf32> to vector<8x32xf32>
    %234 = vector.extract_strided_slice %222 {offsets = [0, 64], sizes = [8, 32], strides = [1, 1]} : vector<8x96xf32> to vector<8x32xf32>
    %235 = vector.extract_strided_slice %223 {offsets = [0, 64], sizes = [8, 32], strides = [1, 1]} : vector<8x96xf32> to vector<8x32xf32>
    %236 = arith.addf %235, %216 : vector<8x32xf32>
    %237 = arith.mulf %232, %236 : vector<8x32xf32>
    %238 = arith.addf %234, %237 : vector<8x32xf32>
    %239 = math.tanh %238 : vector<8x32xf32>
    %cst_58 = arith.constant 1.000000e+00 : f32
    %240 = vector.broadcast %cst_58 : f32 to vector<8x32xf32>
    %241 = arith.subf %240, %233 : vector<8x32xf32>
    %242 = arith.mulf %241, %239 : vector<8x32xf32>
    %243 = arith.mulf %233, %221 : vector<8x32xf32>
    %244 = arith.addf %242, %243 : vector<8x32xf32>
    %c0_59 = arith.constant 0 : index
    %c0_60 = arith.constant 0 : index
    %245 = vector.load %arg7[%c0_59, %c0_60] : memref<64x32xf32, #tpu.memory_space<vmem>>, vector<8x32xf32>
    tpu.vector_store %arg7[%c0_59, %c0_60], %244 {strides = array<i32>} : memref<64x32xf32, #tpu.memory_space<vmem>>, vector<8x32xf32>,
    %246 = vector.extract_strided_slice %220 {offsets = [8, 0], sizes = [8, 96], strides = [1, 1]} : vector<64x96xf32> to vector<8x96xf32>
    %cst_61 = arith.constant dense<0.000000e+00> : vector<8x96xf32>
    %247 = tpu.matmul %244, %210, %cst_61 {dimension_numbers = #tpu.dot_dimension_numbers<[1], [0], [0], [1], [0, 0, 1, 1], [], []>} : vector<8x32xf32>, vector<32x96xf32>, vector<8x96xf32> -> vector<8x96xf32>
    %248 = vector.extract_strided_slice %246 {offsets = [0, 0], sizes = [8, 64], strides = [1, 1]} : vector<8x96xf32> to vector<8x64xf32>
    %249 = vector.extract_strided_slice %247 {offsets = [0, 0], sizes = [8, 64], strides = [1, 1]} : vector<8x96xf32> to vector<8x64xf32>
    %250 = arith.addf %248, %249 : vector<8x64xf32>
    %251 = arith.negf %250 : vector<8x64xf32>
    %252 = math.exp %251 : vector<8x64xf32>
    %cst_62 = arith.constant 1.000000e+00 : f32
    %253 = vector.broadcast %cst_62 : f32 to vector<8x64xf32>
    %254 = arith.addf %253, %252 : vector<8x64xf32>
    %255 = arith.divf %253, %254 : vector<8x64xf32>
    %256 = vector.extract_strided_slice %255 {offsets = [0, 0], sizes = [8, 32], strides = [1, 1]} : vector<8x64xf32> to vector<8x32xf32>
    %257 = vector.extract_strided_slice %255 {offsets = [0, 32], sizes = [8, 32], strides = [1, 1]} : vector<8x64xf32> to vector<8x32xf32>
    %258 = vector.extract_strided_slice %246 {offsets = [0, 64], sizes = [8, 32], strides = [1, 1]} : vector<8x96xf32> to vector<8x32xf32>
    %259 = vector.extract_strided_slice %247 {offsets = [0, 64], sizes = [8, 32], strides = [1, 1]} : vector<8x96xf32> to vector<8x32xf32>
    %260 = arith.addf %259, %216 : vector<8x32xf32>
    %261 = arith.mulf %256, %260 : vector<8x32xf32>
    %262 = arith.addf %258, %261 : vector<8x32xf32>
    %263 = math.tanh %262 : vector<8x32xf32>
    %cst_63 = arith.constant 1.000000e+00 : f32
    %264 = vector.broadcast %cst_63 : f32 to vector<8x32xf32>
    %265 = arith.subf %264, %257 : vector<8x32xf32>
    %266 = arith.mulf %265, %263 : vector<8x32xf32>
    %267 = arith.mulf %257, %244 : vector<8x32xf32>
    %268 = arith.addf %266, %267 : vector<8x32xf32>
    %c8_64 = arith.constant 8 : index
    %c0_65 = arith.constant 0 : index
    %269 = vector.load %arg7[%c8_64, %c0_65] : memref<64x32xf32, #tpu.memory_space<vmem>>, vector<8x32xf32>
    tpu.vector_store %arg7[%c8_64, %c0_65], %268 {strides = array<i32>} : memref<64x32xf32, #tpu.memory_space<vmem>>, vector<8x32xf32>,
    %270 = vector.extract_strided_slice %220 {offsets = [16, 0], sizes = [8, 96], strides = [1, 1]} : vector<64x96xf32> to vector<8x96xf32>
    %cst_66 = arith.constant dense<0.000000e+00> : vector<8x96xf32>
    %271 = tpu.matmul %268, %210, %cst_66 {dimension_numbers = #tpu.dot_dimension_numbers<[1], [0], [0], [1], [0, 0, 1, 1], [], []>} : vector<8x32xf32>, vector<32x96xf32>, vector<8x96xf32> -> vector<8x96xf32>
    %272 = vector.extract_strided_slice %270 {offsets = [0, 0], sizes = [8, 64], strides = [1, 1]} : vector<8x96xf32> to vector<8x64xf32>
    %273 = vector.extract_strided_slice %271 {offsets = [0, 0], sizes = [8, 64], strides = [1, 1]} : vector<8x96xf32> to vector<8x64xf32>
    %274 = arith.addf %272, %273 : vector<8x64xf32>
    %275 = arith.negf %274 : vector<8x64xf32>
    %276 = math.exp %275 : vector<8x64xf32>
    %cst_67 = arith.constant 1.000000e+00 : f32
    %277 = vector.broadcast %cst_67 : f32 to vector<8x64xf32>
    %278 = arith.addf %277, %276 : vector<8x64xf32>
    %279 = arith.divf %277, %278 : vector<8x64xf32>
    %280 = vector.extract_strided_slice %279 {offsets = [0, 0], sizes = [8, 32], strides = [1, 1]} : vector<8x64xf32> to vector<8x32xf32>
    %281 = vector.extract_strided_slice %279 {offsets = [0, 32], sizes = [8, 32], strides = [1, 1]} : vector<8x64xf32> to vector<8x32xf32>
    %282 = vector.extract_strided_slice %270 {offsets = [0, 64], sizes = [8, 32], strides = [1, 1]} : vector<8x96xf32> to vector<8x32xf32>
    %283 = vector.extract_strided_slice %271 {offsets = [0, 64], sizes = [8, 32], strides = [1, 1]} : vector<8x96xf32> to vector<8x32xf32>
    %284 = arith.addf %283, %216 : vector<8x32xf32>
    %285 = arith.mulf %280, %284 : vector<8x32xf32>
    %286 = arith.addf %282, %285 : vector<8x32xf32>
    %287 = math.tanh %286 : vector<8x32xf32>
    %cst_68 = arith.constant 1.000000e+00 : f32
    %288 = vector.broadcast %cst_68 : f32 to vector<8x32xf32>
    %289 = arith.subf %288, %281 : vector<8x32xf32>
    %290 = arith.mulf %289, %287 : vector<8x32xf32>
    %291 = arith.mulf %281, %268 : vector<8x32xf32>
    %292 = arith.addf %290, %291 : vector<8x32xf32>
    %c16_69 = arith.constant 16 : index
    %c0_70 = arith.constant 0 : index
    %293 = vector.load %arg7[%c16_69, %c0_70] : memref<64x32xf32, #tpu.memory_space<vmem>>, vector<8x32xf32>
    tpu.vector_store %arg7[%c16_69, %c0_70], %292 {strides = array<i32>} : memref<64x32xf32, #tpu.memory_space<vmem>>, vector<8x32xf32>,
    %294 = vector.extract_strided_slice %220 {offsets = [24, 0], sizes = [8, 96], strides = [1, 1]} : vector<64x96xf32> to vector<8x96xf32>
    %cst_71 = arith.constant dense<0.000000e+00> : vector<8x96xf32>
    %295 = tpu.matmul %292, %210, %cst_71 {dimension_numbers = #tpu.dot_dimension_numbers<[1], [0], [0], [1], [0, 0, 1, 1], [], []>} : vector<8x32xf32>, vector<32x96xf32>, vector<8x96xf32> -> vector<8x96xf32>
    %296 = vector.extract_strided_slice %294 {offsets = [0, 0], sizes = [8, 64], strides = [1, 1]} : vector<8x96xf32> to vector<8x64xf32>
    %297 = vector.extract_strided_slice %295 {offsets = [0, 0], sizes = [8, 64], strides = [1, 1]} : vector<8x96xf32> to vector<8x64xf32>
    %298 = arith.addf %296, %297 : vector<8x64xf32>
    %299 = arith.negf %298 : vector<8x64xf32>
    %300 = math.exp %299 : vector<8x64xf32>
    %cst_72 = arith.constant 1.000000e+00 : f32
    %301 = vector.broadcast %cst_72 : f32 to vector<8x64xf32>
    %302 = arith.addf %301, %300 : vector<8x64xf32>
    %303 = arith.divf %301, %302 : vector<8x64xf32>
    %304 = vector.extract_strided_slice %303 {offsets = [0, 0], sizes = [8, 32], strides = [1, 1]} : vector<8x64xf32> to vector<8x32xf32>
    %305 = vector.extract_strided_slice %303 {offsets = [0, 32], sizes = [8, 32], strides = [1, 1]} : vector<8x64xf32> to vector<8x32xf32>
    %306 = vector.extract_strided_slice %294 {offsets = [0, 64], sizes = [8, 32], strides = [1, 1]} : vector<8x96xf32> to vector<8x32xf32>
    %307 = vector.extract_strided_slice %295 {offsets = [0, 64], sizes = [8, 32], strides = [1, 1]} : vector<8x96xf32> to vector<8x32xf32>
    %308 = arith.addf %307, %216 : vector<8x32xf32>
    %309 = arith.mulf %304, %308 : vector<8x32xf32>
    %310 = arith.addf %306, %309 : vector<8x32xf32>
    %311 = math.tanh %310 : vector<8x32xf32>
    %cst_73 = arith.constant 1.000000e+00 : f32
    %312 = vector.broadcast %cst_73 : f32 to vector<8x32xf32>
    %313 = arith.subf %312, %305 : vector<8x32xf32>
    %314 = arith.mulf %313, %311 : vector<8x32xf32>
    %315 = arith.mulf %305, %292 : vector<8x32xf32>
    %316 = arith.addf %314, %315 : vector<8x32xf32>
    %c24_74 = arith.constant 24 : index
    %c0_75 = arith.constant 0 : index
    %317 = vector.load %arg7[%c24_74, %c0_75] : memref<64x32xf32, #tpu.memory_space<vmem>>, vector<8x32xf32>
    tpu.vector_store %arg7[%c24_74, %c0_75], %316 {strides = array<i32>} : memref<64x32xf32, #tpu.memory_space<vmem>>, vector<8x32xf32>,
    %318 = vector.extract_strided_slice %220 {offsets = [32, 0], sizes = [8, 96], strides = [1, 1]} : vector<64x96xf32> to vector<8x96xf32>
    %cst_76 = arith.constant dense<0.000000e+00> : vector<8x96xf32>
    %319 = tpu.matmul %316, %210, %cst_76 {dimension_numbers = #tpu.dot_dimension_numbers<[1], [0], [0], [1], [0, 0, 1, 1], [], []>} : vector<8x32xf32>, vector<32x96xf32>, vector<8x96xf32> -> vector<8x96xf32>
    %320 = vector.extract_strided_slice %318 {offsets = [0, 0], sizes = [8, 64], strides = [1, 1]} : vector<8x96xf32> to vector<8x64xf32>
    %321 = vector.extract_strided_slice %319 {offsets = [0, 0], sizes = [8, 64], strides = [1, 1]} : vector<8x96xf32> to vector<8x64xf32>
    %322 = arith.addf %320, %321 : vector<8x64xf32>
    %323 = arith.negf %322 : vector<8x64xf32>
    %324 = math.exp %323 : vector<8x64xf32>
    %cst_77 = arith.constant 1.000000e+00 : f32
    %325 = vector.broadcast %cst_77 : f32 to vector<8x64xf32>
    %326 = arith.addf %325, %324 : vector<8x64xf32>
    %327 = arith.divf %325, %326 : vector<8x64xf32>
    %328 = vector.extract_strided_slice %327 {offsets = [0, 0], sizes = [8, 32], strides = [1, 1]} : vector<8x64xf32> to vector<8x32xf32>
    %329 = vector.extract_strided_slice %327 {offsets = [0, 32], sizes = [8, 32], strides = [1, 1]} : vector<8x64xf32> to vector<8x32xf32>
    %330 = vector.extract_strided_slice %318 {offsets = [0, 64], sizes = [8, 32], strides = [1, 1]} : vector<8x96xf32> to vector<8x32xf32>
    %331 = vector.extract_strided_slice %319 {offsets = [0, 64], sizes = [8, 32], strides = [1, 1]} : vector<8x96xf32> to vector<8x32xf32>
    %332 = arith.addf %331, %216 : vector<8x32xf32>
    %333 = arith.mulf %328, %332 : vector<8x32xf32>
    %334 = arith.addf %330, %333 : vector<8x32xf32>
    %335 = math.tanh %334 : vector<8x32xf32>
    %cst_78 = arith.constant 1.000000e+00 : f32
    %336 = vector.broadcast %cst_78 : f32 to vector<8x32xf32>
    %337 = arith.subf %336, %329 : vector<8x32xf32>
    %338 = arith.mulf %337, %335 : vector<8x32xf32>
    %339 = arith.mulf %329, %316 : vector<8x32xf32>
    %340 = arith.addf %338, %339 : vector<8x32xf32>
    %c32_79 = arith.constant 32 : index
    %c0_80 = arith.constant 0 : index
    %341 = vector.load %arg7[%c32_79, %c0_80] : memref<64x32xf32, #tpu.memory_space<vmem>>, vector<8x32xf32>
    tpu.vector_store %arg7[%c32_79, %c0_80], %340 {strides = array<i32>} : memref<64x32xf32, #tpu.memory_space<vmem>>, vector<8x32xf32>,
    %342 = vector.extract_strided_slice %220 {offsets = [40, 0], sizes = [8, 96], strides = [1, 1]} : vector<64x96xf32> to vector<8x96xf32>
    %cst_81 = arith.constant dense<0.000000e+00> : vector<8x96xf32>
    %343 = tpu.matmul %340, %210, %cst_81 {dimension_numbers = #tpu.dot_dimension_numbers<[1], [0], [0], [1], [0, 0, 1, 1], [], []>} : vector<8x32xf32>, vector<32x96xf32>, vector<8x96xf32> -> vector<8x96xf32>
    %344 = vector.extract_strided_slice %342 {offsets = [0, 0], sizes = [8, 64], strides = [1, 1]} : vector<8x96xf32> to vector<8x64xf32>
    %345 = vector.extract_strided_slice %343 {offsets = [0, 0], sizes = [8, 64], strides = [1, 1]} : vector<8x96xf32> to vector<8x64xf32>
    %346 = arith.addf %344, %345 : vector<8x64xf32>
    %347 = arith.negf %346 : vector<8x64xf32>
    %348 = math.exp %347 : vector<8x64xf32>
    %cst_82 = arith.constant 1.000000e+00 : f32
    %349 = vector.broadcast %cst_82 : f32 to vector<8x64xf32>
    %350 = arith.addf %349, %348 : vector<8x64xf32>
    %351 = arith.divf %349, %350 : vector<8x64xf32>
    %352 = vector.extract_strided_slice %351 {offsets = [0, 0], sizes = [8, 32], strides = [1, 1]} : vector<8x64xf32> to vector<8x32xf32>
    %353 = vector.extract_strided_slice %351 {offsets = [0, 32], sizes = [8, 32], strides = [1, 1]} : vector<8x64xf32> to vector<8x32xf32>
    %354 = vector.extract_strided_slice %342 {offsets = [0, 64], sizes = [8, 32], strides = [1, 1]} : vector<8x96xf32> to vector<8x32xf32>
    %355 = vector.extract_strided_slice %343 {offsets = [0, 64], sizes = [8, 32], strides = [1, 1]} : vector<8x96xf32> to vector<8x32xf32>
    %356 = arith.addf %355, %216 : vector<8x32xf32>
    %357 = arith.mulf %352, %356 : vector<8x32xf32>
    %358 = arith.addf %354, %357 : vector<8x32xf32>
    %359 = math.tanh %358 : vector<8x32xf32>
    %cst_83 = arith.constant 1.000000e+00 : f32
    %360 = vector.broadcast %cst_83 : f32 to vector<8x32xf32>
    %361 = arith.subf %360, %353 : vector<8x32xf32>
    %362 = arith.mulf %361, %359 : vector<8x32xf32>
    %363 = arith.mulf %353, %340 : vector<8x32xf32>
    %364 = arith.addf %362, %363 : vector<8x32xf32>
    %c40_84 = arith.constant 40 : index
    %c0_85 = arith.constant 0 : index
    %365 = vector.load %arg7[%c40_84, %c0_85] : memref<64x32xf32, #tpu.memory_space<vmem>>, vector<8x32xf32>
    tpu.vector_store %arg7[%c40_84, %c0_85], %364 {strides = array<i32>} : memref<64x32xf32, #tpu.memory_space<vmem>>, vector<8x32xf32>,
    %366 = vector.extract_strided_slice %220 {offsets = [48, 0], sizes = [8, 96], strides = [1, 1]} : vector<64x96xf32> to vector<8x96xf32>
    %cst_86 = arith.constant dense<0.000000e+00> : vector<8x96xf32>
    %367 = tpu.matmul %364, %210, %cst_86 {dimension_numbers = #tpu.dot_dimension_numbers<[1], [0], [0], [1], [0, 0, 1, 1], [], []>} : vector<8x32xf32>, vector<32x96xf32>, vector<8x96xf32> -> vector<8x96xf32>
    %368 = vector.extract_strided_slice %366 {offsets = [0, 0], sizes = [8, 64], strides = [1, 1]} : vector<8x96xf32> to vector<8x64xf32>
    %369 = vector.extract_strided_slice %367 {offsets = [0, 0], sizes = [8, 64], strides = [1, 1]} : vector<8x96xf32> to vector<8x64xf32>
    %370 = arith.addf %368, %369 : vector<8x64xf32>
    %371 = arith.negf %370 : vector<8x64xf32>
    %372 = math.exp %371 : vector<8x64xf32>
    %cst_87 = arith.constant 1.000000e+00 : f32
    %373 = vector.broadcast %cst_87 : f32 to vector<8x64xf32>
    %374 = arith.addf %373, %372 : vector<8x64xf32>
    %375 = arith.divf %373, %374 : vector<8x64xf32>
    %376 = vector.extract_strided_slice %375 {offsets = [0, 0], sizes = [8, 32], strides = [1, 1]} : vector<8x64xf32> to vector<8x32xf32>
    %377 = vector.extract_strided_slice %375 {offsets = [0, 32], sizes = [8, 32], strides = [1, 1]} : vector<8x64xf32> to vector<8x32xf32>
    %378 = vector.extract_strided_slice %366 {offsets = [0, 64], sizes = [8, 32], strides = [1, 1]} : vector<8x96xf32> to vector<8x32xf32>
    %379 = vector.extract_strided_slice %367 {offsets = [0, 64], sizes = [8, 32], strides = [1, 1]} : vector<8x96xf32> to vector<8x32xf32>
    %380 = arith.addf %379, %216 : vector<8x32xf32>
    %381 = arith.mulf %376, %380 : vector<8x32xf32>
    %382 = arith.addf %378, %381 : vector<8x32xf32>
    %383 = math.tanh %382 : vector<8x32xf32>
    %cst_88 = arith.constant 1.000000e+00 : f32
    %384 = vector.broadcast %cst_88 : f32 to vector<8x32xf32>
    %385 = arith.subf %384, %377 : vector<8x32xf32>
    %386 = arith.mulf %385, %383 : vector<8x32xf32>
    %387 = arith.mulf %377, %364 : vector<8x32xf32>
    %388 = arith.addf %386, %387 : vector<8x32xf32>
    %c48_89 = arith.constant 48 : index
    %c0_90 = arith.constant 0 : index
    %389 = vector.load %arg7[%c48_89, %c0_90] : memref<64x32xf32, #tpu.memory_space<vmem>>, vector<8x32xf32>
    tpu.vector_store %arg7[%c48_89, %c0_90], %388 {strides = array<i32>} : memref<64x32xf32, #tpu.memory_space<vmem>>, vector<8x32xf32>,
    %390 = vector.extract_strided_slice %220 {offsets = [56, 0], sizes = [8, 96], strides = [1, 1]} : vector<64x96xf32> to vector<8x96xf32>
    %cst_91 = arith.constant dense<0.000000e+00> : vector<8x96xf32>
    %391 = tpu.matmul %388, %210, %cst_91 {dimension_numbers = #tpu.dot_dimension_numbers<[1], [0], [0], [1], [0, 0, 1, 1], [], []>} : vector<8x32xf32>, vector<32x96xf32>, vector<8x96xf32> -> vector<8x96xf32>
    %392 = vector.extract_strided_slice %390 {offsets = [0, 0], sizes = [8, 64], strides = [1, 1]} : vector<8x96xf32> to vector<8x64xf32>
    %393 = vector.extract_strided_slice %391 {offsets = [0, 0], sizes = [8, 64], strides = [1, 1]} : vector<8x96xf32> to vector<8x64xf32>
    %394 = arith.addf %392, %393 : vector<8x64xf32>
    %395 = arith.negf %394 : vector<8x64xf32>
    %396 = math.exp %395 : vector<8x64xf32>
    %cst_92 = arith.constant 1.000000e+00 : f32
    %397 = vector.broadcast %cst_92 : f32 to vector<8x64xf32>
    %398 = arith.addf %397, %396 : vector<8x64xf32>
    %399 = arith.divf %397, %398 : vector<8x64xf32>
    %400 = vector.extract_strided_slice %399 {offsets = [0, 0], sizes = [8, 32], strides = [1, 1]} : vector<8x64xf32> to vector<8x32xf32>
    %401 = vector.extract_strided_slice %399 {offsets = [0, 32], sizes = [8, 32], strides = [1, 1]} : vector<8x64xf32> to vector<8x32xf32>
    %402 = vector.extract_strided_slice %390 {offsets = [0, 64], sizes = [8, 32], strides = [1, 1]} : vector<8x96xf32> to vector<8x32xf32>
    %403 = vector.extract_strided_slice %391 {offsets = [0, 64], sizes = [8, 32], strides = [1, 1]} : vector<8x96xf32> to vector<8x32xf32>
    %404 = arith.addf %403, %216 : vector<8x32xf32>
    %405 = arith.mulf %400, %404 : vector<8x32xf32>
    %406 = arith.addf %402, %405 : vector<8x32xf32>
    %407 = math.tanh %406 : vector<8x32xf32>
    %cst_93 = arith.constant 1.000000e+00 : f32
    %408 = vector.broadcast %cst_93 : f32 to vector<8x32xf32>
    %409 = arith.subf %408, %401 : vector<8x32xf32>
    %410 = arith.mulf %409, %407 : vector<8x32xf32>
    %411 = arith.mulf %401, %388 : vector<8x32xf32>
    %412 = arith.addf %410, %411 : vector<8x32xf32>
    %c56_94 = arith.constant 56 : index
    %c0_95 = arith.constant 0 : index
    %413 = vector.load %arg7[%c56_94, %c0_95] : memref<64x32xf32, #tpu.memory_space<vmem>>, vector<8x32xf32>
    tpu.vector_store %arg7[%c56_94, %c0_95], %412 {strides = array<i32>} : memref<64x32xf32, #tpu.memory_space<vmem>>, vector<8x32xf32>,
    %c2 = arith.constant 2 : index
    %c0_96 = arith.constant 0 : index
    %c0_97 = arith.constant 0 : index
    %414 = vector.load %arg1[%c2, %c0_96, %c0_97] : memref<4x32x96xf32, #tpu.memory_space<vmem>>, vector<1x32x96xf32>
    %415 = vector.shape_cast %414 : vector<1x32x96xf32> to vector<32x96xf32>
    %c2_98 = arith.constant 2 : index
    %c0_99 = arith.constant 0 : index
    %c0_100 = arith.constant 0 : index
    %416 = vector.load %arg2[%c2_98, %c0_99, %c0_100] : memref<4x32x96xf32, #tpu.memory_space<vmem>>, vector<1x32x96xf32>
    %417 = vector.shape_cast %416 : vector<1x32x96xf32> to vector<32x96xf32>
    %c2_101 = arith.constant 2 : index
    %c0_102 = arith.constant 0 : index
    %c0_103 = arith.constant 0 : index
    %418 = vector.load %arg3[%c2_101, %c0_102, %c0_103] : memref<4x2x96xf32, #tpu.memory_space<vmem>>, vector<1x2x96xf32>
    %419 = vector.shape_cast %418 : vector<1x2x96xf32> to vector<2x96xf32>
    %420 = vector.extract_strided_slice %419 {offsets = [0, 0], sizes = [1, 96], strides = [1, 1]} : vector<2x96xf32> to vector<1x96xf32>
    %421 = vector.extract_strided_slice %419 {offsets = [1, 64], sizes = [1, 32], strides = [1, 1]} : vector<2x96xf32> to vector<1x32xf32>
    %422 = vector.shape_cast %421 : vector<1x32xf32> to vector<1x32xf32>
    %423 = vector.broadcast %422 : vector<1x32xf32> to vector<8x32xf32>
    %c0_104 = arith.constant 0 : index
    %c0_105 = arith.constant 0 : index
    %424 = vector.load %arg7[%c0_104, %c0_105] : memref<64x32xf32, #tpu.memory_space<vmem>>, vector<64x32xf32>
    %cst_106 = arith.constant dense<0.000000e+00> : vector<64x96xf32>
    %425 = tpu.matmul %424, %415, %cst_106 {dimension_numbers = #tpu.dot_dimension_numbers<[1], [0], [0], [1], [0, 0, 1, 1], [], []>} : vector<64x32xf32>, vector<32x96xf32>, vector<64x96xf32> -> vector<64x96xf32>
    %426 = vector.broadcast %420 : vector<1x96xf32> to vector<64x96xf32>
    %427 = arith.addf %425, %426 : vector<64x96xf32>
    %cst_107 = arith.constant 0.000000e+00 : f32
    %428 = vector.broadcast %cst_107 : f32 to vector<8x32xf32>
    %429 = vector.extract_strided_slice %427 {offsets = [0, 0], sizes = [8, 96], strides = [1, 1]} : vector<64x96xf32> to vector<8x96xf32>
    %cst_108 = arith.constant dense<0.000000e+00> : vector<8x96xf32>
    %430 = tpu.matmul %428, %417, %cst_108 {dimension_numbers = #tpu.dot_dimension_numbers<[1], [0], [0], [1], [0, 0, 1, 1], [], []>} : vector<8x32xf32>, vector<32x96xf32>, vector<8x96xf32> -> vector<8x96xf32>
    %431 = vector.extract_strided_slice %429 {offsets = [0, 0], sizes = [8, 64], strides = [1, 1]} : vector<8x96xf32> to vector<8x64xf32>
    %432 = vector.extract_strided_slice %430 {offsets = [0, 0], sizes = [8, 64], strides = [1, 1]} : vector<8x96xf32> to vector<8x64xf32>
    %433 = arith.addf %431, %432 : vector<8x64xf32>
    %434 = arith.negf %433 : vector<8x64xf32>
    %435 = math.exp %434 : vector<8x64xf32>
    %cst_109 = arith.constant 1.000000e+00 : f32
    %436 = vector.broadcast %cst_109 : f32 to vector<8x64xf32>
    %437 = arith.addf %436, %435 : vector<8x64xf32>
    %438 = arith.divf %436, %437 : vector<8x64xf32>
    %439 = vector.extract_strided_slice %438 {offsets = [0, 0], sizes = [8, 32], strides = [1, 1]} : vector<8x64xf32> to vector<8x32xf32>
    %440 = vector.extract_strided_slice %438 {offsets = [0, 32], sizes = [8, 32], strides = [1, 1]} : vector<8x64xf32> to vector<8x32xf32>
    %441 = vector.extract_strided_slice %429 {offsets = [0, 64], sizes = [8, 32], strides = [1, 1]} : vector<8x96xf32> to vector<8x32xf32>
    %442 = vector.extract_strided_slice %430 {offsets = [0, 64], sizes = [8, 32], strides = [1, 1]} : vector<8x96xf32> to vector<8x32xf32>
    %443 = arith.addf %442, %423 : vector<8x32xf32>
    %444 = arith.mulf %439, %443 : vector<8x32xf32>
    %445 = arith.addf %441, %444 : vector<8x32xf32>
    %446 = math.tanh %445 : vector<8x32xf32>
    %cst_110 = arith.constant 1.000000e+00 : f32
    %447 = vector.broadcast %cst_110 : f32 to vector<8x32xf32>
    %448 = arith.subf %447, %440 : vector<8x32xf32>
    %449 = arith.mulf %448, %446 : vector<8x32xf32>
    %450 = arith.mulf %440, %428 : vector<8x32xf32>
    %451 = arith.addf %449, %450 : vector<8x32xf32>
    %c0_111 = arith.constant 0 : index
    %c0_112 = arith.constant 0 : index
    %452 = vector.load %arg7[%c0_111, %c0_112] : memref<64x32xf32, #tpu.memory_space<vmem>>, vector<8x32xf32>
    tpu.vector_store %arg7[%c0_111, %c0_112], %451 {strides = array<i32>} : memref<64x32xf32, #tpu.memory_space<vmem>>, vector<8x32xf32>,
    %453 = vector.extract_strided_slice %427 {offsets = [8, 0], sizes = [8, 96], strides = [1, 1]} : vector<64x96xf32> to vector<8x96xf32>
    %cst_113 = arith.constant dense<0.000000e+00> : vector<8x96xf32>
    %454 = tpu.matmul %451, %417, %cst_113 {dimension_numbers = #tpu.dot_dimension_numbers<[1], [0], [0], [1], [0, 0, 1, 1], [], []>} : vector<8x32xf32>, vector<32x96xf32>, vector<8x96xf32> -> vector<8x96xf32>
    %455 = vector.extract_strided_slice %453 {offsets = [0, 0], sizes = [8, 64], strides = [1, 1]} : vector<8x96xf32> to vector<8x64xf32>
    %456 = vector.extract_strided_slice %454 {offsets = [0, 0], sizes = [8, 64], strides = [1, 1]} : vector<8x96xf32> to vector<8x64xf32>
    %457 = arith.addf %455, %456 : vector<8x64xf32>
    %458 = arith.negf %457 : vector<8x64xf32>
    %459 = math.exp %458 : vector<8x64xf32>
    %cst_114 = arith.constant 1.000000e+00 : f32
    %460 = vector.broadcast %cst_114 : f32 to vector<8x64xf32>
    %461 = arith.addf %460, %459 : vector<8x64xf32>
    %462 = arith.divf %460, %461 : vector<8x64xf32>
    %463 = vector.extract_strided_slice %462 {offsets = [0, 0], sizes = [8, 32], strides = [1, 1]} : vector<8x64xf32> to vector<8x32xf32>
    %464 = vector.extract_strided_slice %462 {offsets = [0, 32], sizes = [8, 32], strides = [1, 1]} : vector<8x64xf32> to vector<8x32xf32>
    %465 = vector.extract_strided_slice %453 {offsets = [0, 64], sizes = [8, 32], strides = [1, 1]} : vector<8x96xf32> to vector<8x32xf32>
    %466 = vector.extract_strided_slice %454 {offsets = [0, 64], sizes = [8, 32], strides = [1, 1]} : vector<8x96xf32> to vector<8x32xf32>
    %467 = arith.addf %466, %423 : vector<8x32xf32>
    %468 = arith.mulf %463, %467 : vector<8x32xf32>
    %469 = arith.addf %465, %468 : vector<8x32xf32>
    %470 = math.tanh %469 : vector<8x32xf32>
    %cst_115 = arith.constant 1.000000e+00 : f32
    %471 = vector.broadcast %cst_115 : f32 to vector<8x32xf32>
    %472 = arith.subf %471, %464 : vector<8x32xf32>
    %473 = arith.mulf %472, %470 : vector<8x32xf32>
    %474 = arith.mulf %464, %451 : vector<8x32xf32>
    %475 = arith.addf %473, %474 : vector<8x32xf32>
    %c8_116 = arith.constant 8 : index
    %c0_117 = arith.constant 0 : index
    %476 = vector.load %arg7[%c8_116, %c0_117] : memref<64x32xf32, #tpu.memory_space<vmem>>, vector<8x32xf32>
    tpu.vector_store %arg7[%c8_116, %c0_117], %475 {strides = array<i32>} : memref<64x32xf32, #tpu.memory_space<vmem>>, vector<8x32xf32>,
    %477 = vector.extract_strided_slice %427 {offsets = [16, 0], sizes = [8, 96], strides = [1, 1]} : vector<64x96xf32> to vector<8x96xf32>
    %cst_118 = arith.constant dense<0.000000e+00> : vector<8x96xf32>
    %478 = tpu.matmul %475, %417, %cst_118 {dimension_numbers = #tpu.dot_dimension_numbers<[1], [0], [0], [1], [0, 0, 1, 1], [], []>} : vector<8x32xf32>, vector<32x96xf32>, vector<8x96xf32> -> vector<8x96xf32>
    %479 = vector.extract_strided_slice %477 {offsets = [0, 0], sizes = [8, 64], strides = [1, 1]} : vector<8x96xf32> to vector<8x64xf32>
    %480 = vector.extract_strided_slice %478 {offsets = [0, 0], sizes = [8, 64], strides = [1, 1]} : vector<8x96xf32> to vector<8x64xf32>
    %481 = arith.addf %479, %480 : vector<8x64xf32>
    %482 = arith.negf %481 : vector<8x64xf32>
    %483 = math.exp %482 : vector<8x64xf32>
    %cst_119 = arith.constant 1.000000e+00 : f32
    %484 = vector.broadcast %cst_119 : f32 to vector<8x64xf32>
    %485 = arith.addf %484, %483 : vector<8x64xf32>
    %486 = arith.divf %484, %485 : vector<8x64xf32>
    %487 = vector.extract_strided_slice %486 {offsets = [0, 0], sizes = [8, 32], strides = [1, 1]} : vector<8x64xf32> to vector<8x32xf32>
    %488 = vector.extract_strided_slice %486 {offsets = [0, 32], sizes = [8, 32], strides = [1, 1]} : vector<8x64xf32> to vector<8x32xf32>
    %489 = vector.extract_strided_slice %477 {offsets = [0, 64], sizes = [8, 32], strides = [1, 1]} : vector<8x96xf32> to vector<8x32xf32>
    %490 = vector.extract_strided_slice %478 {offsets = [0, 64], sizes = [8, 32], strides = [1, 1]} : vector<8x96xf32> to vector<8x32xf32>
    %491 = arith.addf %490, %423 : vector<8x32xf32>
    %492 = arith.mulf %487, %491 : vector<8x32xf32>
    %493 = arith.addf %489, %492 : vector<8x32xf32>
    %494 = math.tanh %493 : vector<8x32xf32>
    %cst_120 = arith.constant 1.000000e+00 : f32
    %495 = vector.broadcast %cst_120 : f32 to vector<8x32xf32>
    %496 = arith.subf %495, %488 : vector<8x32xf32>
    %497 = arith.mulf %496, %494 : vector<8x32xf32>
    %498 = arith.mulf %488, %475 : vector<8x32xf32>
    %499 = arith.addf %497, %498 : vector<8x32xf32>
    %c16_121 = arith.constant 16 : index
    %c0_122 = arith.constant 0 : index
    %500 = vector.load %arg7[%c16_121, %c0_122] : memref<64x32xf32, #tpu.memory_space<vmem>>, vector<8x32xf32>
    tpu.vector_store %arg7[%c16_121, %c0_122], %499 {strides = array<i32>} : memref<64x32xf32, #tpu.memory_space<vmem>>, vector<8x32xf32>,
    %501 = vector.extract_strided_slice %427 {offsets = [24, 0], sizes = [8, 96], strides = [1, 1]} : vector<64x96xf32> to vector<8x96xf32>
    %cst_123 = arith.constant dense<0.000000e+00> : vector<8x96xf32>
    %502 = tpu.matmul %499, %417, %cst_123 {dimension_numbers = #tpu.dot_dimension_numbers<[1], [0], [0], [1], [0, 0, 1, 1], [], []>} : vector<8x32xf32>, vector<32x96xf32>, vector<8x96xf32> -> vector<8x96xf32>
    %503 = vector.extract_strided_slice %501 {offsets = [0, 0], sizes = [8, 64], strides = [1, 1]} : vector<8x96xf32> to vector<8x64xf32>
    %504 = vector.extract_strided_slice %502 {offsets = [0, 0], sizes = [8, 64], strides = [1, 1]} : vector<8x96xf32> to vector<8x64xf32>
    %505 = arith.addf %503, %504 : vector<8x64xf32>
    %506 = arith.negf %505 : vector<8x64xf32>
    %507 = math.exp %506 : vector<8x64xf32>
    %cst_124 = arith.constant 1.000000e+00 : f32
    %508 = vector.broadcast %cst_124 : f32 to vector<8x64xf32>
    %509 = arith.addf %508, %507 : vector<8x64xf32>
    %510 = arith.divf %508, %509 : vector<8x64xf32>
    %511 = vector.extract_strided_slice %510 {offsets = [0, 0], sizes = [8, 32], strides = [1, 1]} : vector<8x64xf32> to vector<8x32xf32>
    %512 = vector.extract_strided_slice %510 {offsets = [0, 32], sizes = [8, 32], strides = [1, 1]} : vector<8x64xf32> to vector<8x32xf32>
    %513 = vector.extract_strided_slice %501 {offsets = [0, 64], sizes = [8, 32], strides = [1, 1]} : vector<8x96xf32> to vector<8x32xf32>
    %514 = vector.extract_strided_slice %502 {offsets = [0, 64], sizes = [8, 32], strides = [1, 1]} : vector<8x96xf32> to vector<8x32xf32>
    %515 = arith.addf %514, %423 : vector<8x32xf32>
    %516 = arith.mulf %511, %515 : vector<8x32xf32>
    %517 = arith.addf %513, %516 : vector<8x32xf32>
    %518 = math.tanh %517 : vector<8x32xf32>
    %cst_125 = arith.constant 1.000000e+00 : f32
    %519 = vector.broadcast %cst_125 : f32 to vector<8x32xf32>
    %520 = arith.subf %519, %512 : vector<8x32xf32>
    %521 = arith.mulf %520, %518 : vector<8x32xf32>
    %522 = arith.mulf %512, %499 : vector<8x32xf32>
    %523 = arith.addf %521, %522 : vector<8x32xf32>
    %c24_126 = arith.constant 24 : index
    %c0_127 = arith.constant 0 : index
    %524 = vector.load %arg7[%c24_126, %c0_127] : memref<64x32xf32, #tpu.memory_space<vmem>>, vector<8x32xf32>
    tpu.vector_store %arg7[%c24_126, %c0_127], %523 {strides = array<i32>} : memref<64x32xf32, #tpu.memory_space<vmem>>, vector<8x32xf32>,
    %525 = vector.extract_strided_slice %427 {offsets = [32, 0], sizes = [8, 96], strides = [1, 1]} : vector<64x96xf32> to vector<8x96xf32>
    %cst_128 = arith.constant dense<0.000000e+00> : vector<8x96xf32>
    %526 = tpu.matmul %523, %417, %cst_128 {dimension_numbers = #tpu.dot_dimension_numbers<[1], [0], [0], [1], [0, 0, 1, 1], [], []>} : vector<8x32xf32>, vector<32x96xf32>, vector<8x96xf32> -> vector<8x96xf32>
    %527 = vector.extract_strided_slice %525 {offsets = [0, 0], sizes = [8, 64], strides = [1, 1]} : vector<8x96xf32> to vector<8x64xf32>
    %528 = vector.extract_strided_slice %526 {offsets = [0, 0], sizes = [8, 64], strides = [1, 1]} : vector<8x96xf32> to vector<8x64xf32>
    %529 = arith.addf %527, %528 : vector<8x64xf32>
    %530 = arith.negf %529 : vector<8x64xf32>
    %531 = math.exp %530 : vector<8x64xf32>
    %cst_129 = arith.constant 1.000000e+00 : f32
    %532 = vector.broadcast %cst_129 : f32 to vector<8x64xf32>
    %533 = arith.addf %532, %531 : vector<8x64xf32>
    %534 = arith.divf %532, %533 : vector<8x64xf32>
    %535 = vector.extract_strided_slice %534 {offsets = [0, 0], sizes = [8, 32], strides = [1, 1]} : vector<8x64xf32> to vector<8x32xf32>
    %536 = vector.extract_strided_slice %534 {offsets = [0, 32], sizes = [8, 32], strides = [1, 1]} : vector<8x64xf32> to vector<8x32xf32>
    %537 = vector.extract_strided_slice %525 {offsets = [0, 64], sizes = [8, 32], strides = [1, 1]} : vector<8x96xf32> to vector<8x32xf32>
    %538 = vector.extract_strided_slice %526 {offsets = [0, 64], sizes = [8, 32], strides = [1, 1]} : vector<8x96xf32> to vector<8x32xf32>
    %539 = arith.addf %538, %423 : vector<8x32xf32>
    %540 = arith.mulf %535, %539 : vector<8x32xf32>
    %541 = arith.addf %537, %540 : vector<8x32xf32>
    %542 = math.tanh %541 : vector<8x32xf32>
    %cst_130 = arith.constant 1.000000e+00 : f32
    %543 = vector.broadcast %cst_130 : f32 to vector<8x32xf32>
    %544 = arith.subf %543, %536 : vector<8x32xf32>
    %545 = arith.mulf %544, %542 : vector<8x32xf32>
    %546 = arith.mulf %536, %523 : vector<8x32xf32>
    %547 = arith.addf %545, %546 : vector<8x32xf32>
    %c32_131 = arith.constant 32 : index
    %c0_132 = arith.constant 0 : index
    %548 = vector.load %arg7[%c32_131, %c0_132] : memref<64x32xf32, #tpu.memory_space<vmem>>, vector<8x32xf32>
    tpu.vector_store %arg7[%c32_131, %c0_132], %547 {strides = array<i32>} : memref<64x32xf32, #tpu.memory_space<vmem>>, vector<8x32xf32>,
    %549 = vector.extract_strided_slice %427 {offsets = [40, 0], sizes = [8, 96], strides = [1, 1]} : vector<64x96xf32> to vector<8x96xf32>
    %cst_133 = arith.constant dense<0.000000e+00> : vector<8x96xf32>
    %550 = tpu.matmul %547, %417, %cst_133 {dimension_numbers = #tpu.dot_dimension_numbers<[1], [0], [0], [1], [0, 0, 1, 1], [], []>} : vector<8x32xf32>, vector<32x96xf32>, vector<8x96xf32> -> vector<8x96xf32>
    %551 = vector.extract_strided_slice %549 {offsets = [0, 0], sizes = [8, 64], strides = [1, 1]} : vector<8x96xf32> to vector<8x64xf32>
    %552 = vector.extract_strided_slice %550 {offsets = [0, 0], sizes = [8, 64], strides = [1, 1]} : vector<8x96xf32> to vector<8x64xf32>
    %553 = arith.addf %551, %552 : vector<8x64xf32>
    %554 = arith.negf %553 : vector<8x64xf32>
    %555 = math.exp %554 : vector<8x64xf32>
    %cst_134 = arith.constant 1.000000e+00 : f32
    %556 = vector.broadcast %cst_134 : f32 to vector<8x64xf32>
    %557 = arith.addf %556, %555 : vector<8x64xf32>
    %558 = arith.divf %556, %557 : vector<8x64xf32>
    %559 = vector.extract_strided_slice %558 {offsets = [0, 0], sizes = [8, 32], strides = [1, 1]} : vector<8x64xf32> to vector<8x32xf32>
    %560 = vector.extract_strided_slice %558 {offsets = [0, 32], sizes = [8, 32], strides = [1, 1]} : vector<8x64xf32> to vector<8x32xf32>
    %561 = vector.extract_strided_slice %549 {offsets = [0, 64], sizes = [8, 32], strides = [1, 1]} : vector<8x96xf32> to vector<8x32xf32>
    %562 = vector.extract_strided_slice %550 {offsets = [0, 64], sizes = [8, 32], strides = [1, 1]} : vector<8x96xf32> to vector<8x32xf32>
    %563 = arith.addf %562, %423 : vector<8x32xf32>
    %564 = arith.mulf %559, %563 : vector<8x32xf32>
    %565 = arith.addf %561, %564 : vector<8x32xf32>
    %566 = math.tanh %565 : vector<8x32xf32>
    %cst_135 = arith.constant 1.000000e+00 : f32
    %567 = vector.broadcast %cst_135 : f32 to vector<8x32xf32>
    %568 = arith.subf %567, %560 : vector<8x32xf32>
    %569 = arith.mulf %568, %566 : vector<8x32xf32>
    %570 = arith.mulf %560, %547 : vector<8x32xf32>
    %571 = arith.addf %569, %570 : vector<8x32xf32>
    %c40_136 = arith.constant 40 : index
    %c0_137 = arith.constant 0 : index
    %572 = vector.load %arg7[%c40_136, %c0_137] : memref<64x32xf32, #tpu.memory_space<vmem>>, vector<8x32xf32>
    tpu.vector_store %arg7[%c40_136, %c0_137], %571 {strides = array<i32>} : memref<64x32xf32, #tpu.memory_space<vmem>>, vector<8x32xf32>,
    %573 = vector.extract_strided_slice %427 {offsets = [48, 0], sizes = [8, 96], strides = [1, 1]} : vector<64x96xf32> to vector<8x96xf32>
    %cst_138 = arith.constant dense<0.000000e+00> : vector<8x96xf32>
    %574 = tpu.matmul %571, %417, %cst_138 {dimension_numbers = #tpu.dot_dimension_numbers<[1], [0], [0], [1], [0, 0, 1, 1], [], []>} : vector<8x32xf32>, vector<32x96xf32>, vector<8x96xf32> -> vector<8x96xf32>
    %575 = vector.extract_strided_slice %573 {offsets = [0, 0], sizes = [8, 64], strides = [1, 1]} : vector<8x96xf32> to vector<8x64xf32>
    %576 = vector.extract_strided_slice %574 {offsets = [0, 0], sizes = [8, 64], strides = [1, 1]} : vector<8x96xf32> to vector<8x64xf32>
    %577 = arith.addf %575, %576 : vector<8x64xf32>
    %578 = arith.negf %577 : vector<8x64xf32>
    %579 = math.exp %578 : vector<8x64xf32>
    %cst_139 = arith.constant 1.000000e+00 : f32
    %580 = vector.broadcast %cst_139 : f32 to vector<8x64xf32>
    %581 = arith.addf %580, %579 : vector<8x64xf32>
    %582 = arith.divf %580, %581 : vector<8x64xf32>
    %583 = vector.extract_strided_slice %582 {offsets = [0, 0], sizes = [8, 32], strides = [1, 1]} : vector<8x64xf32> to vector<8x32xf32>
    %584 = vector.extract_strided_slice %582 {offsets = [0, 32], sizes = [8, 32], strides = [1, 1]} : vector<8x64xf32> to vector<8x32xf32>
    %585 = vector.extract_strided_slice %573 {offsets = [0, 64], sizes = [8, 32], strides = [1, 1]} : vector<8x96xf32> to vector<8x32xf32>
    %586 = vector.extract_strided_slice %574 {offsets = [0, 64], sizes = [8, 32], strides = [1, 1]} : vector<8x96xf32> to vector<8x32xf32>
    %587 = arith.addf %586, %423 : vector<8x32xf32>
    %588 = arith.mulf %583, %587 : vector<8x32xf32>
    %589 = arith.addf %585, %588 : vector<8x32xf32>
    %590 = math.tanh %589 : vector<8x32xf32>
    %cst_140 = arith.constant 1.000000e+00 : f32
    %591 = vector.broadcast %cst_140 : f32 to vector<8x32xf32>
    %592 = arith.subf %591, %584 : vector<8x32xf32>
    %593 = arith.mulf %592, %590 : vector<8x32xf32>
    %594 = arith.mulf %584, %571 : vector<8x32xf32>
    %595 = arith.addf %593, %594 : vector<8x32xf32>
    %c48_141 = arith.constant 48 : index
    %c0_142 = arith.constant 0 : index
    %596 = vector.load %arg7[%c48_141, %c0_142] : memref<64x32xf32, #tpu.memory_space<vmem>>, vector<8x32xf32>
    tpu.vector_store %arg7[%c48_141, %c0_142], %595 {strides = array<i32>} : memref<64x32xf32, #tpu.memory_space<vmem>>, vector<8x32xf32>,
    %597 = vector.extract_strided_slice %427 {offsets = [56, 0], sizes = [8, 96], strides = [1, 1]} : vector<64x96xf32> to vector<8x96xf32>
    %cst_143 = arith.constant dense<0.000000e+00> : vector<8x96xf32>
    %598 = tpu.matmul %595, %417, %cst_143 {dimension_numbers = #tpu.dot_dimension_numbers<[1], [0], [0], [1], [0, 0, 1, 1], [], []>} : vector<8x32xf32>, vector<32x96xf32>, vector<8x96xf32> -> vector<8x96xf32>
    %599 = vector.extract_strided_slice %597 {offsets = [0, 0], sizes = [8, 64], strides = [1, 1]} : vector<8x96xf32> to vector<8x64xf32>
    %600 = vector.extract_strided_slice %598 {offsets = [0, 0], sizes = [8, 64], strides = [1, 1]} : vector<8x96xf32> to vector<8x64xf32>
    %601 = arith.addf %599, %600 : vector<8x64xf32>
    %602 = arith.negf %601 : vector<8x64xf32>
    %603 = math.exp %602 : vector<8x64xf32>
    %cst_144 = arith.constant 1.000000e+00 : f32
    %604 = vector.broadcast %cst_144 : f32 to vector<8x64xf32>
    %605 = arith.addf %604, %603 : vector<8x64xf32>
    %606 = arith.divf %604, %605 : vector<8x64xf32>
    %607 = vector.extract_strided_slice %606 {offsets = [0, 0], sizes = [8, 32], strides = [1, 1]} : vector<8x64xf32> to vector<8x32xf32>
    %608 = vector.extract_strided_slice %606 {offsets = [0, 32], sizes = [8, 32], strides = [1, 1]} : vector<8x64xf32> to vector<8x32xf32>
    %609 = vector.extract_strided_slice %597 {offsets = [0, 64], sizes = [8, 32], strides = [1, 1]} : vector<8x96xf32> to vector<8x32xf32>
    %610 = vector.extract_strided_slice %598 {offsets = [0, 64], sizes = [8, 32], strides = [1, 1]} : vector<8x96xf32> to vector<8x32xf32>
    %611 = arith.addf %610, %423 : vector<8x32xf32>
    %612 = arith.mulf %607, %611 : vector<8x32xf32>
    %613 = arith.addf %609, %612 : vector<8x32xf32>
    %614 = math.tanh %613 : vector<8x32xf32>
    %cst_145 = arith.constant 1.000000e+00 : f32
    %615 = vector.broadcast %cst_145 : f32 to vector<8x32xf32>
    %616 = arith.subf %615, %608 : vector<8x32xf32>
    %617 = arith.mulf %616, %614 : vector<8x32xf32>
    %618 = arith.mulf %608, %595 : vector<8x32xf32>
    %619 = arith.addf %617, %618 : vector<8x32xf32>
    %c56_146 = arith.constant 56 : index
    %c0_147 = arith.constant 0 : index
    %620 = vector.load %arg7[%c56_146, %c0_147] : memref<64x32xf32, #tpu.memory_space<vmem>>, vector<8x32xf32>
    tpu.vector_store %arg7[%c56_146, %c0_147], %619 {strides = array<i32>} : memref<64x32xf32, #tpu.memory_space<vmem>>, vector<8x32xf32>,
    %c3 = arith.constant 3 : index
    %c0_148 = arith.constant 0 : index
    %c0_149 = arith.constant 0 : index
    %621 = vector.load %arg1[%c3, %c0_148, %c0_149] : memref<4x32x96xf32, #tpu.memory_space<vmem>>, vector<1x32x96xf32>
    %622 = vector.shape_cast %621 : vector<1x32x96xf32> to vector<32x96xf32>
    %c3_150 = arith.constant 3 : index
    %c0_151 = arith.constant 0 : index
    %c0_152 = arith.constant 0 : index
    %623 = vector.load %arg2[%c3_150, %c0_151, %c0_152] : memref<4x32x96xf32, #tpu.memory_space<vmem>>, vector<1x32x96xf32>
    %624 = vector.shape_cast %623 : vector<1x32x96xf32> to vector<32x96xf32>
    %c3_153 = arith.constant 3 : index
    %c0_154 = arith.constant 0 : index
    %c0_155 = arith.constant 0 : index
    %625 = vector.load %arg3[%c3_153, %c0_154, %c0_155] : memref<4x2x96xf32, #tpu.memory_space<vmem>>, vector<1x2x96xf32>
    %626 = vector.shape_cast %625 : vector<1x2x96xf32> to vector<2x96xf32>
    %627 = vector.extract_strided_slice %626 {offsets = [0, 0], sizes = [1, 96], strides = [1, 1]} : vector<2x96xf32> to vector<1x96xf32>
    %628 = vector.extract_strided_slice %626 {offsets = [1, 64], sizes = [1, 32], strides = [1, 1]} : vector<2x96xf32> to vector<1x32xf32>
    %629 = vector.shape_cast %628 : vector<1x32xf32> to vector<1x32xf32>
    %630 = vector.broadcast %629 : vector<1x32xf32> to vector<8x32xf32>
    %c0_156 = arith.constant 0 : index
    %c0_157 = arith.constant 0 : index
    %631 = vector.load %arg7[%c0_156, %c0_157] : memref<64x32xf32, #tpu.memory_space<vmem>>, vector<64x32xf32>
    %cst_158 = arith.constant dense<0.000000e+00> : vector<64x96xf32>
    %632 = tpu.matmul %631, %622, %cst_158 {dimension_numbers = #tpu.dot_dimension_numbers<[1], [0], [0], [1], [0, 0, 1, 1], [], []>} : vector<64x32xf32>, vector<32x96xf32>, vector<64x96xf32> -> vector<64x96xf32>
    %633 = vector.broadcast %627 : vector<1x96xf32> to vector<64x96xf32>
    %634 = arith.addf %632, %633 : vector<64x96xf32>
    %cst_159 = arith.constant 0.000000e+00 : f32
    %635 = vector.broadcast %cst_159 : f32 to vector<8x32xf32>
    %636 = vector.extract_strided_slice %634 {offsets = [0, 0], sizes = [8, 96], strides = [1, 1]} : vector<64x96xf32> to vector<8x96xf32>
    %cst_160 = arith.constant dense<0.000000e+00> : vector<8x96xf32>
    %637 = tpu.matmul %635, %624, %cst_160 {dimension_numbers = #tpu.dot_dimension_numbers<[1], [0], [0], [1], [0, 0, 1, 1], [], []>} : vector<8x32xf32>, vector<32x96xf32>, vector<8x96xf32> -> vector<8x96xf32>
    %638 = vector.extract_strided_slice %636 {offsets = [0, 0], sizes = [8, 64], strides = [1, 1]} : vector<8x96xf32> to vector<8x64xf32>
    %639 = vector.extract_strided_slice %637 {offsets = [0, 0], sizes = [8, 64], strides = [1, 1]} : vector<8x96xf32> to vector<8x64xf32>
    %640 = arith.addf %638, %639 : vector<8x64xf32>
    %641 = arith.negf %640 : vector<8x64xf32>
    %642 = math.exp %641 : vector<8x64xf32>
    %cst_161 = arith.constant 1.000000e+00 : f32
    %643 = vector.broadcast %cst_161 : f32 to vector<8x64xf32>
    %644 = arith.addf %643, %642 : vector<8x64xf32>
    %645 = arith.divf %643, %644 : vector<8x64xf32>
    %646 = vector.extract_strided_slice %645 {offsets = [0, 0], sizes = [8, 32], strides = [1, 1]} : vector<8x64xf32> to vector<8x32xf32>
    %647 = vector.extract_strided_slice %645 {offsets = [0, 32], sizes = [8, 32], strides = [1, 1]} : vector<8x64xf32> to vector<8x32xf32>
    %648 = vector.extract_strided_slice %636 {offsets = [0, 64], sizes = [8, 32], strides = [1, 1]} : vector<8x96xf32> to vector<8x32xf32>
    %649 = vector.extract_strided_slice %637 {offsets = [0, 64], sizes = [8, 32], strides = [1, 1]} : vector<8x96xf32> to vector<8x32xf32>
    %650 = arith.addf %649, %630 : vector<8x32xf32>
    %651 = arith.mulf %646, %650 : vector<8x32xf32>
    %652 = arith.addf %648, %651 : vector<8x32xf32>
    %653 = math.tanh %652 : vector<8x32xf32>
    %cst_162 = arith.constant 1.000000e+00 : f32
    %654 = vector.broadcast %cst_162 : f32 to vector<8x32xf32>
    %655 = arith.subf %654, %647 : vector<8x32xf32>
    %656 = arith.mulf %655, %653 : vector<8x32xf32>
    %657 = arith.mulf %647, %635 : vector<8x32xf32>
    %658 = arith.addf %656, %657 : vector<8x32xf32>
    %659 = vector.extract_strided_slice %634 {offsets = [8, 0], sizes = [8, 96], strides = [1, 1]} : vector<64x96xf32> to vector<8x96xf32>
    %cst_163 = arith.constant dense<0.000000e+00> : vector<8x96xf32>
    %660 = tpu.matmul %658, %624, %cst_163 {dimension_numbers = #tpu.dot_dimension_numbers<[1], [0], [0], [1], [0, 0, 1, 1], [], []>} : vector<8x32xf32>, vector<32x96xf32>, vector<8x96xf32> -> vector<8x96xf32>
    %661 = vector.extract_strided_slice %659 {offsets = [0, 0], sizes = [8, 64], strides = [1, 1]} : vector<8x96xf32> to vector<8x64xf32>
    %662 = vector.extract_strided_slice %660 {offsets = [0, 0], sizes = [8, 64], strides = [1, 1]} : vector<8x96xf32> to vector<8x64xf32>
    %663 = arith.addf %661, %662 : vector<8x64xf32>
    %664 = arith.negf %663 : vector<8x64xf32>
    %665 = math.exp %664 : vector<8x64xf32>
    %cst_164 = arith.constant 1.000000e+00 : f32
    %666 = vector.broadcast %cst_164 : f32 to vector<8x64xf32>
    %667 = arith.addf %666, %665 : vector<8x64xf32>
    %668 = arith.divf %666, %667 : vector<8x64xf32>
    %669 = vector.extract_strided_slice %668 {offsets = [0, 0], sizes = [8, 32], strides = [1, 1]} : vector<8x64xf32> to vector<8x32xf32>
    %670 = vector.extract_strided_slice %668 {offsets = [0, 32], sizes = [8, 32], strides = [1, 1]} : vector<8x64xf32> to vector<8x32xf32>
    %671 = vector.extract_strided_slice %659 {offsets = [0, 64], sizes = [8, 32], strides = [1, 1]} : vector<8x96xf32> to vector<8x32xf32>
    %672 = vector.extract_strided_slice %660 {offsets = [0, 64], sizes = [8, 32], strides = [1, 1]} : vector<8x96xf32> to vector<8x32xf32>
    %673 = arith.addf %672, %630 : vector<8x32xf32>
    %674 = arith.mulf %669, %673 : vector<8x32xf32>
    %675 = arith.addf %671, %674 : vector<8x32xf32>
    %676 = math.tanh %675 : vector<8x32xf32>
    %cst_165 = arith.constant 1.000000e+00 : f32
    %677 = vector.broadcast %cst_165 : f32 to vector<8x32xf32>
    %678 = arith.subf %677, %670 : vector<8x32xf32>
    %679 = arith.mulf %678, %676 : vector<8x32xf32>
    %680 = arith.mulf %670, %658 : vector<8x32xf32>
    %681 = arith.addf %679, %680 : vector<8x32xf32>
    %682 = vector.extract_strided_slice %634 {offsets = [16, 0], sizes = [8, 96], strides = [1, 1]} : vector<64x96xf32> to vector<8x96xf32>
    %cst_166 = arith.constant dense<0.000000e+00> : vector<8x96xf32>
    %683 = tpu.matmul %681, %624, %cst_166 {dimension_numbers = #tpu.dot_dimension_numbers<[1], [0], [0], [1], [0, 0, 1, 1], [], []>} : vector<8x32xf32>, vector<32x96xf32>, vector<8x96xf32> -> vector<8x96xf32>
    %684 = vector.extract_strided_slice %682 {offsets = [0, 0], sizes = [8, 64], strides = [1, 1]} : vector<8x96xf32> to vector<8x64xf32>
    %685 = vector.extract_strided_slice %683 {offsets = [0, 0], sizes = [8, 64], strides = [1, 1]} : vector<8x96xf32> to vector<8x64xf32>
    %686 = arith.addf %684, %685 : vector<8x64xf32>
    %687 = arith.negf %686 : vector<8x64xf32>
    %688 = math.exp %687 : vector<8x64xf32>
    %cst_167 = arith.constant 1.000000e+00 : f32
    %689 = vector.broadcast %cst_167 : f32 to vector<8x64xf32>
    %690 = arith.addf %689, %688 : vector<8x64xf32>
    %691 = arith.divf %689, %690 : vector<8x64xf32>
    %692 = vector.extract_strided_slice %691 {offsets = [0, 0], sizes = [8, 32], strides = [1, 1]} : vector<8x64xf32> to vector<8x32xf32>
    %693 = vector.extract_strided_slice %691 {offsets = [0, 32], sizes = [8, 32], strides = [1, 1]} : vector<8x64xf32> to vector<8x32xf32>
    %694 = vector.extract_strided_slice %682 {offsets = [0, 64], sizes = [8, 32], strides = [1, 1]} : vector<8x96xf32> to vector<8x32xf32>
    %695 = vector.extract_strided_slice %683 {offsets = [0, 64], sizes = [8, 32], strides = [1, 1]} : vector<8x96xf32> to vector<8x32xf32>
    %696 = arith.addf %695, %630 : vector<8x32xf32>
    %697 = arith.mulf %692, %696 : vector<8x32xf32>
    %698 = arith.addf %694, %697 : vector<8x32xf32>
    %699 = math.tanh %698 : vector<8x32xf32>
    %cst_168 = arith.constant 1.000000e+00 : f32
    %700 = vector.broadcast %cst_168 : f32 to vector<8x32xf32>
    %701 = arith.subf %700, %693 : vector<8x32xf32>
    %702 = arith.mulf %701, %699 : vector<8x32xf32>
    %703 = arith.mulf %693, %681 : vector<8x32xf32>
    %704 = arith.addf %702, %703 : vector<8x32xf32>
    %705 = vector.extract_strided_slice %634 {offsets = [24, 0], sizes = [8, 96], strides = [1, 1]} : vector<64x96xf32> to vector<8x96xf32>
    %cst_169 = arith.constant dense<0.000000e+00> : vector<8x96xf32>
    %706 = tpu.matmul %704, %624, %cst_169 {dimension_numbers = #tpu.dot_dimension_numbers<[1], [0], [0], [1], [0, 0, 1, 1], [], []>} : vector<8x32xf32>, vector<32x96xf32>, vector<8x96xf32> -> vector<8x96xf32>
    %707 = vector.extract_strided_slice %705 {offsets = [0, 0], sizes = [8, 64], strides = [1, 1]} : vector<8x96xf32> to vector<8x64xf32>
    %708 = vector.extract_strided_slice %706 {offsets = [0, 0], sizes = [8, 64], strides = [1, 1]} : vector<8x96xf32> to vector<8x64xf32>
    %709 = arith.addf %707, %708 : vector<8x64xf32>
    %710 = arith.negf %709 : vector<8x64xf32>
    %711 = math.exp %710 : vector<8x64xf32>
    %cst_170 = arith.constant 1.000000e+00 : f32
    %712 = vector.broadcast %cst_170 : f32 to vector<8x64xf32>
    %713 = arith.addf %712, %711 : vector<8x64xf32>
    %714 = arith.divf %712, %713 : vector<8x64xf32>
    %715 = vector.extract_strided_slice %714 {offsets = [0, 0], sizes = [8, 32], strides = [1, 1]} : vector<8x64xf32> to vector<8x32xf32>
    %716 = vector.extract_strided_slice %714 {offsets = [0, 32], sizes = [8, 32], strides = [1, 1]} : vector<8x64xf32> to vector<8x32xf32>
    %717 = vector.extract_strided_slice %705 {offsets = [0, 64], sizes = [8, 32], strides = [1, 1]} : vector<8x96xf32> to vector<8x32xf32>
    %718 = vector.extract_strided_slice %706 {offsets = [0, 64], sizes = [8, 32], strides = [1, 1]} : vector<8x96xf32> to vector<8x32xf32>
    %719 = arith.addf %718, %630 : vector<8x32xf32>
    %720 = arith.mulf %715, %719 : vector<8x32xf32>
    %721 = arith.addf %717, %720 : vector<8x32xf32>
    %722 = math.tanh %721 : vector<8x32xf32>
    %cst_171 = arith.constant 1.000000e+00 : f32
    %723 = vector.broadcast %cst_171 : f32 to vector<8x32xf32>
    %724 = arith.subf %723, %716 : vector<8x32xf32>
    %725 = arith.mulf %724, %722 : vector<8x32xf32>
    %726 = arith.mulf %716, %704 : vector<8x32xf32>
    %727 = arith.addf %725, %726 : vector<8x32xf32>
    %728 = vector.extract_strided_slice %634 {offsets = [32, 0], sizes = [8, 96], strides = [1, 1]} : vector<64x96xf32> to vector<8x96xf32>
    %cst_172 = arith.constant dense<0.000000e+00> : vector<8x96xf32>
    %729 = tpu.matmul %727, %624, %cst_172 {dimension_numbers = #tpu.dot_dimension_numbers<[1], [0], [0], [1], [0, 0, 1, 1], [], []>} : vector<8x32xf32>, vector<32x96xf32>, vector<8x96xf32> -> vector<8x96xf32>
    %730 = vector.extract_strided_slice %728 {offsets = [0, 0], sizes = [8, 64], strides = [1, 1]} : vector<8x96xf32> to vector<8x64xf32>
    %731 = vector.extract_strided_slice %729 {offsets = [0, 0], sizes = [8, 64], strides = [1, 1]} : vector<8x96xf32> to vector<8x64xf32>
    %732 = arith.addf %730, %731 : vector<8x64xf32>
    %733 = arith.negf %732 : vector<8x64xf32>
    %734 = math.exp %733 : vector<8x64xf32>
    %cst_173 = arith.constant 1.000000e+00 : f32
    %735 = vector.broadcast %cst_173 : f32 to vector<8x64xf32>
    %736 = arith.addf %735, %734 : vector<8x64xf32>
    %737 = arith.divf %735, %736 : vector<8x64xf32>
    %738 = vector.extract_strided_slice %737 {offsets = [0, 0], sizes = [8, 32], strides = [1, 1]} : vector<8x64xf32> to vector<8x32xf32>
    %739 = vector.extract_strided_slice %737 {offsets = [0, 32], sizes = [8, 32], strides = [1, 1]} : vector<8x64xf32> to vector<8x32xf32>
    %740 = vector.extract_strided_slice %728 {offsets = [0, 64], sizes = [8, 32], strides = [1, 1]} : vector<8x96xf32> to vector<8x32xf32>
    %741 = vector.extract_strided_slice %729 {offsets = [0, 64], sizes = [8, 32], strides = [1, 1]} : vector<8x96xf32> to vector<8x32xf32>
    %742 = arith.addf %741, %630 : vector<8x32xf32>
    %743 = arith.mulf %738, %742 : vector<8x32xf32>
    %744 = arith.addf %740, %743 : vector<8x32xf32>
    %745 = math.tanh %744 : vector<8x32xf32>
    %cst_174 = arith.constant 1.000000e+00 : f32
    %746 = vector.broadcast %cst_174 : f32 to vector<8x32xf32>
    %747 = arith.subf %746, %739 : vector<8x32xf32>
    %748 = arith.mulf %747, %745 : vector<8x32xf32>
    %749 = arith.mulf %739, %727 : vector<8x32xf32>
    %750 = arith.addf %748, %749 : vector<8x32xf32>
    %751 = vector.extract_strided_slice %634 {offsets = [40, 0], sizes = [8, 96], strides = [1, 1]} : vector<64x96xf32> to vector<8x96xf32>
    %cst_175 = arith.constant dense<0.000000e+00> : vector<8x96xf32>
    %752 = tpu.matmul %750, %624, %cst_175 {dimension_numbers = #tpu.dot_dimension_numbers<[1], [0], [0], [1], [0, 0, 1, 1], [], []>} : vector<8x32xf32>, vector<32x96xf32>, vector<8x96xf32> -> vector<8x96xf32>
    %753 = vector.extract_strided_slice %751 {offsets = [0, 0], sizes = [8, 64], strides = [1, 1]} : vector<8x96xf32> to vector<8x64xf32>
    %754 = vector.extract_strided_slice %752 {offsets = [0, 0], sizes = [8, 64], strides = [1, 1]} : vector<8x96xf32> to vector<8x64xf32>
    %755 = arith.addf %753, %754 : vector<8x64xf32>
    %756 = arith.negf %755 : vector<8x64xf32>
    %757 = math.exp %756 : vector<8x64xf32>
    %cst_176 = arith.constant 1.000000e+00 : f32
    %758 = vector.broadcast %cst_176 : f32 to vector<8x64xf32>
    %759 = arith.addf %758, %757 : vector<8x64xf32>
    %760 = arith.divf %758, %759 : vector<8x64xf32>
    %761 = vector.extract_strided_slice %760 {offsets = [0, 0], sizes = [8, 32], strides = [1, 1]} : vector<8x64xf32> to vector<8x32xf32>
    %762 = vector.extract_strided_slice %760 {offsets = [0, 32], sizes = [8, 32], strides = [1, 1]} : vector<8x64xf32> to vector<8x32xf32>
    %763 = vector.extract_strided_slice %751 {offsets = [0, 64], sizes = [8, 32], strides = [1, 1]} : vector<8x96xf32> to vector<8x32xf32>
    %764 = vector.extract_strided_slice %752 {offsets = [0, 64], sizes = [8, 32], strides = [1, 1]} : vector<8x96xf32> to vector<8x32xf32>
    %765 = arith.addf %764, %630 : vector<8x32xf32>
    %766 = arith.mulf %761, %765 : vector<8x32xf32>
    %767 = arith.addf %763, %766 : vector<8x32xf32>
    %768 = math.tanh %767 : vector<8x32xf32>
    %cst_177 = arith.constant 1.000000e+00 : f32
    %769 = vector.broadcast %cst_177 : f32 to vector<8x32xf32>
    %770 = arith.subf %769, %762 : vector<8x32xf32>
    %771 = arith.mulf %770, %768 : vector<8x32xf32>
    %772 = arith.mulf %762, %750 : vector<8x32xf32>
    %773 = arith.addf %771, %772 : vector<8x32xf32>
    %774 = vector.extract_strided_slice %634 {offsets = [48, 0], sizes = [8, 96], strides = [1, 1]} : vector<64x96xf32> to vector<8x96xf32>
    %cst_178 = arith.constant dense<0.000000e+00> : vector<8x96xf32>
    %775 = tpu.matmul %773, %624, %cst_178 {dimension_numbers = #tpu.dot_dimension_numbers<[1], [0], [0], [1], [0, 0, 1, 1], [], []>} : vector<8x32xf32>, vector<32x96xf32>, vector<8x96xf32> -> vector<8x96xf32>
    %776 = vector.extract_strided_slice %774 {offsets = [0, 0], sizes = [8, 64], strides = [1, 1]} : vector<8x96xf32> to vector<8x64xf32>
    %777 = vector.extract_strided_slice %775 {offsets = [0, 0], sizes = [8, 64], strides = [1, 1]} : vector<8x96xf32> to vector<8x64xf32>
    %778 = arith.addf %776, %777 : vector<8x64xf32>
    %779 = arith.negf %778 : vector<8x64xf32>
    %780 = math.exp %779 : vector<8x64xf32>
    %cst_179 = arith.constant 1.000000e+00 : f32
    %781 = vector.broadcast %cst_179 : f32 to vector<8x64xf32>
    %782 = arith.addf %781, %780 : vector<8x64xf32>
    %783 = arith.divf %781, %782 : vector<8x64xf32>
    %784 = vector.extract_strided_slice %783 {offsets = [0, 0], sizes = [8, 32], strides = [1, 1]} : vector<8x64xf32> to vector<8x32xf32>
    %785 = vector.extract_strided_slice %783 {offsets = [0, 32], sizes = [8, 32], strides = [1, 1]} : vector<8x64xf32> to vector<8x32xf32>
    %786 = vector.extract_strided_slice %774 {offsets = [0, 64], sizes = [8, 32], strides = [1, 1]} : vector<8x96xf32> to vector<8x32xf32>
    %787 = vector.extract_strided_slice %775 {offsets = [0, 64], sizes = [8, 32], strides = [1, 1]} : vector<8x96xf32> to vector<8x32xf32>
    %788 = arith.addf %787, %630 : vector<8x32xf32>
    %789 = arith.mulf %784, %788 : vector<8x32xf32>
    %790 = arith.addf %786, %789 : vector<8x32xf32>
    %791 = math.tanh %790 : vector<8x32xf32>
    %cst_180 = arith.constant 1.000000e+00 : f32
    %792 = vector.broadcast %cst_180 : f32 to vector<8x32xf32>
    %793 = arith.subf %792, %785 : vector<8x32xf32>
    %794 = arith.mulf %793, %791 : vector<8x32xf32>
    %795 = arith.mulf %785, %773 : vector<8x32xf32>
    %796 = arith.addf %794, %795 : vector<8x32xf32>
    %797 = vector.extract_strided_slice %634 {offsets = [56, 0], sizes = [8, 96], strides = [1, 1]} : vector<64x96xf32> to vector<8x96xf32>
    %cst_181 = arith.constant dense<0.000000e+00> : vector<8x96xf32>
    %798 = tpu.matmul %796, %624, %cst_181 {dimension_numbers = #tpu.dot_dimension_numbers<[1], [0], [0], [1], [0, 0, 1, 1], [], []>} : vector<8x32xf32>, vector<32x96xf32>, vector<8x96xf32> -> vector<8x96xf32>
    %799 = vector.extract_strided_slice %797 {offsets = [0, 0], sizes = [8, 64], strides = [1, 1]} : vector<8x96xf32> to vector<8x64xf32>
    %800 = vector.extract_strided_slice %798 {offsets = [0, 0], sizes = [8, 64], strides = [1, 1]} : vector<8x96xf32> to vector<8x64xf32>
    %801 = arith.addf %799, %800 : vector<8x64xf32>
    %802 = arith.negf %801 : vector<8x64xf32>
    %803 = math.exp %802 : vector<8x64xf32>
    %cst_182 = arith.constant 1.000000e+00 : f32
    %804 = vector.broadcast %cst_182 : f32 to vector<8x64xf32>
    %805 = arith.addf %804, %803 : vector<8x64xf32>
    %806 = arith.divf %804, %805 : vector<8x64xf32>
    %807 = vector.extract_strided_slice %806 {offsets = [0, 0], sizes = [8, 32], strides = [1, 1]} : vector<8x64xf32> to vector<8x32xf32>
    %808 = vector.extract_strided_slice %806 {offsets = [0, 32], sizes = [8, 32], strides = [1, 1]} : vector<8x64xf32> to vector<8x32xf32>
    %809 = vector.extract_strided_slice %797 {offsets = [0, 64], sizes = [8, 32], strides = [1, 1]} : vector<8x96xf32> to vector<8x32xf32>
    %810 = vector.extract_strided_slice %798 {offsets = [0, 64], sizes = [8, 32], strides = [1, 1]} : vector<8x96xf32> to vector<8x32xf32>
    %811 = arith.addf %810, %630 : vector<8x32xf32>
    %812 = arith.mulf %807, %811 : vector<8x32xf32>
    %813 = arith.addf %809, %812 : vector<8x32xf32>
    %814 = math.tanh %813 : vector<8x32xf32>
    %cst_183 = arith.constant 1.000000e+00 : f32
    %815 = vector.broadcast %cst_183 : f32 to vector<8x32xf32>
    %816 = arith.subf %815, %808 : vector<8x32xf32>
    %817 = arith.mulf %816, %814 : vector<8x32xf32>
    %818 = arith.mulf %808, %796 : vector<8x32xf32>
    %819 = arith.addf %817, %818 : vector<8x32xf32>
    %c0_184 = arith.constant 0 : index
    %c0_185 = arith.constant 0 : index
    %c0_186 = arith.constant 0 : index
    %820 = vector.load %arg4[%c0_184, %c0_185, %c0_186] : memref<3x32x32xf32, #tpu.memory_space<vmem>>, vector<1x32x32xf32>
    %821 = vector.shape_cast %820 : vector<1x32x32xf32> to vector<32x32xf32>
    %cst_187 = arith.constant dense<0.000000e+00> : vector<8x32xf32>
    %822 = tpu.matmul %819, %821, %cst_187 {dimension_numbers = #tpu.dot_dimension_numbers<[1], [0], [0], [1], [0, 0, 1, 1], [], []>} : vector<8x32xf32>, vector<32x32xf32>, vector<8x32xf32> -> vector<8x32xf32>
    %c0_188 = arith.constant 0 : index
    %c0_189 = arith.constant 0 : index
    %c0_190 = arith.constant 0 : index
    %823 = vector.load %arg5[%c0_188, %c0_189, %c0_190] : memref<3x1x32xf32, #tpu.memory_space<vmem>>, vector<1x1x32xf32>
    %824 = vector.shape_cast %823 : vector<1x1x32xf32> to vector<1x32xf32>
    %825 = vector.broadcast %824 : vector<1x32xf32> to vector<8x32xf32>
    %826 = arith.addf %822, %825 : vector<8x32xf32>
    %cst_191 = arith.constant 0.000000e+00 : f32
    %827 = vector.broadcast %cst_191 : f32 to vector<8x32xf32>
    %828 = arith.maximumf %826, %827 : vector<8x32xf32>
    %c1_192 = arith.constant 1 : index
    %c0_193 = arith.constant 0 : index
    %c0_194 = arith.constant 0 : index
    %829 = vector.load %arg4[%c1_192, %c0_193, %c0_194] : memref<3x32x32xf32, #tpu.memory_space<vmem>>, vector<1x32x32xf32>
    %830 = vector.shape_cast %829 : vector<1x32x32xf32> to vector<32x32xf32>
    %cst_195 = arith.constant dense<0.000000e+00> : vector<8x32xf32>
    %831 = tpu.matmul %828, %830, %cst_195 {dimension_numbers = #tpu.dot_dimension_numbers<[1], [0], [0], [1], [0, 0, 1, 1], [], []>} : vector<8x32xf32>, vector<32x32xf32>, vector<8x32xf32> -> vector<8x32xf32>
    %c1_196 = arith.constant 1 : index
    %c0_197 = arith.constant 0 : index
    %c0_198 = arith.constant 0 : index
    %832 = vector.load %arg5[%c1_196, %c0_197, %c0_198] : memref<3x1x32xf32, #tpu.memory_space<vmem>>, vector<1x1x32xf32>
    %833 = vector.shape_cast %832 : vector<1x1x32xf32> to vector<1x32xf32>
    %834 = vector.broadcast %833 : vector<1x32xf32> to vector<8x32xf32>
    %835 = arith.addf %831, %834 : vector<8x32xf32>
    %cst_199 = arith.constant 0.000000e+00 : f32
    %836 = vector.broadcast %cst_199 : f32 to vector<8x32xf32>
    %837 = arith.cmpf oge, %835, %836 : vector<8x32xf32>
    %cst_200 = arith.constant 0.00999999977 : f32
    %838 = vector.broadcast %cst_200 : f32 to vector<8x32xf32>
    %839 = arith.mulf %838, %835 : vector<8x32xf32>
    %840 = arith.select %837, %835, %839 : vector<8x32xi1>, vector<8x32xf32>
    %c2_201 = arith.constant 2 : index
    %c0_202 = arith.constant 0 : index
    %c0_203 = arith.constant 0 : index
    %841 = vector.load %arg4[%c2_201, %c0_202, %c0_203] : memref<3x32x32xf32, #tpu.memory_space<vmem>>, vector<1x32x32xf32>
    %842 = vector.shape_cast %841 : vector<1x32x32xf32> to vector<32x32xf32>
    %cst_204 = arith.constant dense<0.000000e+00> : vector<8x32xf32>
    %843 = tpu.matmul %840, %842, %cst_204 {dimension_numbers = #tpu.dot_dimension_numbers<[1], [0], [0], [1], [0, 0, 1, 1], [], []>} : vector<8x32xf32>, vector<32x32xf32>, vector<8x32xf32> -> vector<8x32xf32>
    %c2_205 = arith.constant 2 : index
    %c0_206 = arith.constant 0 : index
    %c0_207 = arith.constant 0 : index
    %844 = vector.load %arg5[%c2_205, %c0_206, %c0_207] : memref<3x1x32xf32, #tpu.memory_space<vmem>>, vector<1x1x32xf32>
    %845 = vector.shape_cast %844 : vector<1x1x32xf32> to vector<1x32xf32>
    %846 = vector.broadcast %845 : vector<1x32xf32> to vector<8x32xf32>
    %847 = arith.addf %843, %846 : vector<8x32xf32>
    %c0_208 = arith.constant 0 : index
    %c0_209 = arith.constant 0 : index
    %848 = vector.load %arg6[%c0_208, %c0_209] : memref<8x32xf32, #tpu.memory_space<vmem>>, vector<8x32xf32>
    tpu.vector_store %arg6[%c0_208, %c0_209], %847 {strides = array<i32>} : memref<8x32xf32, #tpu.memory_space<vmem>>, vector<8x32xf32>,
    return
  }
}

</mosaic_0001>

<llo_original>
// kernel: gru_model_forward.1
$region0: #{gru_model_forward.1}
  #allocation0 [shape = 'u32[]', space=smem, size = 0x4, offset = 0x4, fixed_abs, tag = 'smem constant byte address 0x4 - core index']
  #allocation1 [shape = 'u32[72,128]{1,0:T(1,128)}', space=vmem, size = 0x9000, scoped, tag = 'internal scratch']
  #allocation2 [shape = 'f32[64,32]{1,0:T(8,128)}', space=vmem, size = 0x8000, scoped, tag = 'scratch operand']
  %s0 = inlined_call_operand.vmem [shape: f32[64,32], index: 0, kind: input, shape index: {}]
  %s1 = inlined_call_operand.vmem [shape: f32[4,32,96], index: 1, kind: input, shape index: {}]
  %s2 = inlined_call_operand.hbm [shape: f32[4,32,96], index: 2, kind: input, shape index: {}]
  %s3 = inlined_call_operand.vmem [shape: f32[4,2,96], index: 3, kind: input, shape index: {}]
  %s4 = inlined_call_operand.hbm [shape: f32[3,32,32], index: 4, kind: input, shape index: {}]
  %s5 = inlined_call_operand.vmem [shape: f32[3,1,32], index: 5, kind: input, shape index: {}]
  %s6 = inlined_call_operand.vmem [shape: f32[8,32], index: 6, kind: output, shape index: {}]
  %s7 = sld [smem:[#allocation0]]
  $region42: #{gru_model_forward.1} parent=0
    _
  %s9 = ssub.s32 1, %s7
  %s10 = scalar_select 0, %s9, %s7
  $region1: #{gru_model_forward.1} parent=0
    #allocation3 [shape = 'u8[65536]{0}', space=vmem, size = 0x10000, scoped, tag = 'input window, operand 2, single buffered']
    #allocation4 [shape = 's32[1]{0}', space=sflag, size = 0x4, scoped, tag = 'scoped memory for gru_model_forward.1']
    #allocation5 [shape = 'u8[49152]{0}', space=vmem, size = 0xc000, scoped, tag = 'input window, operand 4, single buffered']
    #allocation6 [shape = 's32[1]{0}', space=sflag, size = 0x4, scoped, tag = 'scoped memory for gru_model_forward.1']
    %11 = vsyncpa [#allocation4], 0
    %12 = vsyncpa [#allocation6], 0
    // Predicated region
    $region2: #{gru_model_forward.1} parent=1 // pred_check
      _
    $region3: #{gru_model_forward.1} parent=1 // pred_check_branch
      %14 = sbr.rel (0) target = $region5
    $region4: #{gru_model_forward.1} parent=1 // pred_region
      _
    $region5: #{gru_model_forward.1} parent=1 // pred_fallthru
      _
    // Predicated region
    $region6: #{gru_model_forward.1} parent=1 // pred_check
      _
    $region7: #{gru_model_forward.1} parent=1 // pred_check_branch
      %16 = sbr.rel (0) target = $region9
    $region8: #{gru_model_forward.1} parent=1 // pred_region
      _
    $region9: #{gru_model_forward.1} parent=1 // pred_fallthru
      _
    // Predicated region
    $region10: #{gru_model_forward.1} parent=1 // pred_check
      _
    $region11: #{gru_model_forward.1} parent=1 // pred_check_branch
      %18 = sbr.rel (0) target = $region13
    $region12: #{gru_model_forward.1} parent=1 // pred_region
      %20 = vsyncadd [#allocation4], 0
      %s21 = sshll.u32 %s2, 4
      %s22 = int_to_ptr.hbm [resolvable:$true] %s21
      %s23 = sshll.u32 [#allocation3], 4
      %s24 = int_to_ptr.vmem [resolvable:$true] %s23
      %29 = dma.hbm_to_vmem [thread:$0]  %s22, 2048, %s24, [#allocation4], 128, 128, 8
    $region13: #{gru_model_forward.1} parent=1 // pred_fallthru
      _
    // Predicated region
    $region14: #{gru_model_forward.1} parent=1 // pred_check
      _
    $region15: #{gru_model_forward.1} parent=1 // pred_check_branch
      %31 = sbr.rel (0) target = $region17
    $region16: #{gru_model_forward.1} parent=1 // pred_region
      _
    $region17: #{gru_model_forward.1} parent=1 // pred_fallthru
      _
    // Predicated region
    $region18: #{gru_model_forward.1} parent=1 // pred_check
      _
    $region19: #{gru_model_forward.1} parent=1 // pred_check_branch
      %33 = sbr.rel (0) target = $region21
    $region20: #{gru_model_forward.1} parent=1 // pred_region
      %35 = vsyncadd [#allocation6], 0
      %s36 = sshll.u32 %s4, 4
      %s37 = int_to_ptr.hbm [resolvable:$true] %s36
      %s38 = sshll.u32 [#allocation5], 4
      %s39 = int_to_ptr.vmem [resolvable:$true] %s38
      %44 = dma.hbm_to_vmem [thread:$0]  %s37, 1536, %s39, [#allocation6], 128, 128, 8
    $region21: #{gru_model_forward.1} parent=1 // pred_fallthru
      _
    // Predicated region
    $region22: #{gru_model_forward.1} parent=1 // pred_check
      _
    $region23: #{gru_model_forward.1} parent=1 // pred_check_branch
      %46 = sbr.rel (0) target = $region25
    $region24: #{gru_model_forward.1} parent=1 // pred_region
      _
    $region25: #{gru_model_forward.1} parent=1 // pred_fallthru
      _
    // Predicated region
    $region26: #{gru_model_forward.1} parent=1 // pred_check
      _
    $region27: #{gru_model_forward.1} parent=1 // pred_check_branch
      %48 = sbr.rel (0) target = $region29
    $region28: #{gru_model_forward.1} parent=1 // pred_region
      %50 = dma.done [#allocation4], 2048
    $region29: #{gru_model_forward.1} parent=1 // pred_fallthru
      _
    // Predicated region
    $region30: #{gru_model_forward.1} parent=1 // pred_check
      _
    $region31: #{gru_model_forward.1} parent=1 // pred_check_branch
      %52 = sbr.rel (0) target = $region33
    $region32: #{gru_model_forward.1} parent=1 // pred_region
      %54 = dma.done [#allocation6], 1536
    $region33: #{gru_model_forward.1} parent=1 // pred_fallthru
      _
    %v55 = vld [vmem:[%s1] sm:$0xff]
    %v56 = vld [vmem:[%s1 + $0x8] sm:$0xff]
    %v57 = vld [vmem:[%s1 + $0x10] sm:$0xff]
    %v58 = vld [vmem:[%s1 + $0x18] sm:$0xff]
    %v59 = vld [vmem:[#allocation3] sm:$0xff]
    %v60 = vld [vmem:[#allocation3 + $0x8] sm:$0xff]
    %v61 = vld [vmem:[#allocation3 + $0x10] sm:$0xff]
    %v62 = vld [vmem:[#allocation3 + $0x18] sm:$0xff]
    %v63 = vld [vmem:[%s3] sm:$0x3]
    %v64 = vperm.slane %v63, 1
    %v65 = vld [vmem:[%s0] sm:$0xff]
    %v66 = vld [vmem:[%s0 + $0x8] sm:$0xff]
    %v67 = vld [vmem:[%s0 + $0x10] sm:$0xff]
    %v68 = vld [vmem:[%s0 + $0x18] sm:$0xff]
    %v69 = vld [vmem:[%s0 + $0x20] sm:$0xff]
    %v70 = vld [vmem:[%s0 + $0x28] sm:$0xff]
    %v71 = vld [vmem:[%s0 + $0x30] sm:$0xff]
    %v72 = vld [vmem:[%s0 + $0x38] sm:$0xff]
    %v73 = vperm.slane %v63, 0
    %vm74 = vcmask 261120
    %v76 = vsel %vm74, %v65, 0
    %v79 = vsel %vm74, %v66, 0
    %v82 = vsel %vm74, %v67, 0
    %v85 = vsel %vm74, %v68, 0
    %v88 = vsel %vm74, %v69, 0
    %v91 = vsel %vm74, %v70, 0
    %v94 = vsel %vm74, %v71, 0
    %v97 = vsel %vm74, %v72, 0
    %99 = vmatpush.msra.mxu0 0.0
    %100 = vmatpush.msra.mxu0 0.0
    %101 = vmatpush.msra.mxu0 0.0
    %102 = vmatpush.msra.mxu0 0.0
    %103 = vmatpush.msra.mxu0 0.0
    %104 = vmatpush.msra.mxu0 0.0
    %105 = vmatpush.msra.mxu0 0.0
    %106 = vmatpush.msra.mxu0 0.0
    %107 = vmatpush.msra.mxu0 0.0
    %108 = vmatpush.msra.mxu0 0.0
    %109 = vmatpush.msra.mxu0 0.0
    %110 = vmatpush.msra.mxu0 0.0
    %111 = vmatpush.msra.mxu0 %v58
    %112 = vmatpush.msra.mxu0 %v57
    %113 = vmatpush.msra.mxu0 %v56
    %114 = vmatpush.msra.mxu0 %v55
    %115 = vmatmul.f32.gmra.mxu0 %v76
    %v116 = vpop.f32.mrf.mxu0
    %v117 = vadd.f32 %v73, %v116
    %118 = vmatmul.f32.gmra.mxu0 %v79
    %v119 = vpop.f32.mrf.mxu0
    %v120 = vadd.f32 %v73, %v119
    %121 = vmatmul.f32.gmra.mxu0 %v82
    %v122 = vpop.f32.mrf.mxu0
    %v123 = vadd.f32 %v73, %v122
    %124 = vmatmul.f32.gmra.mxu0 %v85
    %v125 = vpop.f32.mrf.mxu0
    %v126 = vadd.f32 %v73, %v125
    %127 = vmatmul.f32.gmra.mxu0 %v88
    %v128 = vpop.f32.mrf.mxu0
    %v129 = vadd.f32 %v73, %v128
    %130 = vmatmul.f32.gmra.mxu0 %v91
    %v131 = vpop.f32.mrf.mxu0
    %v132 = vadd.f32 %v73, %v131
    %133 = vmatmul.f32.gmra.mxu0 %v94
    %v134 = vpop.f32.mrf.mxu0
    %v135 = vadd.f32 %v73, %v134
    %136 = vmatmul.f32.gmra.mxu0 %v97
    %v137 = vpop.f32.mrf.mxu0
    %v138 = vadd.f32 %v73, %v137
    %139 = vdwg.mxu0
    %v141 = vsel %vm74, 0.0, 0
    %143 = vmatpush.msra.mxu0 0.0
    %144 = vmatpush.msra.mxu0 0.0
    %145 = vmatpush.msra.mxu0 0.0
    %146 = vmatpush.msra.mxu0 0.0
    %147 = vmatpush.msra.mxu0 0.0
    %148 = vmatpush.msra.mxu0 0.0
    %149 = vmatpush.msra.mxu0 0.0
    %150 = vmatpush.msra.mxu0 0.0
    %151 = vmatpush.msra.mxu0 0.0
    %152 = vmatpush.msra.mxu0 0.0
    %153 = vmatpush.msra.mxu0 0.0
    %154 = vmatpush.msra.mxu0 0.0
    %155 = vmatpush.msra.mxu0 %v62
    %156 = vmatpush.msra.mxu0 %v61
    %157 = vmatpush.msra.mxu0 %v60
    %158 = vmatpush.msra.mxu0 %v59
    %159 = vmatmul.f32.gmra.mxu0 %v141
    %v160 = vpop.f32.mrf.mxu0
    %v161 = vadd.f32 0.0, %v160
    %162 = vdwg.mxu0
    %v163 = vadd.f32 %v117, %v161
    %v164 = vxor.u32 %v163, 2147483648
    %v165 = vmul.f32 %v164, 1.442695
    %v166 = vpow.pop %v165
    %v167 = vadd.f32 %v166, 1.0
    %v168 = vrcp.pop %v167
    %v169 = vmul.f32 %v167, %v168
    %v170 = vsub.f32 1.0, %v169
    %v171 = vmul.f32 %v168, %v170
    %v172 = vadd.f32 %v168, %v171
    %vm173 = vweird.f32 %v167
    %vm174 = vweird.f32 %v168
    %vm175 = vmor %vm173, %vm174
    %v176 = vsel %vm175, %v168, %v172
    %v177 = vand.u32 2147483647, %v167
    %vm178 = vcmp.eq.f32.partialorder %v177, 8.507059e+37
    %v179 = vand.u32 %v167, 2147483648
    %v180 = vor.u32 1.1754944e-38, %v179
    %v181 = vsel %vm178, %v180, %v176
    %v182 = vmul.f32 1.0, %v181
    %v183 = vadd.f32 %v161, %v64
    %185 = vrot.lane.b32.xlu0 %v183, 64
    %v186 = vpop.permute.xlu0 %185
    %v188 = vmul.f32 %v182, %v186
    %190 = vrot.lane.b32.xlu0 %v188, 64
    %v191 = vpop.permute.xlu0 %190
    %v193 = vadd.f32 %v117, %v191
    %v194 = vtanh.pop %v193
    %v195 = vsub.f32 1.0, %v182
    %197 = vrot.lane.b32.xlu0 %v194, 96
    %v198 = vpop.permute.xlu0 %197
    %v200 = vmul.f32 %v195, %v198
    %v201 = vmul.f32 %v182, 0.0
    %v202 = vadd.f32 %v200, %v201
    %204 = vrot.lane.b32.xlu0 %v202, 96
    %v205 = vpop.permute.xlu0 %204
    %207 = vst.msk [vmem:[#allocation2] sm:$0xff] %vm74, %v205
    %v208 = vsel %vm74, %v205, 0
    %210 = vmatpush.msra.mxu0 0.0
    %211 = vmatpush.msra.mxu0 0.0
    %212 = vmatpush.msra.mxu0 0.0
    %213 = vmatpush.msra.mxu0 0.0
    %214 = vmatpush.msra.mxu0 0.0
    %215 = vmatpush.msra.mxu0 0.0
    %216 = vmatpush.msra.mxu0 0.0
    %217 = vmatpush.msra.mxu0 0.0
    %218 = vmatpush.msra.mxu0 0.0
    %219 = vmatpush.msra.mxu0 0.0
    %220 = vmatpush.msra.mxu0 0.0
    %221 = vmatpush.msra.mxu0 0.0
    %222 = vmatpush.msra.mxu0 %v62
    %223 = vmatpush.msra.mxu0 %v61
    %224 = vmatpush.msra.mxu0 %v60
    %225 = vmatpush.msra.mxu0 %v59
    %226 = vmatmul.f32.gmra.mxu0 %v208
    %v227 = vpop.f32.mrf.mxu0
    %v228 = vadd.f32 0.0, %v227
    %229 = vdwg.mxu0
    %v230 = vadd.f32 %v120, %v228
    %v231 = vxor.u32 %v230, 2147483648
    %v232 = vmul.f32 %v231, 1.442695
    %v233 = vpow.pop %v232
    %v234 = vadd.f32 %v233, 1.0
    %v235 = vrcp.pop %v234
    %v236 = vmul.f32 %v234, %v235
    %v237 = vsub.f32 1.0, %v236
    %v238 = vmul.f32 %v235, %v237
    %v239 = vadd.f32 %v235, %v238
    %vm240 = vweird.f32 %v234
    %vm241 = vweird.f32 %v235
    %vm242 = vmor %vm240, %vm241
    %v243 = vsel %vm242, %v235, %v239
    %v244 = vand.u32 2147483647, %v234
    %vm245 = vcmp.eq.f32.partialorder %v244, 8.507059e+37
    %v246 = vand.u32 %v234, 2147483648
    %v247 = vor.u32 1.1754944e-38, %v246
    %v248 = vsel %vm245, %v247, %v243
    %v249 = vmul.f32 1.0, %v248
    %v250 = vadd.f32 %v228, %v64
    %252 = vrot.lane.b32.xlu0 %v250, 64
    %v253 = vpop.permute.xlu0 %252
    %v255 = vmul.f32 %v249, %v253
    %257 = vrot.lane.b32.xlu0 %v255, 64
    %v258 = vpop.permute.xlu0 %257
    %v260 = vadd.f32 %v120, %v258
    %v261 = vtanh.pop %v260
    %v262 = vsub.f32 1.0, %v249
    %264 = vrot.lane.b32.xlu0 %v261, 96
    %v265 = vpop.permute.xlu0 %264
    %v267 = vmul.f32 %v262, %v265
    %v268 = vmul.f32 %v249, %v202
    %v269 = vadd.f32 %v267, %v268
    %271 = vrot.lane.b32.xlu0 %v269, 96
    %v272 = vpop.permute.xlu0 %271
    %274 = vst.msk [vmem:[#allocation2 + $0x8] sm:$0xff] %vm74, %v272
    %v275 = vsel %vm74, %v272, 0
    %277 = vmatpush.msra.mxu0 0.0
    %278 = vmatpush.msra.mxu0 0.0
    %279 = vmatpush.msra.mxu0 0.0
    %280 = vmatpush.msra.mxu0 0.0
    %281 = vmatpush.msra.mxu0 0.0
    %282 = vmatpush.msra.mxu0 0.0
    %283 = vmatpush.msra.mxu0 0.0
    %284 = vmatpush.msra.mxu0 0.0
    %285 = vmatpush.msra.mxu0 0.0
    %286 = vmatpush.msra.mxu0 0.0
    %287 = vmatpush.msra.mxu0 0.0
    %288 = vmatpush.msra.mxu0 0.0
    %289 = vmatpush.msra.mxu0 %v62
    %290 = vmatpush.msra.mxu0 %v61
    %291 = vmatpush.msra.mxu0 %v60
    %292 = vmatpush.msra.mxu0 %v59
    %293 = vmatmul.f32.gmra.mxu0 %v275
    %v294 = vpop.f32.mrf.mxu0
    %v295 = vadd.f32 0.0, %v294
    %296 = vdwg.mxu0
    %v297 = vadd.f32 %v123, %v295
    %v298 = vxor.u32 %v297, 2147483648
    %v299 = vmul.f32 %v298, 1.442695
    %v300 = vpow.pop %v299
    %v301 = vadd.f32 %v300, 1.0
    %v302 = vrcp.pop %v301
    %v303 = vmul.f32 %v301, %v302
    %v304 = vsub.f32 1.0, %v303
    %v305 = vmul.f32 %v302, %v304
    %v306 = vadd.f32 %v302, %v305
    %vm307 = vweird.f32 %v301
    %vm308 = vweird.f32 %v302
    %vm309 = vmor %vm307, %vm308
    %v310 = vsel %vm309, %v302, %v306
    %v311 = vand.u32 2147483647, %v301
    %vm312 = vcmp.eq.f32.partialorder %v311, 8.507059e+37
    %v313 = vand.u32 %v301, 2147483648
    %v314 = vor.u32 1.1754944e-38, %v313
    %v315 = vsel %vm312, %v314, %v310
    %v316 = vmul.f32 1.0, %v315
    %v317 = vadd.f32 %v295, %v64
    %319 = vrot.lane.b32.xlu0 %v317, 64
    %v320 = vpop.permute.xlu0 %319
    %v322 = vmul.f32 %v316, %v320
    %324 = vrot.lane.b32.xlu0 %v322, 64
    %v325 = vpop.permute.xlu0 %324
    %v327 = vadd.f32 %v123, %v325
    %v328 = vtanh.pop %v327
    %v329 = vsub.f32 1.0, %v316
    %331 = vrot.lane.b32.xlu0 %v328, 96
    %v332 = vpop.permute.xlu0 %331
    %v334 = vmul.f32 %v329, %v332
    %v335 = vmul.f32 %v316, %v269
    %v336 = vadd.f32 %v334, %v335
    %338 = vrot.lane.b32.xlu0 %v336, 96
    %v339 = vpop.permute.xlu0 %338
    %341 = vst.msk [vmem:[#allocation2 + $0x10] sm:$0xff] %vm74, %v339
    %v342 = vsel %vm74, %v339, 0
    %344 = vmatpush.msra.mxu0 0.0
    %345 = vmatpush.msra.mxu0 0.0
    %346 = vmatpush.msra.mxu0 0.0
    %347 = vmatpush.msra.mxu0 0.0
    %348 = vmatpush.msra.mxu0 0.0
    %349 = vmatpush.msra.mxu0 0.0
    %350 = vmatpush.msra.mxu0 0.0
    %351 = vmatpush.msra.mxu0 0.0
    %352 = vmatpush.msra.mxu0 0.0
    %353 = vmatpush.msra.mxu0 0.0
    %354 = vmatpush.msra.mxu0 0.0
    %355 = vmatpush.msra.mxu0 0.0
    %356 = vmatpush.msra.mxu0 %v62
    %357 = vmatpush.msra.mxu0 %v61
    %358 = vmatpush.msra.mxu0 %v60
    %359 = vmatpush.msra.mxu0 %v59
    %360 = vmatmul.f32.gmra.mxu0 %v342
    %v361 = vpop.f32.mrf.mxu0
    %v362 = vadd.f32 0.0, %v361
    %363 = vdwg.mxu0
    %v364 = vadd.f32 %v126, %v362
    %v365 = vxor.u32 %v364, 2147483648
    %v366 = vmul.f32 %v365, 1.442695
    %v367 = vpow.pop %v366
    %v368 = vadd.f32 %v367, 1.0
    %v369 = vrcp.pop %v368
    %v370 = vmul.f32 %v368, %v369
    %v371 = vsub.f32 1.0, %v370
    %v372 = vmul.f32 %v369, %v371
    %v373 = vadd.f32 %v369, %v372
    %vm374 = vweird.f32 %v368
    %vm375 = vweird.f32 %v369
    %vm376 = vmor %vm374, %vm375
    %v377 = vsel %vm376, %v369, %v373
    %v378 = vand.u32 2147483647, %v368
    %vm379 = vcmp.eq.f32.partialorder %v378, 8.507059e+37
    %v380 = vand.u32 %v368, 2147483648
    %v381 = vor.u32 1.1754944e-38, %v380
    %v382 = vsel %vm379, %v381, %v377
    %v383 = vmul.f32 1.0, %v382
    %v384 = vadd.f32 %v362, %v64
    %386 = vrot.lane.b32.xlu0 %v384, 64
    %v387 = vpop.permute.xlu0 %386
    %v389 = vmul.f32 %v383, %v387
    %391 = vrot.lane.b32.xlu0 %v389, 64
    %v392 = vpop.permute.xlu0 %391
    %v394 = vadd.f32 %v126, %v392
    %v395 = vtanh.pop %v394
    %v396 = vsub.f32 1.0, %v383
    %398 = vrot.lane.b32.xlu0 %v395, 96
    %v399 = vpop.permute.xlu0 %398
    %v401 = vmul.f32 %v396, %v399
    %v402 = vmul.f32 %v383, %v336
    %v403 = vadd.f32 %v401, %v402
    %405 = vrot.lane.b32.xlu0 %v403, 96
    %v406 = vpop.permute.xlu0 %405
    %408 = vst.msk [vmem:[#allocation2 + $0x18] sm:$0xff] %vm74, %v406
    %v409 = vsel %vm74, %v406, 0
    %411 = vmatpush.msra.mxu0 0.0
    %412 = vmatpush.msra.mxu0 0.0
    %413 = vmatpush.msra.mxu0 0.0
    %414 = vmatpush.msra.mxu0 0.0
    %415 = vmatpush.msra.mxu0 0.0
    %416 = vmatpush.msra.mxu0 0.0
    %417 = vmatpush.msra.mxu0 0.0
    %418 = vmatpush.msra.mxu0 0.0
    %419 = vmatpush.msra.mxu0 0.0
    %420 = vmatpush.msra.mxu0 0.0
    %421 = vmatpush.msra.mxu0 0.0
    %422 = vmatpush.msra.mxu0 0.0
    %423 = vmatpush.msra.mxu0 %v62
    %424 = vmatpush.msra.mxu0 %v61
    %425 = vmatpush.msra.mxu0 %v60
    %426 = vmatpush.msra.mxu0 %v59
    %427 = vmatmul.f32.gmra.mxu0 %v409
    %v428 = vpop.f32.mrf.mxu0
    %v429 = vadd.f32 0.0, %v428
    %430 = vdwg.mxu0
    %v431 = vadd.f32 %v129, %v429
    %v432 = vxor.u32 %v431, 2147483648
    %v433 = vmul.f32 %v432, 1.442695
    %v434 = vpow.pop %v433
    %v435 = vadd.f32 %v434, 1.0
    %v436 = vrcp.pop %v435
    %v437 = vmul.f32 %v435, %v436
    %v438 = vsub.f32 1.0, %v437
    %v439 = vmul.f32 %v436, %v438
    %v440 = vadd.f32 %v436, %v439
    %vm441 = vweird.f32 %v435
    %vm442 = vweird.f32 %v436
    %vm443 = vmor %vm441, %vm442
    %v444 = vsel %vm443, %v436, %v440
    %v445 = vand.u32 2147483647, %v435
    %vm446 = vcmp.eq.f32.partialorder %v445, 8.507059e+37
    %v447 = vand.u32 %v435, 2147483648
    %v448 = vor.u32 1.1754944e-38, %v447
    %v449 = vsel %vm446, %v448, %v444
    %v450 = vmul.f32 1.0, %v449
    %v451 = vadd.f32 %v429, %v64
    %453 = vrot.lane.b32.xlu0 %v451, 64
    %v454 = vpop.permute.xlu0 %453
    %v456 = vmul.f32 %v450, %v454
    %458 = vrot.lane.b32.xlu0 %v456, 64
    %v459 = vpop.permute.xlu0 %458
    %v461 = vadd.f32 %v129, %v459
    %v462 = vtanh.pop %v461
    %v463 = vsub.f32 1.0, %v450
    %465 = vrot.lane.b32.xlu0 %v462, 96
    %v466 = vpop.permute.xlu0 %465
    %v468 = vmul.f32 %v463, %v466
    %v469 = vmul.f32 %v450, %v403
    %v470 = vadd.f32 %v468, %v469
    %472 = vrot.lane.b32.xlu0 %v470, 96
    %v473 = vpop.permute.xlu0 %472
    %475 = vst.msk [vmem:[#allocation2 + $0x20] sm:$0xff] %vm74, %v473
    %v476 = vsel %vm74, %v473, 0
    %478 = vmatpush.msra.mxu0 0.0
    %479 = vmatpush.msra.mxu0 0.0
    %480 = vmatpush.msra.mxu0 0.0
    %481 = vmatpush.msra.mxu0 0.0
    %482 = vmatpush.msra.mxu0 0.0
    %483 = vmatpush.msra.mxu0 0.0
    %484 = vmatpush.msra.mxu0 0.0
    %485 = vmatpush.msra.mxu0 0.0
    %486 = vmatpush.msra.mxu0 0.0
    %487 = vmatpush.msra.mxu0 0.0
    %488 = vmatpush.msra.mxu0 0.0
    %489 = vmatpush.msra.mxu0 0.0
    %490 = vmatpush.msra.mxu0 %v62
    %491 = vmatpush.msra.mxu0 %v61
    %492 = vmatpush.msra.mxu0 %v60
    %493 = vmatpush.msra.mxu0 %v59
    %494 = vmatmul.f32.gmra.mxu0 %v476
    %v495 = vpop.f32.mrf.mxu0
    %v496 = vadd.f32 0.0, %v495
    %497 = vdwg.mxu0
    %v498 = vadd.f32 %v132, %v496
    %v499 = vxor.u32 %v498, 2147483648
    %v500 = vmul.f32 %v499, 1.442695
    %v501 = vpow.pop %v500
    %v502 = vadd.f32 %v501, 1.0
    %v503 = vrcp.pop %v502
    %v504 = vmul.f32 %v502, %v503
    %v505 = vsub.f32 1.0, %v504
    %v506 = vmul.f32 %v503, %v505
    %v507 = vadd.f32 %v503, %v506
    %vm508 = vweird.f32 %v502
    %vm509 = vweird.f32 %v503
    %vm510 = vmor %vm508, %vm509
    %v511 = vsel %vm510, %v503, %v507
    %v512 = vand.u32 2147483647, %v502
    %vm513 = vcmp.eq.f32.partialorder %v512, 8.507059e+37
    %v514 = vand.u32 %v502, 2147483648
    %v515 = vor.u32 1.1754944e-38, %v514
    %v516 = vsel %vm513, %v515, %v511
    %v517 = vmul.f32 1.0, %v516
    %v518 = vadd.f32 %v496, %v64
    %520 = vrot.lane.b32.xlu0 %v518, 64
    %v521 = vpop.permute.xlu0 %520
    %v523 = vmul.f32 %v517, %v521
    %525 = vrot.lane.b32.xlu0 %v523, 64
    %v526 = vpop.permute.xlu0 %525
    %v528 = vadd.f32 %v132, %v526
    %v529 = vtanh.pop %v528
    %v530 = vsub.f32 1.0, %v517
    %532 = vrot.lane.b32.xlu0 %v529, 96
    %v533 = vpop.permute.xlu0 %532
    %v535 = vmul.f32 %v530, %v533
    %v536 = vmul.f32 %v517, %v470
    %v537 = vadd.f32 %v535, %v536
    %539 = vrot.lane.b32.xlu0 %v537, 96
    %v540 = vpop.permute.xlu0 %539
    %542 = vst.msk [vmem:[#allocation2 + $0x28] sm:$0xff] %vm74, %v540
    %v543 = vsel %vm74, %v540, 0
    %545 = vmatpush.msra.mxu0 0.0
    %546 = vmatpush.msra.mxu0 0.0
    %547 = vmatpush.msra.mxu0 0.0
    %548 = vmatpush.msra.mxu0 0.0
    %549 = vmatpush.msra.mxu0 0.0
    %550 = vmatpush.msra.mxu0 0.0
    %551 = vmatpush.msra.mxu0 0.0
    %552 = vmatpush.msra.mxu0 0.0
    %553 = vmatpush.msra.mxu0 0.0
    %554 = vmatpush.msra.mxu0 0.0
    %555 = vmatpush.msra.mxu0 0.0
    %556 = vmatpush.msra.mxu0 0.0
    %557 = vmatpush.msra.mxu0 %v62
    %558 = vmatpush.msra.mxu0 %v61
    %559 = vmatpush.msra.mxu0 %v60
    %560 = vmatpush.msra.mxu0 %v59
    %561 = vmatmul.f32.gmra.mxu0 %v543
    %v562 = vpop.f32.mrf.mxu0
    %v563 = vadd.f32 0.0, %v562
    %564 = vdwg.mxu0
    %v565 = vadd.f32 %v135, %v563
    %v566 = vxor.u32 %v565, 2147483648
    %v567 = vmul.f32 %v566, 1.442695
    %v568 = vpow.pop %v567
    %v569 = vadd.f32 %v568, 1.0
    %v570 = vrcp.pop %v569
    %v571 = vmul.f32 %v569, %v570
    %v572 = vsub.f32 1.0, %v571
    %v573 = vmul.f32 %v570, %v572
    %v574 = vadd.f32 %v570, %v573
    %vm575 = vweird.f32 %v569
    %vm576 = vweird.f32 %v570
    %vm577 = vmor %vm575, %vm576
    %v578 = vsel %vm577, %v570, %v574
    %v579 = vand.u32 2147483647, %v569
    %vm580 = vcmp.eq.f32.partialorder %v579, 8.507059e+37
    %v581 = vand.u32 %v569, 2147483648
    %v582 = vor.u32 1.1754944e-38, %v581
    %v583 = vsel %vm580, %v582, %v578
    %v584 = vmul.f32 1.0, %v583
    %v585 = vadd.f32 %v563, %v64
    %587 = vrot.lane.b32.xlu0 %v585, 64
    %v588 = vpop.permute.xlu0 %587
    %v590 = vmul.f32 %v584, %v588
    %592 = vrot.lane.b32.xlu0 %v590, 64
    %v593 = vpop.permute.xlu0 %592
    %v595 = vadd.f32 %v135, %v593
    %v596 = vtanh.pop %v595
    %v597 = vsub.f32 1.0, %v584
    %599 = vrot.lane.b32.xlu0 %v596, 96
    %v600 = vpop.permute.xlu0 %599
    %v602 = vmul.f32 %v597, %v600
    %v603 = vmul.f32 %v584, %v537
    %v604 = vadd.f32 %v602, %v603
    %606 = vrot.lane.b32.xlu0 %v604, 96
    %v607 = vpop.permute.xlu0 %606
    %609 = vst.msk [vmem:[#allocation2 + $0x30] sm:$0xff] %vm74, %v607
    %v610 = vsel %vm74, %v607, 0
    %612 = vmatpush.msra.mxu0 0.0
    %613 = vmatpush.msra.mxu0 0.0
    %614 = vmatpush.msra.mxu0 0.0
    %615 = vmatpush.msra.mxu0 0.0
    %616 = vmatpush.msra.mxu0 0.0
    %617 = vmatpush.msra.mxu0 0.0
    %618 = vmatpush.msra.mxu0 0.0
    %619 = vmatpush.msra.mxu0 0.0
    %620 = vmatpush.msra.mxu0 0.0
    %621 = vmatpush.msra.mxu0 0.0
    %622 = vmatpush.msra.mxu0 0.0
    %623 = vmatpush.msra.mxu0 0.0
    %624 = vmatpush.msra.mxu0 %v62
    %625 = vmatpush.msra.mxu0 %v61
    %626 = vmatpush.msra.mxu0 %v60
    %627 = vmatpush.msra.mxu0 %v59
    %628 = vmatmul.f32.gmra.mxu0 %v610
    %v629 = vpop.f32.mrf.mxu0
    %v630 = vadd.f32 0.0, %v629
    %631 = vdwg.mxu0
    %v632 = vadd.f32 %v138, %v630
    %v633 = vxor.u32 %v632, 2147483648
    %v634 = vmul.f32 %v633, 1.442695
    %v635 = vpow.pop %v634
    %v636 = vadd.f32 %v635, 1.0
    %v637 = vrcp.pop %v636
    %v638 = vmul.f32 %v636, %v637
    %v639 = vsub.f32 1.0, %v638
    %v640 = vmul.f32 %v637, %v639
    %v641 = vadd.f32 %v637, %v640
    %vm642 = vweird.f32 %v636
    %vm643 = vweird.f32 %v637
    %vm644 = vmor %vm642, %vm643
    %v645 = vsel %vm644, %v637, %v641
    %v646 = vand.u32 2147483647, %v636
    %vm647 = vcmp.eq.f32.partialorder %v646, 8.507059e+37
    %v648 = vand.u32 %v636, 2147483648
    %v649 = vor.u32 1.1754944e-38, %v648
    %v650 = vsel %vm647, %v649, %v645
    %v651 = vmul.f32 1.0, %v650
    %v652 = vadd.f32 %v630, %v64
    %654 = vrot.lane.b32.xlu0 %v652, 64
    %v655 = vpop.permute.xlu0 %654
    %v657 = vmul.f32 %v651, %v655
    %659 = vrot.lane.b32.xlu0 %v657, 64
    %v660 = vpop.permute.xlu0 %659
    %v662 = vadd.f32 %v138, %v660
    %v663 = vtanh.pop %v662
    %v664 = vsub.f32 1.0, %v651
    %666 = vrot.lane.b32.xlu0 %v663, 96
    %v667 = vpop.permute.xlu0 %666
    %v669 = vmul.f32 %v664, %v667
    %v670 = vmul.f32 %v651, %v604
    %v671 = vadd.f32 %v669, %v670
    %673 = vrot.lane.b32.xlu0 %v671, 96
    %v674 = vpop.permute.xlu0 %673
    %676 = vst.msk [vmem:[#allocation2 + $0x38] sm:$0xff] %vm74, %v674
    %s677 = scalar_lea.vmem %s1, 32
    %v678 = vld [vmem:[%s677] sm:$0xff]
    %v679 = vld [vmem:[%s677 + $0x8] sm:$0xff]
    %v680 = vld [vmem:[%s677 + $0x10] sm:$0xff]
    %v681 = vld [vmem:[%s677 + $0x18] sm:$0xff]
    %s682 = scalar_lea.vmem [#allocation3], 32
    %v683 = vld [vmem:[%s682] sm:$0xff]
    %v684 = vld [vmem:[%s682 + $0x8] sm:$0xff]
    %v685 = vld [vmem:[%s682 + $0x10] sm:$0xff]
    %v686 = vld [vmem:[%s682 + $0x18] sm:$0xff]
    %s687 = scalar_lea.vmem %s3, 2
    %v688 = vld [vmem:[%s687] sm:$0x3]
    %v689 = vperm.slane %v688, 1
    %v690 = vld [vmem:[#allocation2] sm:$0xff]
    %v691 = vld [vmem:[#allocation2 + $0x8] sm:$0xff]
    %v692 = vld [vmem:[#allocation2 + $0x10] sm:$0xff]
    %v693 = vld [vmem:[#allocation2 + $0x18] sm:$0xff]
    %v694 = vld [vmem:[#allocation2 + $0x20] sm:$0xff]
    %v695 = vld [vmem:[#allocation2 + $0x28] sm:$0xff]
    %v696 = vld [vmem:[#allocation2 + $0x30] sm:$0xff]
    %v697 = vld [vmem:[#allocation2 + $0x38] sm:$0xff]
    %v698 = vperm.slane %v688, 0
    %v700 = vsel %vm74, %v690, 0
    %v703 = vsel %vm74, %v691, 0
    %v706 = vsel %vm74, %v692, 0
    %v709 = vsel %vm74, %v693, 0
    %v712 = vsel %vm74, %v694, 0
    %v715 = vsel %vm74, %v695, 0
    %v718 = vsel %vm74, %v696, 0
    %v721 = vsel %vm74, %v697, 0
    %723 = vmatpush.msra.mxu0 0.0
    %724 = vmatpush.msra.mxu0 0.0
    %725 = vmatpush.msra.mxu0 0.0
    %726 = vmatpush.msra.mxu0 0.0
    %727 = vmatpush.msra.mxu0 0.0
    %728 = vmatpush.msra.mxu0 0.0
    %729 = vmatpush.msra.mxu0 0.0
    %730 = vmatpush.msra.mxu0 0.0
    %731 = vmatpush.msra.mxu0 0.0
    %732 = vmatpush.msra.mxu0 0.0
    %733 = vmatpush.msra.mxu0 0.0
    %734 = vmatpush.msra.mxu0 0.0
    %735 = vmatpush.msra.mxu0 %v681
    %736 = vmatpush.msra.mxu0 %v680
    %737 = vmatpush.msra.mxu0 %v679
    %738 = vmatpush.msra.mxu0 %v678
    %739 = vmatmul.f32.gmra.mxu0 %v700
    %v740 = vpop.f32.mrf.mxu0
    %v741 = vadd.f32 %v698, %v740
    %742 = vmatmul.f32.gmra.mxu0 %v703
    %v743 = vpop.f32.mrf.mxu0
    %v744 = vadd.f32 %v698, %v743
    %745 = vmatmul.f32.gmra.mxu0 %v706
    %v746 = vpop.f32.mrf.mxu0
    %v747 = vadd.f32 %v698, %v746
    %748 = vmatmul.f32.gmra.mxu0 %v709
    %v749 = vpop.f32.mrf.mxu0
    %v750 = vadd.f32 %v698, %v749
    %751 = vmatmul.f32.gmra.mxu0 %v712
    %v752 = vpop.f32.mrf.mxu0
    %v753 = vadd.f32 %v698, %v752
    %754 = vmatmul.f32.gmra.mxu0 %v715
    %v755 = vpop.f32.mrf.mxu0
    %v756 = vadd.f32 %v698, %v755
    %757 = vmatmul.f32.gmra.mxu0 %v718
    %v758 = vpop.f32.mrf.mxu0
    %v759 = vadd.f32 %v698, %v758
    %760 = vmatmul.f32.gmra.mxu0 %v721
    %v761 = vpop.f32.mrf.mxu0
    %v762 = vadd.f32 %v698, %v761
    %763 = vdwg.mxu0
    %764 = vmatpush.msra.mxu0 0.0
    %765 = vmatpush.msra.mxu0 0.0
    %766 = vmatpush.msra.mxu0 0.0
    %767 = vmatpush.msra.mxu0 0.0
    %768 = vmatpush.msra.mxu0 0.0
    %769 = vmatpush.msra.mxu0 0.0
    %770 = vmatpush.msra.mxu0 0.0
    %771 = vmatpush.msra.mxu0 0.0
    %772 = vmatpush.msra.mxu0 0.0
    %773 = vmatpush.msra.mxu0 0.0
    %774 = vmatpush.msra.mxu0 0.0
    %775 = vmatpush.msra.mxu0 0.0
    %776 = vmatpush.msra.mxu0 %v686
    %777 = vmatpush.msra.mxu0 %v685
    %778 = vmatpush.msra.mxu0 %v684
    %779 = vmatpush.msra.mxu0 %v683
    %780 = vmatmul.f32.gmra.mxu0 %v141
    %v781 = vpop.f32.mrf.mxu0
    %v782 = vadd.f32 0.0, %v781
    %783 = vdwg.mxu0
    %v784 = vadd.f32 %v741, %v782
    %v785 = vxor.u32 %v784, 2147483648
    %v786 = vmul.f32 %v785, 1.442695
    %v787 = vpow.pop %v786
    %v788 = vadd.f32 %v787, 1.0
    %v789 = vrcp.pop %v788
    %v790 = vmul.f32 %v788, %v789
    %v791 = vsub.f32 1.0, %v790
    %v792 = vmul.f32 %v789, %v791
    %v793 = vadd.f32 %v789, %v792
    %vm794 = vweird.f32 %v788
    %vm795 = vweird.f32 %v789
    %vm796 = vmor %vm794, %vm795
    %v797 = vsel %vm796, %v789, %v793
    %v798 = vand.u32 2147483647, %v788
    %vm799 = vcmp.eq.f32.partialorder %v798, 8.507059e+37
    %v800 = vand.u32 %v788, 2147483648
    %v801 = vor.u32 1.1754944e-38, %v800
    %v802 = vsel %vm799, %v801, %v797
    %v803 = vmul.f32 1.0, %v802
    %v804 = vadd.f32 %v782, %v689
    %806 = vrot.lane.b32.xlu0 %v804, 64
    %v807 = vpop.permute.xlu0 %806
    %v809 = vmul.f32 %v803, %v807
    %811 = vrot.lane.b32.xlu0 %v809, 64
    %v812 = vpop.permute.xlu0 %811
    %v814 = vadd.f32 %v741, %v812
    %v815 = vtanh.pop %v814
    %v816 = vsub.f32 1.0, %v803
    %818 = vrot.lane.b32.xlu0 %v815, 96
    %v819 = vpop.permute.xlu0 %818
    %v821 = vmul.f32 %v816, %v819
    %v822 = vmul.f32 %v803, 0.0
    %v823 = vadd.f32 %v821, %v822
    %825 = vrot.lane.b32.xlu0 %v823, 96
    %v826 = vpop.permute.xlu0 %825
    %828 = vst.msk [vmem:[#allocation2] sm:$0xff] %vm74, %v826
    %v829 = vsel %vm74, %v826, 0
    %831 = vmatpush.msra.mxu0 0.0
    %832 = vmatpush.msra.mxu0 0.0
    %833 = vmatpush.msra.mxu0 0.0
    %834 = vmatpush.msra.mxu0 0.0
    %835 = vmatpush.msra.mxu0 0.0
    %836 = vmatpush.msra.mxu0 0.0
    %837 = vmatpush.msra.mxu0 0.0
    %838 = vmatpush.msra.mxu0 0.0
    %839 = vmatpush.msra.mxu0 0.0
    %840 = vmatpush.msra.mxu0 0.0
    %841 = vmatpush.msra.mxu0 0.0
    %842 = vmatpush.msra.mxu0 0.0
    %843 = vmatpush.msra.mxu0 %v686
    %844 = vmatpush.msra.mxu0 %v685
    %845 = vmatpush.msra.mxu0 %v684
    %846 = vmatpush.msra.mxu0 %v683
    %847 = vmatmul.f32.gmra.mxu0 %v829
    %v848 = vpop.f32.mrf.mxu0
    %v849 = vadd.f32 0.0, %v848
    %850 = vdwg.mxu0
    %v851 = vadd.f32 %v744, %v849
    %v852 = vxor.u32 %v851, 2147483648
    %v853 = vmul.f32 %v852, 1.442695
    %v854 = vpow.pop %v853
    %v855 = vadd.f32 %v854, 1.0
    %v856 = vrcp.pop %v855
    %v857 = vmul.f32 %v855, %v856
    %v858 = vsub.f32 1.0, %v857
    %v859 = vmul.f32 %v856, %v858
    %v860 = vadd.f32 %v856, %v859
    %vm861 = vweird.f32 %v855
    %vm862 = vweird.f32 %v856
    %vm863 = vmor %vm861, %vm862
    %v864 = vsel %vm863, %v856, %v860
    %v865 = vand.u32 2147483647, %v855
    %vm866 = vcmp.eq.f32.partialorder %v865, 8.507059e+37
    %v867 = vand.u32 %v855, 2147483648
    %v868 = vor.u32 1.1754944e-38, %v867
    %v869 = vsel %vm866, %v868, %v864
    %v870 = vmul.f32 1.0, %v869
    %v871 = vadd.f32 %v849, %v689
    %873 = vrot.lane.b32.xlu0 %v871, 64
    %v874 = vpop.permute.xlu0 %873
    %v876 = vmul.f32 %v870, %v874
    %878 = vrot.lane.b32.xlu0 %v876, 64
    %v879 = vpop.permute.xlu0 %878
    %v881 = vadd.f32 %v744, %v879
    %v882 = vtanh.pop %v881
    %v883 = vsub.f32 1.0, %v870
    %885 = vrot.lane.b32.xlu0 %v882, 96
    %v886 = vpop.permute.xlu0 %885
    %v888 = vmul.f32 %v883, %v886
    %v889 = vmul.f32 %v870, %v823
    %v890 = vadd.f32 %v888, %v889
    %892 = vrot.lane.b32.xlu0 %v890, 96
    %v893 = vpop.permute.xlu0 %892
    %895 = vst.msk [vmem:[#allocation2 + $0x8] sm:$0xff] %vm74, %v893
    %v896 = vsel %vm74, %v893, 0
    %898 = vmatpush.msra.mxu0 0.0
    %899 = vmatpush.msra.mxu0 0.0
    %900 = vmatpush.msra.mxu0 0.0
    %901 = vmatpush.msra.mxu0 0.0
    %902 = vmatpush.msra.mxu0 0.0
    %903 = vmatpush.msra.mxu0 0.0
    %904 = vmatpush.msra.mxu0 0.0
    %905 = vmatpush.msra.mxu0 0.0
    %906 = vmatpush.msra.mxu0 0.0
    %907 = vmatpush.msra.mxu0 0.0
    %908 = vmatpush.msra.mxu0 0.0
    %909 = vmatpush.msra.mxu0 0.0
    %910 = vmatpush.msra.mxu0 %v686
    %911 = vmatpush.msra.mxu0 %v685
    %912 = vmatpush.msra.mxu0 %v684
    %913 = vmatpush.msra.mxu0 %v683
    %914 = vmatmul.f32.gmra.mxu0 %v896
    %v915 = vpop.f32.mrf.mxu0
    %v916 = vadd.f32 0.0, %v915
    %917 = vdwg.mxu0
    %v918 = vadd.f32 %v747, %v916
    %v919 = vxor.u32 %v918, 2147483648
    %v920 = vmul.f32 %v919, 1.442695
    %v921 = vpow.pop %v920
    %v922 = vadd.f32 %v921, 1.0
    %v923 = vrcp.pop %v922
    %v924 = vmul.f32 %v922, %v923
    %v925 = vsub.f32 1.0, %v924
    %v926 = vmul.f32 %v923, %v925
    %v927 = vadd.f32 %v923, %v926
    %vm928 = vweird.f32 %v922
    %vm929 = vweird.f32 %v923
    %vm930 = vmor %vm928, %vm929
    %v931 = vsel %vm930, %v923, %v927
    %v932 = vand.u32 2147483647, %v922
    %vm933 = vcmp.eq.f32.partialorder %v932, 8.507059e+37
    %v934 = vand.u32 %v922, 2147483648
    %v935 = vor.u32 1.1754944e-38, %v934
    %v936 = vsel %vm933, %v935, %v931
    %v937 = vmul.f32 1.0, %v936
    %v938 = vadd.f32 %v916, %v689
    %940 = vrot.lane.b32.xlu0 %v938, 64
    %v941 = vpop.permute.xlu0 %940
    %v943 = vmul.f32 %v937, %v941
    %945 = vrot.lane.b32.xlu0 %v943, 64
    %v946 = vpop.permute.xlu0 %945
    %v948 = vadd.f32 %v747, %v946
    %v949 = vtanh.pop %v948
    %v950 = vsub.f32 1.0, %v937
    %952 = vrot.lane.b32.xlu0 %v949, 96
    %v953 = vpop.permute.xlu0 %952
    %v955 = vmul.f32 %v950, %v953
    %v956 = vmul.f32 %v937, %v890
    %v957 = vadd.f32 %v955, %v956
    %959 = vrot.lane.b32.xlu0 %v957, 96
    %v960 = vpop.permute.xlu0 %959
    %962 = vst.msk [vmem:[#allocation2 + $0x10] sm:$0xff] %vm74, %v960
    %v963 = vsel %vm74, %v960, 0
    %965 = vmatpush.msra.mxu0 0.0
    %966 = vmatpush.msra.mxu0 0.0
    %967 = vmatpush.msra.mxu0 0.0
    %968 = vmatpush.msra.mxu0 0.0
    %969 = vmatpush.msra.mxu0 0.0
    %970 = vmatpush.msra.mxu0 0.0
    %971 = vmatpush.msra.mxu0 0.0
    %972 = vmatpush.msra.mxu0 0.0
    %973 = vmatpush.msra.mxu0 0.0
    %974 = vmatpush.msra.mxu0 0.0
    %975 = vmatpush.msra.mxu0 0.0
    %976 = vmatpush.msra.mxu0 0.0
    %977 = vmatpush.msra.mxu0 %v686
    %978 = vmatpush.msra.mxu0 %v685
    %979 = vmatpush.msra.mxu0 %v684
    %980 = vmatpush.msra.mxu0 %v683
    %981 = vmatmul.f32.gmra.mxu0 %v963
    %v982 = vpop.f32.mrf.mxu0
    %v983 = vadd.f32 0.0, %v982
    %984 = vdwg.mxu0
    %v985 = vadd.f32 %v750, %v983
    %v986 = vxor.u32 %v985, 2147483648
    %v987 = vmul.f32 %v986, 1.442695
    %v988 = vpow.pop %v987
    %v989 = vadd.f32 %v988, 1.0
    %v990 = vrcp.pop %v989
    %v991 = vmul.f32 %v989, %v990
    %v992 = vsub.f32 1.0, %v991
    %v993 = vmul.f32 %v990, %v992
    %v994 = vadd.f32 %v990, %v993
    %vm995 = vweird.f32 %v989
    %vm996 = vweird.f32 %v990
    %vm997 = vmor %vm995, %vm996
    %v998 = vsel %vm997, %v990, %v994
    %v999 = vand.u32 2147483647, %v989
    %vm1000 = vcmp.eq.f32.partialorder %v999, 8.507059e+37
    %v1001 = vand.u32 %v989, 2147483648
    %v1002 = vor.u32 1.1754944e-38, %v1001
    %v1003 = vsel %vm1000, %v1002, %v998
    %v1004 = vmul.f32 1.0, %v1003
    %v1005 = vadd.f32 %v983, %v689
    %1007 = vrot.lane.b32.xlu0 %v1005, 64
    %v1008 = vpop.permute.xlu0 %1007
    %v1010 = vmul.f32 %v1004, %v1008
    %1012 = vrot.lane.b32.xlu0 %v1010, 64
    %v1013 = vpop.permute.xlu0 %1012
    %v1015 = vadd.f32 %v750, %v1013
    %v1016 = vtanh.pop %v1015
    %v1017 = vsub.f32 1.0, %v1004
    %1019 = vrot.lane.b32.xlu0 %v1016, 96
    %v1020 = vpop.permute.xlu0 %1019
    %v1022 = vmul.f32 %v1017, %v1020
    %v1023 = vmul.f32 %v1004, %v957
    %v1024 = vadd.f32 %v1022, %v1023
    %1026 = vrot.lane.b32.xlu0 %v1024, 96
    %v1027 = vpop.permute.xlu0 %1026
    %1029 = vst.msk [vmem:[#allocation2 + $0x18] sm:$0xff] %vm74, %v1027
    %v1030 = vsel %vm74, %v1027, 0
    %1032 = vmatpush.msra.mxu0 0.0
    %1033 = vmatpush.msra.mxu0 0.0
    %1034 = vmatpush.msra.mxu0 0.0
    %1035 = vmatpush.msra.mxu0 0.0
    %1036 = vmatpush.msra.mxu0 0.0
    %1037 = vmatpush.msra.mxu0 0.0
    %1038 = vmatpush.msra.mxu0 0.0
    %1039 = vmatpush.msra.mxu0 0.0
    %1040 = vmatpush.msra.mxu0 0.0
    %1041 = vmatpush.msra.mxu0 0.0
    %1042 = vmatpush.msra.mxu0 0.0
    %1043 = vmatpush.msra.mxu0 0.0
    %1044 = vmatpush.msra.mxu0 %v686
    %1045 = vmatpush.msra.mxu0 %v685
    %1046 = vmatpush.msra.mxu0 %v684
    %1047 = vmatpush.msra.mxu0 %v683
    %1048 = vmatmul.f32.gmra.mxu0 %v1030
    %v1049 = vpop.f32.mrf.mxu0
    %v1050 = vadd.f32 0.0, %v1049
    %1051 = vdwg.mxu0
    %v1052 = vadd.f32 %v753, %v1050
    %v1053 = vxor.u32 %v1052, 2147483648
    %v1054 = vmul.f32 %v1053, 1.442695
    %v1055 = vpow.pop %v1054
    %v1056 = vadd.f32 %v1055, 1.0
    %v1057 = vrcp.pop %v1056
    %v1058 = vmul.f32 %v1056, %v1057
    %v1059 = vsub.f32 1.0, %v1058
    %v1060 = vmul.f32 %v1057, %v1059
    %v1061 = vadd.f32 %v1057, %v1060
    %vm1062 = vweird.f32 %v1056
    %vm1063 = vweird.f32 %v1057
    %vm1064 = vmor %vm1062, %vm1063
    %v1065 = vsel %vm1064, %v1057, %v1061
    %v1066 = vand.u32 2147483647, %v1056
    %vm1067 = vcmp.eq.f32.partialorder %v1066, 8.507059e+37
    %v1068 = vand.u32 %v1056, 2147483648
    %v1069 = vor.u32 1.1754944e-38, %v1068
    %v1070 = vsel %vm1067, %v1069, %v1065
    %v1071 = vmul.f32 1.0, %v1070
    %v1072 = vadd.f32 %v1050, %v689
    %1074 = vrot.lane.b32.xlu0 %v1072, 64
    %v1075 = vpop.permute.xlu0 %1074
    %v1077 = vmul.f32 %v1071, %v1075
    %1079 = vrot.lane.b32.xlu0 %v1077, 64
    %v1080 = vpop.permute.xlu0 %1079
    %v1082 = vadd.f32 %v753, %v1080
    %v1083 = vtanh.pop %v1082
    %v1084 = vsub.f32 1.0, %v1071
    %1086 = vrot.lane.b32.xlu0 %v1083, 96
    %v1087 = vpop.permute.xlu0 %1086
    %v1089 = vmul.f32 %v1084, %v1087
    %v1090 = vmul.f32 %v1071, %v1024
    %v1091 = vadd.f32 %v1089, %v1090
    %1093 = vrot.lane.b32.xlu0 %v1091, 96
    %v1094 = vpop.permute.xlu0 %1093
    %1096 = vst.msk [vmem:[#allocation2 + $0x20] sm:$0xff] %vm74, %v1094
    %v1097 = vsel %vm74, %v1094, 0
    %1099 = vmatpush.msra.mxu0 0.0
    %1100 = vmatpush.msra.mxu0 0.0
    %1101 = vmatpush.msra.mxu0 0.0
    %1102 = vmatpush.msra.mxu0 0.0
    %1103 = vmatpush.msra.mxu0 0.0
    %1104 = vmatpush.msra.mxu0 0.0
    %1105 = vmatpush.msra.mxu0 0.0
    %1106 = vmatpush.msra.mxu0 0.0
    %1107 = vmatpush.msra.mxu0 0.0
    %1108 = vmatpush.msra.mxu0 0.0
    %1109 = vmatpush.msra.mxu0 0.0
    %1110 = vmatpush.msra.mxu0 0.0
    %1111 = vmatpush.msra.mxu0 %v686
    %1112 = vmatpush.msra.mxu0 %v685
    %1113 = vmatpush.msra.mxu0 %v684
    %1114 = vmatpush.msra.mxu0 %v683
    %1115 = vmatmul.f32.gmra.mxu0 %v1097
    %v1116 = vpop.f32.mrf.mxu0
    %v1117 = vadd.f32 0.0, %v1116
    %1118 = vdwg.mxu0
    %v1119 = vadd.f32 %v756, %v1117
    %v1120 = vxor.u32 %v1119, 2147483648
    %v1121 = vmul.f32 %v1120, 1.442695
    %v1122 = vpow.pop %v1121
    %v1123 = vadd.f32 %v1122, 1.0
    %v1124 = vrcp.pop %v1123
    %v1125 = vmul.f32 %v1123, %v1124
    %v1126 = vsub.f32 1.0, %v1125
    %v1127 = vmul.f32 %v1124, %v1126
    %v1128 = vadd.f32 %v1124, %v1127
    %vm1129 = vweird.f32 %v1123
    %vm1130 = vweird.f32 %v1124
    %vm1131 = vmor %vm1129, %vm1130
    %v1132 = vsel %vm1131, %v1124, %v1128
    %v1133 = vand.u32 2147483647, %v1123
    %vm1134 = vcmp.eq.f32.partialorder %v1133, 8.507059e+37
    %v1135 = vand.u32 %v1123, 2147483648
    %v1136 = vor.u32 1.1754944e-38, %v1135
    %v1137 = vsel %vm1134, %v1136, %v1132
    %v1138 = vmul.f32 1.0, %v1137
    %v1139 = vadd.f32 %v1117, %v689
    %1141 = vrot.lane.b32.xlu0 %v1139, 64
    %v1142 = vpop.permute.xlu0 %1141
    %v1144 = vmul.f32 %v1138, %v1142
    %1146 = vrot.lane.b32.xlu0 %v1144, 64
    %v1147 = vpop.permute.xlu0 %1146
    %v1149 = vadd.f32 %v756, %v1147
    %v1150 = vtanh.pop %v1149
    %v1151 = vsub.f32 1.0, %v1138
    %1153 = vrot.lane.b32.xlu0 %v1150, 96
    %v1154 = vpop.permute.xlu0 %1153
    %v1156 = vmul.f32 %v1151, %v1154
    %v1157 = vmul.f32 %v1138, %v1091
    %v1158 = vadd.f32 %v1156, %v1157
    %1160 = vrot.lane.b32.xlu0 %v1158, 96
    %v1161 = vpop.permute.xlu0 %1160
    %1163 = vst.msk [vmem:[#allocation2 + $0x28] sm:$0xff] %vm74, %v1161
    %v1164 = vsel %vm74, %v1161, 0
    %1166 = vmatpush.msra.mxu0 0.0
    %1167 = vmatpush.msra.mxu0 0.0
    %1168 = vmatpush.msra.mxu0 0.0
    %1169 = vmatpush.msra.mxu0 0.0
    %1170 = vmatpush.msra.mxu0 0.0
    %1171 = vmatpush.msra.mxu0 0.0
    %1172 = vmatpush.msra.mxu0 0.0
    %1173 = vmatpush.msra.mxu0 0.0
    %1174 = vmatpush.msra.mxu0 0.0
    %1175 = vmatpush.msra.mxu0 0.0
    %1176 = vmatpush.msra.mxu0 0.0
    %1177 = vmatpush.msra.mxu0 0.0
    %1178 = vmatpush.msra.mxu0 %v686
    %1179 = vmatpush.msra.mxu0 %v685
    %1180 = vmatpush.msra.mxu0 %v684
    %1181 = vmatpush.msra.mxu0 %v683
    %1182 = vmatmul.f32.gmra.mxu0 %v1164
    %v1183 = vpop.f32.mrf.mxu0
    %v1184 = vadd.f32 0.0, %v1183
    %1185 = vdwg.mxu0
    %v1186 = vadd.f32 %v759, %v1184
    %v1187 = vxor.u32 %v1186, 2147483648
    %v1188 = vmul.f32 %v1187, 1.442695
    %v1189 = vpow.pop %v1188
    %v1190 = vadd.f32 %v1189, 1.0
    %v1191 = vrcp.pop %v1190
    %v1192 = vmul.f32 %v1190, %v1191
    %v1193 = vsub.f32 1.0, %v1192
    %v1194 = vmul.f32 %v1191, %v1193
    %v1195 = vadd.f32 %v1191, %v1194
    %vm1196 = vweird.f32 %v1190
    %vm1197 = vweird.f32 %v1191
    %vm1198 = vmor %vm1196, %vm1197
    %v1199 = vsel %vm1198, %v1191, %v1195
    %v1200 = vand.u32 2147483647, %v1190
    %vm1201 = vcmp.eq.f32.partialorder %v1200, 8.507059e+37
    %v1202 = vand.u32 %v1190, 2147483648
    %v1203 = vor.u32 1.1754944e-38, %v1202
    %v1204 = vsel %vm1201, %v1203, %v1199
    %v1205 = vmul.f32 1.0, %v1204
    %v1206 = vadd.f32 %v1184, %v689
    %1208 = vrot.lane.b32.xlu0 %v1206, 64
    %v1209 = vpop.permute.xlu0 %1208
    %v1211 = vmul.f32 %v1205, %v1209
    %1213 = vrot.lane.b32.xlu0 %v1211, 64
    %v1214 = vpop.permute.xlu0 %1213
    %v1216 = vadd.f32 %v759, %v1214
    %v1217 = vtanh.pop %v1216
    %v1218 = vsub.f32 1.0, %v1205
    %1220 = vrot.lane.b32.xlu0 %v1217, 96
    %v1221 = vpop.permute.xlu0 %1220
    %v1223 = vmul.f32 %v1218, %v1221
    %v1224 = vmul.f32 %v1205, %v1158
    %v1225 = vadd.f32 %v1223, %v1224
    %1227 = vrot.lane.b32.xlu0 %v1225, 96
    %v1228 = vpop.permute.xlu0 %1227
    %1230 = vst.msk [vmem:[#allocation2 + $0x30] sm:$0xff] %vm74, %v1228
    %v1231 = vsel %vm74, %v1228, 0
    %1233 = vmatpush.msra.mxu0 0.0
    %1234 = vmatpush.msra.mxu0 0.0
    %1235 = vmatpush.msra.mxu0 0.0
    %1236 = vmatpush.msra.mxu0 0.0
    %1237 = vmatpush.msra.mxu0 0.0
    %1238 = vmatpush.msra.mxu0 0.0
    %1239 = vmatpush.msra.mxu0 0.0
    %1240 = vmatpush.msra.mxu0 0.0
    %1241 = vmatpush.msra.mxu0 0.0
    %1242 = vmatpush.msra.mxu0 0.0
    %1243 = vmatpush.msra.mxu0 0.0
    %1244 = vmatpush.msra.mxu0 0.0
    %1245 = vmatpush.msra.mxu0 %v686
    %1246 = vmatpush.msra.mxu0 %v685
    %1247 = vmatpush.msra.mxu0 %v684
    %1248 = vmatpush.msra.mxu0 %v683
    %1249 = vmatmul.f32.gmra.mxu0 %v1231
    %v1250 = vpop.f32.mrf.mxu0
    %v1251 = vadd.f32 0.0, %v1250
    %1252 = vdwg.mxu0
    %v1253 = vadd.f32 %v762, %v1251
    %v1254 = vxor.u32 %v1253, 2147483648
    %v1255 = vmul.f32 %v1254, 1.442695
    %v1256 = vpow.pop %v1255
    %v1257 = vadd.f32 %v1256, 1.0
    %v1258 = vrcp.pop %v1257
    %v1259 = vmul.f32 %v1257, %v1258
    %v1260 = vsub.f32 1.0, %v1259
    %v1261 = vmul.f32 %v1258, %v1260
    %v1262 = vadd.f32 %v1258, %v1261
    %vm1263 = vweird.f32 %v1257
    %vm1264 = vweird.f32 %v1258
    %vm1265 = vmor %vm1263, %vm1264
    %v1266 = vsel %vm1265, %v1258, %v1262
    %v1267 = vand.u32 2147483647, %v1257
    %vm1268 = vcmp.eq.f32.partialorder %v1267, 8.507059e+37
    %v1269 = vand.u32 %v1257, 2147483648
    %v1270 = vor.u32 1.1754944e-38, %v1269
    %v1271 = vsel %vm1268, %v1270, %v1266
    %v1272 = vmul.f32 1.0, %v1271
    %v1273 = vadd.f32 %v1251, %v689
    %1275 = vrot.lane.b32.xlu0 %v1273, 64
    %v1276 = vpop.permute.xlu0 %1275
    %v1278 = vmul.f32 %v1272, %v1276
    %1280 = vrot.lane.b32.xlu0 %v1278, 64
    %v1281 = vpop.permute.xlu0 %1280
    %v1283 = vadd.f32 %v762, %v1281
    %v1284 = vtanh.pop %v1283
    %v1285 = vsub.f32 1.0, %v1272
    %1287 = vrot.lane.b32.xlu0 %v1284, 96
    %v1288 = vpop.permute.xlu0 %1287
    %v1290 = vmul.f32 %v1285, %v1288
    %v1291 = vmul.f32 %v1272, %v1225
    %v1292 = vadd.f32 %v1290, %v1291
    %1294 = vrot.lane.b32.xlu0 %v1292, 96
    %v1295 = vpop.permute.xlu0 %1294
    %1297 = vst.msk [vmem:[#allocation2 + $0x38] sm:$0xff] %vm74, %v1295
    %s1298 = scalar_lea.vmem %s1, 64
    %v1299 = vld [vmem:[%s1298] sm:$0xff]
    %v1300 = vld [vmem:[%s1298 + $0x8] sm:$0xff]
    %v1301 = vld [vmem:[%s1298 + $0x10] sm:$0xff]
    %v1302 = vld [vmem:[%s1298 + $0x18] sm:$0xff]
    %s1303 = scalar_lea.vmem [#allocation3], 64
    %v1304 = vld [vmem:[%s1303] sm:$0xff]
    %v1305 = vld [vmem:[%s1303 + $0x8] sm:$0xff]
    %v1306 = vld [vmem:[%s1303 + $0x10] sm:$0xff]
    %v1307 = vld [vmem:[%s1303 + $0x18] sm:$0xff]
    %s1308 = scalar_lea.vmem %s3, 4
    %v1309 = vld [vmem:[%s1308] sm:$0x3]
    %v1310 = vperm.slane %v1309, 1
    %v1311 = vld [vmem:[#allocation2] sm:$0xff]
    %v1312 = vld [vmem:[#allocation2 + $0x8] sm:$0xff]
    %v1313 = vld [vmem:[#allocation2 + $0x10] sm:$0xff]
    %v1314 = vld [vmem:[#allocation2 + $0x18] sm:$0xff]
    %v1315 = vld [vmem:[#allocation2 + $0x20] sm:$0xff]
    %v1316 = vld [vmem:[#allocation2 + $0x28] sm:$0xff]
    %v1317 = vld [vmem:[#allocation2 + $0x30] sm:$0xff]
    %v1318 = vld [vmem:[#allocation2 + $0x38] sm:$0xff]
    %v1319 = vperm.slane %v1309, 0
    %v1321 = vsel %vm74, %v1311, 0
    %v1324 = vsel %vm74, %v1312, 0
    %v1327 = vsel %vm74, %v1313, 0
    %v1330 = vsel %vm74, %v1314, 0
    %v1333 = vsel %vm74, %v1315, 0
    %v1336 = vsel %vm74, %v1316, 0
    %v1339 = vsel %vm74, %v1317, 0
    %v1342 = vsel %vm74, %v1318, 0
    %1344 = vmatpush.msra.mxu0 0.0
    %1345 = vmatpush.msra.mxu0 0.0
    %1346 = vmatpush.msra.mxu0 0.0
    %1347 = vmatpush.msra.mxu0 0.0
    %1348 = vmatpush.msra.mxu0 0.0
    %1349 = vmatpush.msra.mxu0 0.0
    %1350 = vmatpush.msra.mxu0 0.0
    %1351 = vmatpush.msra.mxu0 0.0
    %1352 = vmatpush.msra.mxu0 0.0
    %1353 = vmatpush.msra.mxu0 0.0
    %1354 = vmatpush.msra.mxu0 0.0
    %1355 = vmatpush.msra.mxu0 0.0
    %1356 = vmatpush.msra.mxu0 %v1302
    %1357 = vmatpush.msra.mxu0 %v1301
    %1358 = vmatpush.msra.mxu0 %v1300
    %1359 = vmatpush.msra.mxu0 %v1299
    %1360 = vmatmul.f32.gmra.mxu0 %v1321
    %v1361 = vpop.f32.mrf.mxu0
    %v1362 = vadd.f32 %v1319, %v1361
    %1363 = vmatmul.f32.gmra.mxu0 %v1324
    %v1364 = vpop.f32.mrf.mxu0
    %v1365 = vadd.f32 %v1319, %v1364
    %1366 = vmatmul.f32.gmra.mxu0 %v1327
    %v1367 = vpop.f32.mrf.mxu0
    %v1368 = vadd.f32 %v1319, %v1367
    %1369 = vmatmul.f32.gmra.mxu0 %v1330
    %v1370 = vpop.f32.mrf.mxu0
    %v1371 = vadd.f32 %v1319, %v1370
    %1372 = vmatmul.f32.gmra.mxu0 %v1333
    %v1373 = vpop.f32.mrf.mxu0
    %v1374 = vadd.f32 %v1319, %v1373
    %1375 = vmatmul.f32.gmra.mxu0 %v1336
    %v1376 = vpop.f32.mrf.mxu0
    %v1377 = vadd.f32 %v1319, %v1376
    %1378 = vmatmul.f32.gmra.mxu0 %v1339
    %v1379 = vpop.f32.mrf.mxu0
    %v1380 = vadd.f32 %v1319, %v1379
    %1381 = vmatmul.f32.gmra.mxu0 %v1342
    %v1382 = vpop.f32.mrf.mxu0
    %v1383 = vadd.f32 %v1319, %v1382
    %1384 = vdwg.mxu0
    %1385 = vmatpush.msra.mxu0 0.0
    %1386 = vmatpush.msra.mxu0 0.0
    %1387 = vmatpush.msra.mxu0 0.0
    %1388 = vmatpush.msra.mxu0 0.0
    %1389 = vmatpush.msra.mxu0 0.0
    %1390 = vmatpush.msra.mxu0 0.0
    %1391 = vmatpush.msra.mxu0 0.0
    %1392 = vmatpush.msra.mxu0 0.0
    %1393 = vmatpush.msra.mxu0 0.0
    %1394 = vmatpush.msra.mxu0 0.0
    %1395 = vmatpush.msra.mxu0 0.0
    %1396 = vmatpush.msra.mxu0 0.0
    %1397 = vmatpush.msra.mxu0 %v1307
    %1398 = vmatpush.msra.mxu0 %v1306
    %1399 = vmatpush.msra.mxu0 %v1305
    %1400 = vmatpush.msra.mxu0 %v1304
    %1401 = vmatmul.f32.gmra.mxu0 %v141
    %v1402 = vpop.f32.mrf.mxu0
    %v1403 = vadd.f32 0.0, %v1402
    %1404 = vdwg.mxu0
    %v1405 = vadd.f32 %v1362, %v1403
    %v1406 = vxor.u32 %v1405, 2147483648
    %v1407 = vmul.f32 %v1406, 1.442695
    %v1408 = vpow.pop %v1407
    %v1409 = vadd.f32 %v1408, 1.0
    %v1410 = vrcp.pop %v1409
    %v1411 = vmul.f32 %v1409, %v1410
    %v1412 = vsub.f32 1.0, %v1411
    %v1413 = vmul.f32 %v1410, %v1412
    %v1414 = vadd.f32 %v1410, %v1413
    %vm1415 = vweird.f32 %v1409
    %vm1416 = vweird.f32 %v1410
    %vm1417 = vmor %vm1415, %vm1416
    %v1418 = vsel %vm1417, %v1410, %v1414
    %v1419 = vand.u32 2147483647, %v1409
    %vm1420 = vcmp.eq.f32.partialorder %v1419, 8.507059e+37
    %v1421 = vand.u32 %v1409, 2147483648
    %v1422 = vor.u32 1.1754944e-38, %v1421
    %v1423 = vsel %vm1420, %v1422, %v1418
    %v1424 = vmul.f32 1.0, %v1423
    %v1425 = vadd.f32 %v1403, %v1310
    %1427 = vrot.lane.b32.xlu0 %v1425, 64
    %v1428 = vpop.permute.xlu0 %1427
    %v1430 = vmul.f32 %v1424, %v1428
    %1432 = vrot.lane.b32.xlu0 %v1430, 64
    %v1433 = vpop.permute.xlu0 %1432
    %v1435 = vadd.f32 %v1362, %v1433
    %v1436 = vtanh.pop %v1435
    %v1437 = vsub.f32 1.0, %v1424
    %1439 = vrot.lane.b32.xlu0 %v1436, 96
    %v1440 = vpop.permute.xlu0 %1439
    %v1442 = vmul.f32 %v1437, %v1440
    %v1443 = vmul.f32 %v1424, 0.0
    %v1444 = vadd.f32 %v1442, %v1443
    %1446 = vrot.lane.b32.xlu0 %v1444, 96
    %v1447 = vpop.permute.xlu0 %1446
    %1449 = vst.msk [vmem:[#allocation2] sm:$0xff] %vm74, %v1447
    %v1450 = vsel %vm74, %v1447, 0
    %1452 = vmatpush.msra.mxu0 0.0
    %1453 = vmatpush.msra.mxu0 0.0
    %1454 = vmatpush.msra.mxu0 0.0
    %1455 = vmatpush.msra.mxu0 0.0
    %1456 = vmatpush.msra.mxu0 0.0
    %1457 = vmatpush.msra.mxu0 0.0
    %1458 = vmatpush.msra.mxu0 0.0
    %1459 = vmatpush.msra.mxu0 0.0
    %1460 = vmatpush.msra.mxu0 0.0
    %1461 = vmatpush.msra.mxu0 0.0
    %1462 = vmatpush.msra.mxu0 0.0
    %1463 = vmatpush.msra.mxu0 0.0
    %1464 = vmatpush.msra.mxu0 %v1307
    %1465 = vmatpush.msra.mxu0 %v1306
    %1466 = vmatpush.msra.mxu0 %v1305
    %1467 = vmatpush.msra.mxu0 %v1304
    %1468 = vmatmul.f32.gmra.mxu0 %v1450
    %v1469 = vpop.f32.mrf.mxu0
    %v1470 = vadd.f32 0.0, %v1469
    %1471 = vdwg.mxu0
    %v1472 = vadd.f32 %v1365, %v1470
    %v1473 = vxor.u32 %v1472, 2147483648
    %v1474 = vmul.f32 %v1473, 1.442695
    %v1475 = vpow.pop %v1474
    %v1476 = vadd.f32 %v1475, 1.0
    %v1477 = vrcp.pop %v1476
    %v1478 = vmul.f32 %v1476, %v1477
    %v1479 = vsub.f32 1.0, %v1478
    %v1480 = vmul.f32 %v1477, %v1479
    %v1481 = vadd.f32 %v1477, %v1480
    %vm1482 = vweird.f32 %v1476
    %vm1483 = vweird.f32 %v1477
    %vm1484 = vmor %vm1482, %vm1483
    %v1485 = vsel %vm1484, %v1477, %v1481
    %v1486 = vand.u32 2147483647, %v1476
    %vm1487 = vcmp.eq.f32.partialorder %v1486, 8.507059e+37
    %v1488 = vand.u32 %v1476, 2147483648
    %v1489 = vor.u32 1.1754944e-38, %v1488
    %v1490 = vsel %vm1487, %v1489, %v1485
    %v1491 = vmul.f32 1.0, %v1490
    %v1492 = vadd.f32 %v1470, %v1310
    %1494 = vrot.lane.b32.xlu0 %v1492, 64
    %v1495 = vpop.permute.xlu0 %1494
    %v1497 = vmul.f32 %v1491, %v1495
    %1499 = vrot.lane.b32.xlu0 %v1497, 64
    %v1500 = vpop.permute.xlu0 %1499
    %v1502 = vadd.f32 %v1365, %v1500
    %v1503 = vtanh.pop %v1502
    %v1504 = vsub.f32 1.0, %v1491
    %1506 = vrot.lane.b32.xlu0 %v1503, 96
    %v1507 = vpop.permute.xlu0 %1506
    %v1509 = vmul.f32 %v1504, %v1507
    %v1510 = vmul.f32 %v1491, %v1444
    %v1511 = vadd.f32 %v1509, %v1510
    %1513 = vrot.lane.b32.xlu0 %v1511, 96
    %v1514 = vpop.permute.xlu0 %1513
    %1516 = vst.msk [vmem:[#allocation2 + $0x8] sm:$0xff] %vm74, %v1514
    %v1517 = vsel %vm74, %v1514, 0
    %1519 = vmatpush.msra.mxu0 0.0
    %1520 = vmatpush.msra.mxu0 0.0
    %1521 = vmatpush.msra.mxu0 0.0
    %1522 = vmatpush.msra.mxu0 0.0
    %1523 = vmatpush.msra.mxu0 0.0
    %1524 = vmatpush.msra.mxu0 0.0
    %1525 = vmatpush.msra.mxu0 0.0
    %1526 = vmatpush.msra.mxu0 0.0
    %1527 = vmatpush.msra.mxu0 0.0
    %1528 = vmatpush.msra.mxu0 0.0
    %1529 = vmatpush.msra.mxu0 0.0
    %1530 = vmatpush.msra.mxu0 0.0
    %1531 = vmatpush.msra.mxu0 %v1307
    %1532 = vmatpush.msra.mxu0 %v1306
    %1533 = vmatpush.msra.mxu0 %v1305
    %1534 = vmatpush.msra.mxu0 %v1304
    %1535 = vmatmul.f32.gmra.mxu0 %v1517
    %v1536 = vpop.f32.mrf.mxu0
    %v1537 = vadd.f32 0.0, %v1536
    %1538 = vdwg.mxu0
    %v1539 = vadd.f32 %v1368, %v1537
    %v1540 = vxor.u32 %v1539, 2147483648
    %v1541 = vmul.f32 %v1540, 1.442695
    %v1542 = vpow.pop %v1541
    %v1543 = vadd.f32 %v1542, 1.0
    %v1544 = vrcp.pop %v1543
    %v1545 = vmul.f32 %v1543, %v1544
    %v1546 = vsub.f32 1.0, %v1545
    %v1547 = vmul.f32 %v1544, %v1546
    %v1548 = vadd.f32 %v1544, %v1547
    %vm1549 = vweird.f32 %v1543
    %vm1550 = vweird.f32 %v1544
    %vm1551 = vmor %vm1549, %vm1550
    %v1552 = vsel %vm1551, %v1544, %v1548
    %v1553 = vand.u32 2147483647, %v1543
    %vm1554 = vcmp.eq.f32.partialorder %v1553, 8.507059e+37
    %v1555 = vand.u32 %v1543, 2147483648
    %v1556 = vor.u32 1.1754944e-38, %v1555
    %v1557 = vsel %vm1554, %v1556, %v1552
    %v1558 = vmul.f32 1.0, %v1557
    %v1559 = vadd.f32 %v1537, %v1310
    %1561 = vrot.lane.b32.xlu0 %v1559, 64
    %v1562 = vpop.permute.xlu0 %1561
    %v1564 = vmul.f32 %v1558, %v1562
    %1566 = vrot.lane.b32.xlu0 %v1564, 64
    %v1567 = vpop.permute.xlu0 %1566
    %v1569 = vadd.f32 %v1368, %v1567
    %v1570 = vtanh.pop %v1569
    %v1571 = vsub.f32 1.0, %v1558
    %1573 = vrot.lane.b32.xlu0 %v1570, 96
    %v1574 = vpop.permute.xlu0 %1573
    %v1576 = vmul.f32 %v1571, %v1574
    %v1577 = vmul.f32 %v1558, %v1511
    %v1578 = vadd.f32 %v1576, %v1577
    %1580 = vrot.lane.b32.xlu0 %v1578, 96
    %v1581 = vpop.permute.xlu0 %1580
    %1583 = vst.msk [vmem:[#allocation2 + $0x10] sm:$0xff] %vm74, %v1581
    %v1584 = vsel %vm74, %v1581, 0
    %1586 = vmatpush.msra.mxu0 0.0
    %1587 = vmatpush.msra.mxu0 0.0
    %1588 = vmatpush.msra.mxu0 0.0
    %1589 = vmatpush.msra.mxu0 0.0
    %1590 = vmatpush.msra.mxu0 0.0
    %1591 = vmatpush.msra.mxu0 0.0
    %1592 = vmatpush.msra.mxu0 0.0
    %1593 = vmatpush.msra.mxu0 0.0
    %1594 = vmatpush.msra.mxu0 0.0
    %1595 = vmatpush.msra.mxu0 0.0
    %1596 = vmatpush.msra.mxu0 0.0
    %1597 = vmatpush.msra.mxu0 0.0
    %1598 = vmatpush.msra.mxu0 %v1307
    %1599 = vmatpush.msra.mxu0 %v1306
    %1600 = vmatpush.msra.mxu0 %v1305
    %1601 = vmatpush.msra.mxu0 %v1304
    %1602 = vmatmul.f32.gmra.mxu0 %v1584
    %v1603 = vpop.f32.mrf.mxu0
    %v1604 = vadd.f32 0.0, %v1603
    %1605 = vdwg.mxu0
    %v1606 = vadd.f32 %v1371, %v1604
    %v1607 = vxor.u32 %v1606, 2147483648
    %v1608 = vmul.f32 %v1607, 1.442695
    %v1609 = vpow.pop %v1608
    %v1610 = vadd.f32 %v1609, 1.0
    %v1611 = vrcp.pop %v1610
    %v1612 = vmul.f32 %v1610, %v1611
    %v1613 = vsub.f32 1.0, %v1612
    %v1614 = vmul.f32 %v1611, %v1613
    %v1615 = vadd.f32 %v1611, %v1614
    %vm1616 = vweird.f32 %v1610
    %vm1617 = vweird.f32 %v1611
    %vm1618 = vmor %vm1616, %vm1617
    %v1619 = vsel %vm1618, %v1611, %v1615
    %v1620 = vand.u32 2147483647, %v1610
    %vm1621 = vcmp.eq.f32.partialorder %v1620, 8.507059e+37
    %v1622 = vand.u32 %v1610, 2147483648
    %v1623 = vor.u32 1.1754944e-38, %v1622
    %v1624 = vsel %vm1621, %v1623, %v1619
    %v1625 = vmul.f32 1.0, %v1624
    %v1626 = vadd.f32 %v1604, %v1310
    %1628 = vrot.lane.b32.xlu0 %v1626, 64
    %v1629 = vpop.permute.xlu0 %1628
    %v1631 = vmul.f32 %v1625, %v1629
    %1633 = vrot.lane.b32.xlu0 %v1631, 64
    %v1634 = vpop.permute.xlu0 %1633
    %v1636 = vadd.f32 %v1371, %v1634
    %v1637 = vtanh.pop %v1636
    %v1638 = vsub.f32 1.0, %v1625
    %1640 = vrot.lane.b32.xlu0 %v1637, 96
    %v1641 = vpop.permute.xlu0 %1640
    %v1643 = vmul.f32 %v1638, %v1641
    %v1644 = vmul.f32 %v1625, %v1578
    %v1645 = vadd.f32 %v1643, %v1644
    %1647 = vrot.lane.b32.xlu0 %v1645, 96
    %v1648 = vpop.permute.xlu0 %1647
    %1650 = vst.msk [vmem:[#allocation2 + $0x18] sm:$0xff] %vm74, %v1648
    %v1651 = vsel %vm74, %v1648, 0
    %1653 = vmatpush.msra.mxu0 0.0
    %1654 = vmatpush.msra.mxu0 0.0
    %1655 = vmatpush.msra.mxu0 0.0
    %1656 = vmatpush.msra.mxu0 0.0
    %1657 = vmatpush.msra.mxu0 0.0
    %1658 = vmatpush.msra.mxu0 0.0
    %1659 = vmatpush.msra.mxu0 0.0
    %1660 = vmatpush.msra.mxu0 0.0
    %1661 = vmatpush.msra.mxu0 0.0
    %1662 = vmatpush.msra.mxu0 0.0
    %1663 = vmatpush.msra.mxu0 0.0
    %1664 = vmatpush.msra.mxu0 0.0
    %1665 = vmatpush.msra.mxu0 %v1307
    %1666 = vmatpush.msra.mxu0 %v1306
    %1667 = vmatpush.msra.mxu0 %v1305
    %1668 = vmatpush.msra.mxu0 %v1304
    %1669 = vmatmul.f32.gmra.mxu0 %v1651
    %v1670 = vpop.f32.mrf.mxu0
    %v1671 = vadd.f32 0.0, %v1670
    %1672 = vdwg.mxu0
    %v1673 = vadd.f32 %v1374, %v1671
    %v1674 = vxor.u32 %v1673, 2147483648
    %v1675 = vmul.f32 %v1674, 1.442695
    %v1676 = vpow.pop %v1675
    %v1677 = vadd.f32 %v1676, 1.0
    %v1678 = vrcp.pop %v1677
    %v1679 = vmul.f32 %v1677, %v1678
    %v1680 = vsub.f32 1.0, %v1679
    %v1681 = vmul.f32 %v1678, %v1680
    %v1682 = vadd.f32 %v1678, %v1681
    %vm1683 = vweird.f32 %v1677
    %vm1684 = vweird.f32 %v1678
    %vm1685 = vmor %vm1683, %vm1684
    %v1686 = vsel %vm1685, %v1678, %v1682
    %v1687 = vand.u32 2147483647, %v1677
    %vm1688 = vcmp.eq.f32.partialorder %v1687, 8.507059e+37
    %v1689 = vand.u32 %v1677, 2147483648
    %v1690 = vor.u32 1.1754944e-38, %v1689
    %v1691 = vsel %vm1688, %v1690, %v1686
    %v1692 = vmul.f32 1.0, %v1691
    %v1693 = vadd.f32 %v1671, %v1310
    %1695 = vrot.lane.b32.xlu0 %v1693, 64
    %v1696 = vpop.permute.xlu0 %1695
    %v1698 = vmul.f32 %v1692, %v1696
    %1700 = vrot.lane.b32.xlu0 %v1698, 64
    %v1701 = vpop.permute.xlu0 %1700
    %v1703 = vadd.f32 %v1374, %v1701
    %v1704 = vtanh.pop %v1703
    %v1705 = vsub.f32 1.0, %v1692
    %1707 = vrot.lane.b32.xlu0 %v1704, 96
    %v1708 = vpop.permute.xlu0 %1707
    %v1710 = vmul.f32 %v1705, %v1708
    %v1711 = vmul.f32 %v1692, %v1645
    %v1712 = vadd.f32 %v1710, %v1711
    %1714 = vrot.lane.b32.xlu0 %v1712, 96
    %v1715 = vpop.permute.xlu0 %1714
    %1717 = vst.msk [vmem:[#allocation2 + $0x20] sm:$0xff] %vm74, %v1715
    %v1718 = vsel %vm74, %v1715, 0
    %1720 = vmatpush.msra.mxu0 0.0
    %1721 = vmatpush.msra.mxu0 0.0
    %1722 = vmatpush.msra.mxu0 0.0
    %1723 = vmatpush.msra.mxu0 0.0
    %1724 = vmatpush.msra.mxu0 0.0
    %1725 = vmatpush.msra.mxu0 0.0
    %1726 = vmatpush.msra.mxu0 0.0
    %1727 = vmatpush.msra.mxu0 0.0
    %1728 = vmatpush.msra.mxu0 0.0
    %1729 = vmatpush.msra.mxu0 0.0
    %1730 = vmatpush.msra.mxu0 0.0
    %1731 = vmatpush.msra.mxu0 0.0
    %1732 = vmatpush.msra.mxu0 %v1307
    %1733 = vmatpush.msra.mxu0 %v1306
    %1734 = vmatpush.msra.mxu0 %v1305
    %1735 = vmatpush.msra.mxu0 %v1304
    %1736 = vmatmul.f32.gmra.mxu0 %v1718
    %v1737 = vpop.f32.mrf.mxu0
    %v1738 = vadd.f32 0.0, %v1737
    %1739 = vdwg.mxu0
    %v1740 = vadd.f32 %v1377, %v1738
    %v1741 = vxor.u32 %v1740, 2147483648
    %v1742 = vmul.f32 %v1741, 1.442695
    %v1743 = vpow.pop %v1742
    %v1744 = vadd.f32 %v1743, 1.0
    %v1745 = vrcp.pop %v1744
    %v1746 = vmul.f32 %v1744, %v1745
    %v1747 = vsub.f32 1.0, %v1746
    %v1748 = vmul.f32 %v1745, %v1747
    %v1749 = vadd.f32 %v1745, %v1748
    %vm1750 = vweird.f32 %v1744
    %vm1751 = vweird.f32 %v1745
    %vm1752 = vmor %vm1750, %vm1751
    %v1753 = vsel %vm1752, %v1745, %v1749
    %v1754 = vand.u32 2147483647, %v1744
    %vm1755 = vcmp.eq.f32.partialorder %v1754, 8.507059e+37
    %v1756 = vand.u32 %v1744, 2147483648
    %v1757 = vor.u32 1.1754944e-38, %v1756
    %v1758 = vsel %vm1755, %v1757, %v1753
    %v1759 = vmul.f32 1.0, %v1758
    %v1760 = vadd.f32 %v1738, %v1310
    %1762 = vrot.lane.b32.xlu0 %v1760, 64
    %v1763 = vpop.permute.xlu0 %1762
    %v1765 = vmul.f32 %v1759, %v1763
    %1767 = vrot.lane.b32.xlu0 %v1765, 64
    %v1768 = vpop.permute.xlu0 %1767
    %v1770 = vadd.f32 %v1377, %v1768
    %v1771 = vtanh.pop %v1770
    %v1772 = vsub.f32 1.0, %v1759
    %1774 = vrot.lane.b32.xlu0 %v1771, 96
    %v1775 = vpop.permute.xlu0 %1774
    %v1777 = vmul.f32 %v1772, %v1775
    %v1778 = vmul.f32 %v1759, %v1712
    %v1779 = vadd.f32 %v1777, %v1778
    %1781 = vrot.lane.b32.xlu0 %v1779, 96
    %v1782 = vpop.permute.xlu0 %1781
    %1784 = vst.msk [vmem:[#allocation2 + $0x28] sm:$0xff] %vm74, %v1782
    %v1785 = vsel %vm74, %v1782, 0
    %1787 = vmatpush.msra.mxu0 0.0
    %1788 = vmatpush.msra.mxu0 0.0
    %1789 = vmatpush.msra.mxu0 0.0
    %1790 = vmatpush.msra.mxu0 0.0
    %1791 = vmatpush.msra.mxu0 0.0
    %1792 = vmatpush.msra.mxu0 0.0
    %1793 = vmatpush.msra.mxu0 0.0
    %1794 = vmatpush.msra.mxu0 0.0
    %1795 = vmatpush.msra.mxu0 0.0
    %1796 = vmatpush.msra.mxu0 0.0
    %1797 = vmatpush.msra.mxu0 0.0
    %1798 = vmatpush.msra.mxu0 0.0
    %1799 = vmatpush.msra.mxu0 %v1307
    %1800 = vmatpush.msra.mxu0 %v1306
    %1801 = vmatpush.msra.mxu0 %v1305
    %1802 = vmatpush.msra.mxu0 %v1304
    %1803 = vmatmul.f32.gmra.mxu0 %v1785
    %v1804 = vpop.f32.mrf.mxu0
    %v1805 = vadd.f32 0.0, %v1804
    %1806 = vdwg.mxu0
    %v1807 = vadd.f32 %v1380, %v1805
    %v1808 = vxor.u32 %v1807, 2147483648
    %v1809 = vmul.f32 %v1808, 1.442695
    %v1810 = vpow.pop %v1809
    %v1811 = vadd.f32 %v1810, 1.0
    %v1812 = vrcp.pop %v1811
    %v1813 = vmul.f32 %v1811, %v1812
    %v1814 = vsub.f32 1.0, %v1813
    %v1815 = vmul.f32 %v1812, %v1814
    %v1816 = vadd.f32 %v1812, %v1815
    %vm1817 = vweird.f32 %v1811
    %vm1818 = vweird.f32 %v1812
    %vm1819 = vmor %vm1817, %vm1818
    %v1820 = vsel %vm1819, %v1812, %v1816
    %v1821 = vand.u32 2147483647, %v1811
    %vm1822 = vcmp.eq.f32.partialorder %v1821, 8.507059e+37
    %v1823 = vand.u32 %v1811, 2147483648
    %v1824 = vor.u32 1.1754944e-38, %v1823
    %v1825 = vsel %vm1822, %v1824, %v1820
    %v1826 = vmul.f32 1.0, %v1825
    %v1827 = vadd.f32 %v1805, %v1310
    %1829 = vrot.lane.b32.xlu0 %v1827, 64
    %v1830 = vpop.permute.xlu0 %1829
    %v1832 = vmul.f32 %v1826, %v1830
    %1834 = vrot.lane.b32.xlu0 %v1832, 64
    %v1835 = vpop.permute.xlu0 %1834
    %v1837 = vadd.f32 %v1380, %v1835
    %v1838 = vtanh.pop %v1837
    %v1839 = vsub.f32 1.0, %v1826
    %1841 = vrot.lane.b32.xlu0 %v1838, 96
    %v1842 = vpop.permute.xlu0 %1841
    %v1844 = vmul.f32 %v1839, %v1842
    %v1845 = vmul.f32 %v1826, %v1779
    %v1846 = vadd.f32 %v1844, %v1845
    %1848 = vrot.lane.b32.xlu0 %v1846, 96
    %v1849 = vpop.permute.xlu0 %1848
    %1851 = vst.msk [vmem:[#allocation2 + $0x30] sm:$0xff] %vm74, %v1849
    %v1852 = vsel %vm74, %v1849, 0
    %1854 = vmatpush.msra.mxu0 0.0
    %1855 = vmatpush.msra.mxu0 0.0
    %1856 = vmatpush.msra.mxu0 0.0
    %1857 = vmatpush.msra.mxu0 0.0
    %1858 = vmatpush.msra.mxu0 0.0
    %1859 = vmatpush.msra.mxu0 0.0
    %1860 = vmatpush.msra.mxu0 0.0
    %1861 = vmatpush.msra.mxu0 0.0
    %1862 = vmatpush.msra.mxu0 0.0
    %1863 = vmatpush.msra.mxu0 0.0
    %1864 = vmatpush.msra.mxu0 0.0
    %1865 = vmatpush.msra.mxu0 0.0
    %1866 = vmatpush.msra.mxu0 %v1307
    %1867 = vmatpush.msra.mxu0 %v1306
    %1868 = vmatpush.msra.mxu0 %v1305
    %1869 = vmatpush.msra.mxu0 %v1304
    %1870 = vmatmul.f32.gmra.mxu0 %v1852
    %v1871 = vpop.f32.mrf.mxu0
    %v1872 = vadd.f32 0.0, %v1871
    %1873 = vdwg.mxu0
    %v1874 = vadd.f32 %v1383, %v1872
    %v1875 = vxor.u32 %v1874, 2147483648
    %v1876 = vmul.f32 %v1875, 1.442695
    %v1877 = vpow.pop %v1876
    %v1878 = vadd.f32 %v1877, 1.0
    %v1879 = vrcp.pop %v1878
    %v1880 = vmul.f32 %v1878, %v1879
    %v1881 = vsub.f32 1.0, %v1880
    %v1882 = vmul.f32 %v1879, %v1881
    %v1883 = vadd.f32 %v1879, %v1882
    %vm1884 = vweird.f32 %v1878
    %vm1885 = vweird.f32 %v1879
    %vm1886 = vmor %vm1884, %vm1885
    %v1887 = vsel %vm1886, %v1879, %v1883
    %v1888 = vand.u32 2147483647, %v1878
    %vm1889 = vcmp.eq.f32.partialorder %v1888, 8.507059e+37
    %v1890 = vand.u32 %v1878, 2147483648
    %v1891 = vor.u32 1.1754944e-38, %v1890
    %v1892 = vsel %vm1889, %v1891, %v1887
    %v1893 = vmul.f32 1.0, %v1892
    %v1894 = vadd.f32 %v1872, %v1310
    %1896 = vrot.lane.b32.xlu0 %v1894, 64
    %v1897 = vpop.permute.xlu0 %1896
    %v1899 = vmul.f32 %v1893, %v1897
    %1901 = vrot.lane.b32.xlu0 %v1899, 64
    %v1902 = vpop.permute.xlu0 %1901
    %v1904 = vadd.f32 %v1383, %v1902
    %v1905 = vtanh.pop %v1904
    %v1906 = vsub.f32 1.0, %v1893
    %1908 = vrot.lane.b32.xlu0 %v1905, 96
    %v1909 = vpop.permute.xlu0 %1908
    %v1911 = vmul.f32 %v1906, %v1909
    %v1912 = vmul.f32 %v1893, %v1846
    %v1913 = vadd.f32 %v1911, %v1912
    %1915 = vrot.lane.b32.xlu0 %v1913, 96
    %v1916 = vpop.permute.xlu0 %1915
    %1918 = vst.msk [vmem:[#allocation2 + $0x38] sm:$0xff] %vm74, %v1916
    %s1919 = scalar_lea.vmem %s1, 96
    %v1920 = vld [vmem:[%s1919] sm:$0xff]
    %v1921 = vld [vmem:[%s1919 + $0x8] sm:$0xff]
    %v1922 = vld [vmem:[%s1919 + $0x10] sm:$0xff]
    %v1923 = vld [vmem:[%s1919 + $0x18] sm:$0xff]
    %s1924 = scalar_lea.vmem [#allocation3], 96
    %v1925 = vld [vmem:[%s1924] sm:$0xff]
    %v1926 = vld [vmem:[%s1924 + $0x8] sm:$0xff]
    %v1927 = vld [vmem:[%s1924 + $0x10] sm:$0xff]
    %v1928 = vld [vmem:[%s1924 + $0x18] sm:$0xff]
    %s1929 = scalar_lea.vmem %s3, 6
    %v1930 = vld [vmem:[%s1929] sm:$0x3]
    %v1931 = vperm.slane %v1930, 1
    %v1932 = vld [vmem:[#allocation2] sm:$0xff]
    %v1933 = vld [vmem:[#allocation2 + $0x8] sm:$0xff]
    %v1934 = vld [vmem:[#allocation2 + $0x10] sm:$0xff]
    %v1935 = vld [vmem:[#allocation2 + $0x18] sm:$0xff]
    %v1936 = vld [vmem:[#allocation2 + $0x20] sm:$0xff]
    %v1937 = vld [vmem:[#allocation2 + $0x28] sm:$0xff]
    %v1938 = vld [vmem:[#allocation2 + $0x30] sm:$0xff]
    %v1939 = vld [vmem:[#allocation2 + $0x38] sm:$0xff]
    %v1940 = vperm.slane %v1930, 0
    %v1942 = vsel %vm74, %v1932, 0
    %v1945 = vsel %vm74, %v1933, 0
    %v1948 = vsel %vm74, %v1934, 0
    %v1951 = vsel %vm74, %v1935, 0
    %v1954 = vsel %vm74, %v1936, 0
    %v1957 = vsel %vm74, %v1937, 0
    %v1960 = vsel %vm74, %v1938, 0
    %v1963 = vsel %vm74, %v1939, 0
    %1965 = vmatpush.msra.mxu0 0.0
    %1966 = vmatpush.msra.mxu0 0.0
    %1967 = vmatpush.msra.mxu0 0.0
    %1968 = vmatpush.msra.mxu0 0.0
    %1969 = vmatpush.msra.mxu0 0.0
    %1970 = vmatpush.msra.mxu0 0.0
    %1971 = vmatpush.msra.mxu0 0.0
    %1972 = vmatpush.msra.mxu0 0.0
    %1973 = vmatpush.msra.mxu0 0.0
    %1974 = vmatpush.msra.mxu0 0.0
    %1975 = vmatpush.msra.mxu0 0.0
    %1976 = vmatpush.msra.mxu0 0.0
    %1977 = vmatpush.msra.mxu0 %v1923
    %1978 = vmatpush.msra.mxu0 %v1922
    %1979 = vmatpush.msra.mxu0 %v1921
    %1980 = vmatpush.msra.mxu0 %v1920
    %1981 = vmatmul.f32.gmra.mxu0 %v1942
    %v1982 = vpop.f32.mrf.mxu0
    %v1983 = vadd.f32 %v1940, %v1982
    %1984 = vmatmul.f32.gmra.mxu0 %v1945
    %v1985 = vpop.f32.mrf.mxu0
    %v1986 = vadd.f32 %v1940, %v1985
    %1987 = vmatmul.f32.gmra.mxu0 %v1948
    %v1988 = vpop.f32.mrf.mxu0
    %v1989 = vadd.f32 %v1940, %v1988
    %1990 = vmatmul.f32.gmra.mxu0 %v1951
    %v1991 = vpop.f32.mrf.mxu0
    %v1992 = vadd.f32 %v1940, %v1991
    %1993 = vmatmul.f32.gmra.mxu0 %v1954
    %v1994 = vpop.f32.mrf.mxu0
    %v1995 = vadd.f32 %v1940, %v1994
    %1996 = vmatmul.f32.gmra.mxu0 %v1957
    %v1997 = vpop.f32.mrf.mxu0
    %v1998 = vadd.f32 %v1940, %v1997
    %1999 = vmatmul.f32.gmra.mxu0 %v1960
    %v2000 = vpop.f32.mrf.mxu0
    %v2001 = vadd.f32 %v1940, %v2000
    %2002 = vmatmul.f32.gmra.mxu0 %v1963
    %v2003 = vpop.f32.mrf.mxu0
    %v2004 = vadd.f32 %v1940, %v2003
    %2005 = vdwg.mxu0
    %2006 = vmatpush.msra.mxu0 0.0
    %2007 = vmatpush.msra.mxu0 0.0
    %2008 = vmatpush.msra.mxu0 0.0
    %2009 = vmatpush.msra.mxu0 0.0
    %2010 = vmatpush.msra.mxu0 0.0
    %2011 = vmatpush.msra.mxu0 0.0
    %2012 = vmatpush.msra.mxu0 0.0
    %2013 = vmatpush.msra.mxu0 0.0
    %2014 = vmatpush.msra.mxu0 0.0
    %2015 = vmatpush.msra.mxu0 0.0
    %2016 = vmatpush.msra.mxu0 0.0
    %2017 = vmatpush.msra.mxu0 0.0
    %2018 = vmatpush.msra.mxu0 %v1928
    %2019 = vmatpush.msra.mxu0 %v1927
    %2020 = vmatpush.msra.mxu0 %v1926
    %2021 = vmatpush.msra.mxu0 %v1925
    %2022 = vmatmul.f32.gmra.mxu0 %v141
    %v2023 = vpop.f32.mrf.mxu0
    %v2024 = vadd.f32 0.0, %v2023
    %2025 = vdwg.mxu0
    %v2026 = vadd.f32 %v1983, %v2024
    %v2027 = vxor.u32 %v2026, 2147483648
    %v2028 = vmul.f32 %v2027, 1.442695
    %v2029 = vpow.pop %v2028
    %v2030 = vadd.f32 %v2029, 1.0
    %v2031 = vrcp.pop %v2030
    %v2032 = vmul.f32 %v2030, %v2031
    %v2033 = vsub.f32 1.0, %v2032
    %v2034 = vmul.f32 %v2031, %v2033
    %v2035 = vadd.f32 %v2031, %v2034
    %vm2036 = vweird.f32 %v2030
    %vm2037 = vweird.f32 %v2031
    %vm2038 = vmor %vm2036, %vm2037
    %v2039 = vsel %vm2038, %v2031, %v2035
    %v2040 = vand.u32 2147483647, %v2030
    %vm2041 = vcmp.eq.f32.partialorder %v2040, 8.507059e+37
    %v2042 = vand.u32 %v2030, 2147483648
    %v2043 = vor.u32 1.1754944e-38, %v2042
    %v2044 = vsel %vm2041, %v2043, %v2039
    %v2045 = vmul.f32 1.0, %v2044
    %v2046 = vadd.f32 %v2024, %v1931
    %2048 = vrot.lane.b32.xlu0 %v2046, 64
    %v2049 = vpop.permute.xlu0 %2048
    %v2051 = vmul.f32 %v2045, %v2049
    %2053 = vrot.lane.b32.xlu0 %v2051, 64
    %v2054 = vpop.permute.xlu0 %2053
    %v2056 = vadd.f32 %v1983, %v2054
    %v2057 = vtanh.pop %v2056
    %v2058 = vsub.f32 1.0, %v2045
    %2060 = vrot.lane.b32.xlu0 %v2057, 96
    %v2061 = vpop.permute.xlu0 %2060
    %v2063 = vmul.f32 %v2058, %v2061
    %v2064 = vmul.f32 %v2045, 0.0
    %v2065 = vadd.f32 %v2063, %v2064
    %2067 = vrot.lane.b32.xlu0 %v2065, 96
    %v2068 = vpop.permute.xlu0 %2067
    %v2069 = vsel %vm74, %v2068, 0
    %2071 = vmatpush.msra.mxu0 0.0
    %2072 = vmatpush.msra.mxu0 0.0
    %2073 = vmatpush.msra.mxu0 0.0
    %2074 = vmatpush.msra.mxu0 0.0
    %2075 = vmatpush.msra.mxu0 0.0
    %2076 = vmatpush.msra.mxu0 0.0
    %2077 = vmatpush.msra.mxu0 0.0
    %2078 = vmatpush.msra.mxu0 0.0
    %2079 = vmatpush.msra.mxu0 0.0
    %2080 = vmatpush.msra.mxu0 0.0
    %2081 = vmatpush.msra.mxu0 0.0
    %2082 = vmatpush.msra.mxu0 0.0
    %2083 = vmatpush.msra.mxu0 %v1928
    %2084 = vmatpush.msra.mxu0 %v1927
    %2085 = vmatpush.msra.mxu0 %v1926
    %2086 = vmatpush.msra.mxu0 %v1925
    %2087 = vmatmul.f32.gmra.mxu0 %v2069
    %v2088 = vpop.f32.mrf.mxu0
    %v2089 = vadd.f32 0.0, %v2088
    %2090 = vdwg.mxu0
    %v2091 = vadd.f32 %v1986, %v2089
    %v2092 = vxor.u32 %v2091, 2147483648
    %v2093 = vmul.f32 %v2092, 1.442695
    %v2094 = vpow.pop %v2093
    %v2095 = vadd.f32 %v2094, 1.0
    %v2096 = vrcp.pop %v2095
    %v2097 = vmul.f32 %v2095, %v2096
    %v2098 = vsub.f32 1.0, %v2097
    %v2099 = vmul.f32 %v2096, %v2098
    %v2100 = vadd.f32 %v2096, %v2099
    %vm2101 = vweird.f32 %v2095
    %vm2102 = vweird.f32 %v2096
    %vm2103 = vmor %vm2101, %vm2102
    %v2104 = vsel %vm2103, %v2096, %v2100
    %v2105 = vand.u32 2147483647, %v2095
    %vm2106 = vcmp.eq.f32.partialorder %v2105, 8.507059e+37
    %v2107 = vand.u32 %v2095, 2147483648
    %v2108 = vor.u32 1.1754944e-38, %v2107
    %v2109 = vsel %vm2106, %v2108, %v2104
    %v2110 = vmul.f32 1.0, %v2109
    %v2111 = vadd.f32 %v2089, %v1931
    %2113 = vrot.lane.b32.xlu0 %v2111, 64
    %v2114 = vpop.permute.xlu0 %2113
    %v2116 = vmul.f32 %v2110, %v2114
    %2118 = vrot.lane.b32.xlu0 %v2116, 64
    %v2119 = vpop.permute.xlu0 %2118
    %v2121 = vadd.f32 %v1986, %v2119
    %v2122 = vtanh.pop %v2121
    %v2123 = vsub.f32 1.0, %v2110
    %2125 = vrot.lane.b32.xlu0 %v2122, 96
    %v2126 = vpop.permute.xlu0 %2125
    %v2128 = vmul.f32 %v2123, %v2126
    %v2129 = vmul.f32 %v2110, %v2065
    %v2130 = vadd.f32 %v2128, %v2129
    %2132 = vrot.lane.b32.xlu0 %v2130, 96
    %v2133 = vpop.permute.xlu0 %2132
    %v2134 = vsel %vm74, %v2133, 0
    %2136 = vmatpush.msra.mxu0 0.0
    %2137 = vmatpush.msra.mxu0 0.0
    %2138 = vmatpush.msra.mxu0 0.0
    %2139 = vmatpush.msra.mxu0 0.0
    %2140 = vmatpush.msra.mxu0 0.0
    %2141 = vmatpush.msra.mxu0 0.0
    %2142 = vmatpush.msra.mxu0 0.0
    %2143 = vmatpush.msra.mxu0 0.0
    %2144 = vmatpush.msra.mxu0 0.0
    %2145 = vmatpush.msra.mxu0 0.0
    %2146 = vmatpush.msra.mxu0 0.0
    %2147 = vmatpush.msra.mxu0 0.0
    %2148 = vmatpush.msra.mxu0 %v1928
    %2149 = vmatpush.msra.mxu0 %v1927
    %2150 = vmatpush.msra.mxu0 %v1926
    %2151 = vmatpush.msra.mxu0 %v1925
    %2152 = vmatmul.f32.gmra.mxu0 %v2134
    %v2153 = vpop.f32.mrf.mxu0
    %v2154 = vadd.f32 0.0, %v2153
    %2155 = vdwg.mxu0
    %v2156 = vadd.f32 %v1989, %v2154
    %v2157 = vxor.u32 %v2156, 2147483648
    %v2158 = vmul.f32 %v2157, 1.442695
    %v2159 = vpow.pop %v2158
    %v2160 = vadd.f32 %v2159, 1.0
    %v2161 = vrcp.pop %v2160
    %v2162 = vmul.f32 %v2160, %v2161
    %v2163 = vsub.f32 1.0, %v2162
    %v2164 = vmul.f32 %v2161, %v2163
    %v2165 = vadd.f32 %v2161, %v2164
    %vm2166 = vweird.f32 %v2160
    %vm2167 = vweird.f32 %v2161
    %vm2168 = vmor %vm2166, %vm2167
    %v2169 = vsel %vm2168, %v2161, %v2165
    %v2170 = vand.u32 2147483647, %v2160
    %vm2171 = vcmp.eq.f32.partialorder %v2170, 8.507059e+37
    %v2172 = vand.u32 %v2160, 2147483648
    %v2173 = vor.u32 1.1754944e-38, %v2172
    %v2174 = vsel %vm2171, %v2173, %v2169
    %v2175 = vmul.f32 1.0, %v2174
    %v2176 = vadd.f32 %v2154, %v1931
    %2178 = vrot.lane.b32.xlu0 %v2176, 64
    %v2179 = vpop.permute.xlu0 %2178
    %v2181 = vmul.f32 %v2175, %v2179
    %2183 = vrot.lane.b32.xlu0 %v2181, 64
    %v2184 = vpop.permute.xlu0 %2183
    %v2186 = vadd.f32 %v1989, %v2184
    %v2187 = vtanh.pop %v2186
    %v2188 = vsub.f32 1.0, %v2175
    %2190 = vrot.lane.b32.xlu0 %v2187, 96
    %v2191 = vpop.permute.xlu0 %2190
    %v2193 = vmul.f32 %v2188, %v2191
    %v2194 = vmul.f32 %v2175, %v2130
    %v2195 = vadd.f32 %v2193, %v2194
    %2197 = vrot.lane.b32.xlu0 %v2195, 96
    %v2198 = vpop.permute.xlu0 %2197
    %v2199 = vsel %vm74, %v2198, 0
    %2201 = vmatpush.msra.mxu0 0.0
    %2202 = vmatpush.msra.mxu0 0.0
    %2203 = vmatpush.msra.mxu0 0.0
    %2204 = vmatpush.msra.mxu0 0.0
    %2205 = vmatpush.msra.mxu0 0.0
    %2206 = vmatpush.msra.mxu0 0.0
    %2207 = vmatpush.msra.mxu0 0.0
    %2208 = vmatpush.msra.mxu0 0.0
    %2209 = vmatpush.msra.mxu0 0.0
    %2210 = vmatpush.msra.mxu0 0.0
    %2211 = vmatpush.msra.mxu0 0.0
    %2212 = vmatpush.msra.mxu0 0.0
    %2213 = vmatpush.msra.mxu0 %v1928
    %2214 = vmatpush.msra.mxu0 %v1927
    %2215 = vmatpush.msra.mxu0 %v1926
    %2216 = vmatpush.msra.mxu0 %v1925
    %2217 = vmatmul.f32.gmra.mxu0 %v2199
    %v2218 = vpop.f32.mrf.mxu0
    %v2219 = vadd.f32 0.0, %v2218
    %2220 = vdwg.mxu0
    %v2221 = vadd.f32 %v1992, %v2219
    %v2222 = vxor.u32 %v2221, 2147483648
    %v2223 = vmul.f32 %v2222, 1.442695
    %v2224 = vpow.pop %v2223
    %v2225 = vadd.f32 %v2224, 1.0
    %v2226 = vrcp.pop %v2225
    %v2227 = vmul.f32 %v2225, %v2226
    %v2228 = vsub.f32 1.0, %v2227
    %v2229 = vmul.f32 %v2226, %v2228
    %v2230 = vadd.f32 %v2226, %v2229
    %vm2231 = vweird.f32 %v2225
    %vm2232 = vweird.f32 %v2226
    %vm2233 = vmor %vm2231, %vm2232
    %v2234 = vsel %vm2233, %v2226, %v2230
    %v2235 = vand.u32 2147483647, %v2225
    %vm2236 = vcmp.eq.f32.partialorder %v2235, 8.507059e+37
    %v2237 = vand.u32 %v2225, 2147483648
    %v2238 = vor.u32 1.1754944e-38, %v2237
    %v2239 = vsel %vm2236, %v2238, %v2234
    %v2240 = vmul.f32 1.0, %v2239
    %v2241 = vadd.f32 %v2219, %v1931
    %2243 = vrot.lane.b32.xlu0 %v2241, 64
    %v2244 = vpop.permute.xlu0 %2243
    %v2246 = vmul.f32 %v2240, %v2244
    %2248 = vrot.lane.b32.xlu0 %v2246, 64
    %v2249 = vpop.permute.xlu0 %2248
    %v2251 = vadd.f32 %v1992, %v2249
    %v2252 = vtanh.pop %v2251
    %v2253 = vsub.f32 1.0, %v2240
    %2255 = vrot.lane.b32.xlu0 %v2252, 96
    %v2256 = vpop.permute.xlu0 %2255
    %v2258 = vmul.f32 %v2253, %v2256
    %v2259 = vmul.f32 %v2240, %v2195
    %v2260 = vadd.f32 %v2258, %v2259
    %2262 = vrot.lane.b32.xlu0 %v2260, 96
    %v2263 = vpop.permute.xlu0 %2262
    %v2264 = vsel %vm74, %v2263, 0
    %2266 = vmatpush.msra.mxu0 0.0
    %2267 = vmatpush.msra.mxu0 0.0
    %2268 = vmatpush.msra.mxu0 0.0
    %2269 = vmatpush.msra.mxu0 0.0
    %2270 = vmatpush.msra.mxu0 0.0
    %2271 = vmatpush.msra.mxu0 0.0
    %2272 = vmatpush.msra.mxu0 0.0
    %2273 = vmatpush.msra.mxu0 0.0
    %2274 = vmatpush.msra.mxu0 0.0
    %2275 = vmatpush.msra.mxu0 0.0
    %2276 = vmatpush.msra.mxu0 0.0
    %2277 = vmatpush.msra.mxu0 0.0
    %2278 = vmatpush.msra.mxu0 %v1928
    %2279 = vmatpush.msra.mxu0 %v1927
    %2280 = vmatpush.msra.mxu0 %v1926
    %2281 = vmatpush.msra.mxu0 %v1925
    %2282 = vmatmul.f32.gmra.mxu0 %v2264
    %v2283 = vpop.f32.mrf.mxu0
    %v2284 = vadd.f32 0.0, %v2283
    %2285 = vdwg.mxu0
    %v2286 = vadd.f32 %v1995, %v2284
    %v2287 = vxor.u32 %v2286, 2147483648
    %v2288 = vmul.f32 %v2287, 1.442695
    %v2289 = vpow.pop %v2288
    %v2290 = vadd.f32 %v2289, 1.0
    %v2291 = vrcp.pop %v2290
    %v2292 = vmul.f32 %v2290, %v2291
    %v2293 = vsub.f32 1.0, %v2292
    %v2294 = vmul.f32 %v2291, %v2293
    %v2295 = vadd.f32 %v2291, %v2294
    %vm2296 = vweird.f32 %v2290
    %vm2297 = vweird.f32 %v2291
    %vm2298 = vmor %vm2296, %vm2297
    %v2299 = vsel %vm2298, %v2291, %v2295
    %v2300 = vand.u32 2147483647, %v2290
    %vm2301 = vcmp.eq.f32.partialorder %v2300, 8.507059e+37
    %v2302 = vand.u32 %v2290, 2147483648
    %v2303 = vor.u32 1.1754944e-38, %v2302
    %v2304 = vsel %vm2301, %v2303, %v2299
    %v2305 = vmul.f32 1.0, %v2304
    %v2306 = vadd.f32 %v2284, %v1931
    %2308 = vrot.lane.b32.xlu0 %v2306, 64
    %v2309 = vpop.permute.xlu0 %2308
    %v2311 = vmul.f32 %v2305, %v2309
    %2313 = vrot.lane.b32.xlu0 %v2311, 64
    %v2314 = vpop.permute.xlu0 %2313
    %v2316 = vadd.f32 %v1995, %v2314
    %v2317 = vtanh.pop %v2316
    %v2318 = vsub.f32 1.0, %v2305
    %2320 = vrot.lane.b32.xlu0 %v2317, 96
    %v2321 = vpop.permute.xlu0 %2320
    %v2323 = vmul.f32 %v2318, %v2321
    %v2324 = vmul.f32 %v2305, %v2260
    %v2325 = vadd.f32 %v2323, %v2324
    %2327 = vrot.lane.b32.xlu0 %v2325, 96
    %v2328 = vpop.permute.xlu0 %2327
    %v2329 = vsel %vm74, %v2328, 0
    %2331 = vmatpush.msra.mxu0 0.0
    %2332 = vmatpush.msra.mxu0 0.0
    %2333 = vmatpush.msra.mxu0 0.0
    %2334 = vmatpush.msra.mxu0 0.0
    %2335 = vmatpush.msra.mxu0 0.0
    %2336 = vmatpush.msra.mxu0 0.0
    %2337 = vmatpush.msra.mxu0 0.0
    %2338 = vmatpush.msra.mxu0 0.0
    %2339 = vmatpush.msra.mxu0 0.0
    %2340 = vmatpush.msra.mxu0 0.0
    %2341 = vmatpush.msra.mxu0 0.0
    %2342 = vmatpush.msra.mxu0 0.0
    %2343 = vmatpush.msra.mxu0 %v1928
    %2344 = vmatpush.msra.mxu0 %v1927
    %2345 = vmatpush.msra.mxu0 %v1926
    %2346 = vmatpush.msra.mxu0 %v1925
    %2347 = vmatmul.f32.gmra.mxu0 %v2329
    %v2348 = vpop.f32.mrf.mxu0
    %v2349 = vadd.f32 0.0, %v2348
    %2350 = vdwg.mxu0
    %v2351 = vadd.f32 %v1998, %v2349
    %v2352 = vxor.u32 %v2351, 2147483648
    %v2353 = vmul.f32 %v2352, 1.442695
    %v2354 = vpow.pop %v2353
    %v2355 = vadd.f32 %v2354, 1.0
    %v2356 = vrcp.pop %v2355
    %v2357 = vmul.f32 %v2355, %v2356
    %v2358 = vsub.f32 1.0, %v2357
    %v2359 = vmul.f32 %v2356, %v2358
    %v2360 = vadd.f32 %v2356, %v2359
    %vm2361 = vweird.f32 %v2355
    %vm2362 = vweird.f32 %v2356
    %vm2363 = vmor %vm2361, %vm2362
    %v2364 = vsel %vm2363, %v2356, %v2360
    %v2365 = vand.u32 2147483647, %v2355
    %vm2366 = vcmp.eq.f32.partialorder %v2365, 8.507059e+37
    %v2367 = vand.u32 %v2355, 2147483648
    %v2368 = vor.u32 1.1754944e-38, %v2367
    %v2369 = vsel %vm2366, %v2368, %v2364
    %v2370 = vmul.f32 1.0, %v2369
    %v2371 = vadd.f32 %v2349, %v1931
    %2373 = vrot.lane.b32.xlu0 %v2371, 64
    %v2374 = vpop.permute.xlu0 %2373
    %v2376 = vmul.f32 %v2370, %v2374
    %2378 = vrot.lane.b32.xlu0 %v2376, 64
    %v2379 = vpop.permute.xlu0 %2378
    %v2381 = vadd.f32 %v1998, %v2379
    %v2382 = vtanh.pop %v2381
    %v2383 = vsub.f32 1.0, %v2370
    %2385 = vrot.lane.b32.xlu0 %v2382, 96
    %v2386 = vpop.permute.xlu0 %2385
    %v2388 = vmul.f32 %v2383, %v2386
    %v2389 = vmul.f32 %v2370, %v2325
    %v2390 = vadd.f32 %v2388, %v2389
    %2392 = vrot.lane.b32.xlu0 %v2390, 96
    %v2393 = vpop.permute.xlu0 %2392
    %v2394 = vsel %vm74, %v2393, 0
    %2396 = vmatpush.msra.mxu0 0.0
    %2397 = vmatpush.msra.mxu0 0.0
    %2398 = vmatpush.msra.mxu0 0.0
    %2399 = vmatpush.msra.mxu0 0.0
    %2400 = vmatpush.msra.mxu0 0.0
    %2401 = vmatpush.msra.mxu0 0.0
    %2402 = vmatpush.msra.mxu0 0.0
    %2403 = vmatpush.msra.mxu0 0.0
    %2404 = vmatpush.msra.mxu0 0.0
    %2405 = vmatpush.msra.mxu0 0.0
    %2406 = vmatpush.msra.mxu0 0.0
    %2407 = vmatpush.msra.mxu0 0.0
    %2408 = vmatpush.msra.mxu0 %v1928
    %2409 = vmatpush.msra.mxu0 %v1927
    %2410 = vmatpush.msra.mxu0 %v1926
    %2411 = vmatpush.msra.mxu0 %v1925
    %2412 = vmatmul.f32.gmra.mxu0 %v2394
    %v2413 = vpop.f32.mrf.mxu0
    %v2414 = vadd.f32 0.0, %v2413
    %2415 = vdwg.mxu0
    %v2416 = vadd.f32 %v2001, %v2414
    %v2417 = vxor.u32 %v2416, 2147483648
    %v2418 = vmul.f32 %v2417, 1.442695
    %v2419 = vpow.pop %v2418
    %v2420 = vadd.f32 %v2419, 1.0
    %v2421 = vrcp.pop %v2420
    %v2422 = vmul.f32 %v2420, %v2421
    %v2423 = vsub.f32 1.0, %v2422
    %v2424 = vmul.f32 %v2421, %v2423
    %v2425 = vadd.f32 %v2421, %v2424
    %vm2426 = vweird.f32 %v2420
    %vm2427 = vweird.f32 %v2421
    %vm2428 = vmor %vm2426, %vm2427
    %v2429 = vsel %vm2428, %v2421, %v2425
    %v2430 = vand.u32 2147483647, %v2420
    %vm2431 = vcmp.eq.f32.partialorder %v2430, 8.507059e+37
    %v2432 = vand.u32 %v2420, 2147483648
    %v2433 = vor.u32 1.1754944e-38, %v2432
    %v2434 = vsel %vm2431, %v2433, %v2429
    %v2435 = vmul.f32 1.0, %v2434
    %v2436 = vadd.f32 %v2414, %v1931
    %2438 = vrot.lane.b32.xlu0 %v2436, 64
    %v2439 = vpop.permute.xlu0 %2438
    %v2441 = vmul.f32 %v2435, %v2439
    %2443 = vrot.lane.b32.xlu0 %v2441, 64
    %v2444 = vpop.permute.xlu0 %2443
    %v2446 = vadd.f32 %v2001, %v2444
    %v2447 = vtanh.pop %v2446
    %v2448 = vsub.f32 1.0, %v2435
    %2450 = vrot.lane.b32.xlu0 %v2447, 96
    %v2451 = vpop.permute.xlu0 %2450
    %v2453 = vmul.f32 %v2448, %v2451
    %v2454 = vmul.f32 %v2435, %v2390
    %v2455 = vadd.f32 %v2453, %v2454
    %2457 = vrot.lane.b32.xlu0 %v2455, 96
    %v2458 = vpop.permute.xlu0 %2457
    %v2459 = vsel %vm74, %v2458, 0
    %2461 = vmatpush.msra.mxu0 0.0
    %2462 = vmatpush.msra.mxu0 0.0
    %2463 = vmatpush.msra.mxu0 0.0
    %2464 = vmatpush.msra.mxu0 0.0
    %2465 = vmatpush.msra.mxu0 0.0
    %2466 = vmatpush.msra.mxu0 0.0
    %2467 = vmatpush.msra.mxu0 0.0
    %2468 = vmatpush.msra.mxu0 0.0
    %2469 = vmatpush.msra.mxu0 0.0
    %2470 = vmatpush.msra.mxu0 0.0
    %2471 = vmatpush.msra.mxu0 0.0
    %2472 = vmatpush.msra.mxu0 0.0
    %2473 = vmatpush.msra.mxu0 %v1928
    %2474 = vmatpush.msra.mxu0 %v1927
    %2475 = vmatpush.msra.mxu0 %v1926
    %2476 = vmatpush.msra.mxu0 %v1925
    %2477 = vmatmul.f32.gmra.mxu0 %v2459
    %v2478 = vpop.f32.mrf.mxu0
    %v2479 = vadd.f32 0.0, %v2478
    %2480 = vdwg.mxu0
    %v2481 = vadd.f32 %v2004, %v2479
    %v2482 = vxor.u32 %v2481, 2147483648
    %v2483 = vmul.f32 %v2482, 1.442695
    %v2484 = vpow.pop %v2483
    %v2485 = vadd.f32 %v2484, 1.0
    %v2486 = vrcp.pop %v2485
    %v2487 = vmul.f32 %v2485, %v2486
    %v2488 = vsub.f32 1.0, %v2487
    %v2489 = vmul.f32 %v2486, %v2488
    %v2490 = vadd.f32 %v2486, %v2489
    %vm2491 = vweird.f32 %v2485
    %vm2492 = vweird.f32 %v2486
    %vm2493 = vmor %vm2491, %vm2492
    %v2494 = vsel %vm2493, %v2486, %v2490
    %v2495 = vand.u32 2147483647, %v2485
    %vm2496 = vcmp.eq.f32.partialorder %v2495, 8.507059e+37
    %v2497 = vand.u32 %v2485, 2147483648
    %v2498 = vor.u32 1.1754944e-38, %v2497
    %v2499 = vsel %vm2496, %v2498, %v2494
    %v2500 = vmul.f32 1.0, %v2499
    %v2501 = vadd.f32 %v2479, %v1931
    %2503 = vrot.lane.b32.xlu0 %v2501, 64
    %v2504 = vpop.permute.xlu0 %2503
    %v2506 = vmul.f32 %v2500, %v2504
    %2508 = vrot.lane.b32.xlu0 %v2506, 64
    %v2509 = vpop.permute.xlu0 %2508
    %v2511 = vadd.f32 %v2004, %v2509
    %v2512 = vtanh.pop %v2511
    %v2513 = vsub.f32 1.0, %v2500
    %2515 = vrot.lane.b32.xlu0 %v2512, 96
    %v2516 = vpop.permute.xlu0 %2515
    %v2518 = vmul.f32 %v2513, %v2516
    %v2519 = vmul.f32 %v2500, %v2455
    %v2520 = vadd.f32 %v2518, %v2519
    %v2521 = vld [vmem:[#allocation5] sm:$0xff]
    %v2522 = vld [vmem:[#allocation5 + $0x8] sm:$0xff]
    %v2523 = vld [vmem:[#allocation5 + $0x10] sm:$0xff]
    %v2524 = vld [vmem:[#allocation5 + $0x18] sm:$0xff]
    %v2525 = vld [vmem:[%s5] sm:$0x1]
    %v2527 = vperm.slane %v2525, 0
    %2530 = vrot.lane.b32.xlu0 %v2520, 96
    %v2531 = vpop.permute.xlu0 %2530
    %v2532 = vsel %vm74, %v2531, 0
    %2534 = vmatpush.msra.mxu0 0.0
    %2535 = vmatpush.msra.mxu0 0.0
    %2536 = vmatpush.msra.mxu0 0.0
    %2537 = vmatpush.msra.mxu0 0.0
    %2538 = vmatpush.msra.mxu0 0.0
    %2539 = vmatpush.msra.mxu0 0.0
    %2540 = vmatpush.msra.mxu0 0.0
    %2541 = vmatpush.msra.mxu0 0.0
    %2542 = vmatpush.msra.mxu0 0.0
    %2543 = vmatpush.msra.mxu0 0.0
    %2544 = vmatpush.msra.mxu0 0.0
    %2545 = vmatpush.msra.mxu0 0.0
    %2546 = vmatpush.msra.mxu0 %v2524
    %2547 = vmatpush.msra.mxu0 %v2523
    %2548 = vmatpush.msra.mxu0 %v2522
    %2549 = vmatpush.msra.mxu0 %v2521
    %2550 = vmatmul.f32.gmra.mxu0 %v2532
    %v2551 = vpop.f32.mrf.mxu0
    %v2552 = vadd.f32 %v2527, %v2551
    %2553 = vdwg.mxu0
    %v2554 = vmax.f32 %v2552, 0.0
    %s2555 = scalar_lea.vmem [#allocation5], 32
    %v2556 = vld [vmem:[%s2555] sm:$0xff]
    %v2557 = vld [vmem:[%s2555 + $0x8] sm:$0xff]
    %v2558 = vld [vmem:[%s2555 + $0x10] sm:$0xff]
    %v2559 = vld [vmem:[%s2555 + $0x18] sm:$0xff]
    %s2560 = scalar_lea.vmem %s5, 1
    %v2561 = vld [vmem:[%s2560] sm:$0x1]
    %v2563 = vperm.slane %v2561, 0
    %v2566 = vsel %vm74, %v2554, 0
    %2568 = vmatpush.msra.mxu0 0.0
    %2569 = vmatpush.msra.mxu0 0.0
    %2570 = vmatpush.msra.mxu0 0.0
    %2571 = vmatpush.msra.mxu0 0.0
    %2572 = vmatpush.msra.mxu0 0.0
    %2573 = vmatpush.msra.mxu0 0.0
    %2574 = vmatpush.msra.mxu0 0.0
    %2575 = vmatpush.msra.mxu0 0.0
    %2576 = vmatpush.msra.mxu0 0.0
    %2577 = vmatpush.msra.mxu0 0.0
    %2578 = vmatpush.msra.mxu0 0.0
    %2579 = vmatpush.msra.mxu0 0.0
    %2580 = vmatpush.msra.mxu0 %v2559
    %2581 = vmatpush.msra.mxu0 %v2558
    %2582 = vmatpush.msra.mxu0 %v2557
    %2583 = vmatpush.msra.mxu0 %v2556
    %2584 = vmatmul.f32.gmra.mxu0 %v2566
    %v2585 = vpop.f32.mrf.mxu0
    %v2586 = vadd.f32 %v2563, %v2585
    %2587 = vdwg.mxu0
    %vm2588 = vcmp.ge.f32.partialorder %v2586, 0.0
    %v2589 = vmul.f32 %v2586, 0.01
    %v2590 = vsel %vm2588, %v2586, %v2589
    %s2591 = scalar_lea.vmem [#allocation5], 64
    %v2592 = vld [vmem:[%s2591] sm:$0xff]
    %v2593 = vld [vmem:[%s2591 + $0x8] sm:$0xff]
    %v2594 = vld [vmem:[%s2591 + $0x10] sm:$0xff]
    %v2595 = vld [vmem:[%s2591 + $0x18] sm:$0xff]
    %s2596 = scalar_lea.vmem %s5, 2
    %v2597 = vld [vmem:[%s2596] sm:$0x1]
    %v2599 = vperm.slane %v2597, 0
    %v2602 = vsel %vm74, %v2590, 0
    %2604 = vmatpush.msra.mxu0 0.0
    %2605 = vmatpush.msra.mxu0 0.0
    %2606 = vmatpush.msra.mxu0 0.0
    %2607 = vmatpush.msra.mxu0 0.0
    %2608 = vmatpush.msra.mxu0 0.0
    %2609 = vmatpush.msra.mxu0 0.0
    %2610 = vmatpush.msra.mxu0 0.0
    %2611 = vmatpush.msra.mxu0 0.0
    %2612 = vmatpush.msra.mxu0 0.0
    %2613 = vmatpush.msra.mxu0 0.0
    %2614 = vmatpush.msra.mxu0 0.0
    %2615 = vmatpush.msra.mxu0 0.0
    %2616 = vmatpush.msra.mxu0 %v2595
    %2617 = vmatpush.msra.mxu0 %v2594
    %2618 = vmatpush.msra.mxu0 %v2593
    %2619 = vmatpush.msra.mxu0 %v2592
    %2620 = vmatmul.f32.gmra.mxu0 %v2602
    %v2621 = vpop.f32.mrf.mxu0
    %v2622 = vadd.f32 %v2599, %v2621
    %2623 = vdwg.mxu0
    %2624 = vst.msk [vmem:[%s6] sm:$0xff] %vm74, %v2622
    // Predicated region
    $region34: #{gru_model_forward.1} parent=1 // pred_check
      _
    $region35: #{gru_model_forward.1} parent=1 // pred_check_branch
      %2626 = sbr.rel (0) target = $region37
    $region36: #{gru_model_forward.1} parent=1 // pred_region
      _
    $region37: #{gru_model_forward.1} parent=1 // pred_fallthru
      _
    // Predicated region
    $region38: #{gru_model_forward.1} parent=1 // pred_check
      _
    $region39: #{gru_model_forward.1} parent=1 // pred_check_branch
      %2628 = sbr.rel (0) target = $region41
    $region40: #{gru_model_forward.1} parent=1 // pred_region
      _
    $region41: #{gru_model_forward.1} parent=1 // pred_fallthru
      _
    %2629 = vsyncpa [#allocation4], 1
    %2630 = vsyncpa [#allocation6], 1

</llo_original>
